<compile_context>
chip_gen: v5e
topology: v5e:2x2
jax: 0.10.0
libtpu: 0.0.40
codegen_flags: <defaults>
</compile_context>

<pallas_src>
import functools

import jax
import jax.numpy as jnp
from jax import lax
from jax.experimental import pallas as pl
from jax.experimental.pallas import tpu as pltpu


def _round_up(x, mult):
    return (x + mult - 1) // mult * mult


def _vmem_limit(step_bytes):
    # Double-buffered tiles + headroom; capped at 32 MiB so it is safe on v7x (64 MiB VMEM)
    # as well as v5e/v6e (128 MiB).
    return int(min(max(2 * step_bytes + (4 << 20), 16 << 20), 32 << 20))


def conv_stats_kernel(x_ref, w_ref, conv_ref, sum_ref, sumsq_ref, *,
                      k, th, wo, stride, ho, mask_rows):
    """One (batch, row-tile) step: K*K tap matmuls (bf16 in, f32 acc) + channel stats.

    x_ref:    (Hp, Wp, Cin_pad)   padded NHWC image of this batch element (VMEM resident)
    w_ref:    (K*K, Cin_pad, Cpad) weights, tap-major
    conv_ref: (TH*Wo, Cpad)        bf16 conv output tile
    sum_ref / sumsq_ref: (8, Cpad) per-tile channel sum / sum-of-squares (rows identical)
    """
    r = pl.program_id(1)
    cin = x_ref.shape[-1]
    c_pad = conv_ref.shape[-1]
    h0 = pl.multiple_of(r * (th * stride), 8)          # th is a multiple of 8

    acc = jnp.zeros((th * wo, c_pad), jnp.float32)
    for i in range(k):
        for j in range(k):
            if stride == 1:
                patch = x_ref[pl.ds(h0 + i, th), pl.ds(j, wo), :]
            else:
                # TODO(synk): strided value-slicing may relayout; a manual halo-slab DMA
                # path (memory_space=pl.ANY + pltpu.make_async_copy) is better for stride>1.
                slab = x_ref[pl.ds(h0 + i, (th - 1) * stride + 1),
                             pl.ds(j, (wo - 1) * stride + 1), :]
                patch = slab[::stride, ::stride, :]
            acc = acc + jnp.dot(patch.reshape(th * wo, cin), w_ref[i * k + j],
                                preferred_element_type=jnp.float32)

    conv_ref[...] = acc.astype(conv_ref.dtype)

    if mask_rows:
        # Rows beyond the true Ho (row-tile grid padding) must not enter the BN stats.
        th_idx = lax.broadcasted_iota(jnp.int32, (th * wo, 1), 0) // wo
        acc = jnp.where(r * th + th_idx < ho, acc, 0.0)
    s = jnp.sum(acc, axis=0, keepdims=True)
    sq = jnp.sum(acc * acc, axis=0, keepdims=True)
    # (8, Cpad) blocks keep the stat stores (8,128)-aligned; the 8 rows are identical.
    sum_ref[...] = jnp.broadcast_to(s, sum_ref.shape)
    sumsq_ref[...] = jnp.broadcast_to(sq, sumsq_ref.shape)


def bn_relu_kernel(conv_ref, scale_ref, shift_ref, o_ref):
    """One M-tile: y = conv * scale + shift (f32 math on a bf16 conv tile), then ReLU."""
    y = conv_ref[...].astype(jnp.float32) * scale_ref[...] + shift_ref[...]
    o_ref[...] = jnp.maximum(y, 0.0).astype(o_ref.dtype)


def conv2d_bn_relu(x_nchw, weight, gamma, beta, *, stride, padding, eps=1e-5):
    """x_nchw: (N, C_in, H, W); weight: (C_out, C_in, K, K); gamma/beta: (C_out,)."""
    n, c_in, h, w = x_nchw.shape
    c_out, _, kh, kw = weight.shape
    assert kh == kw, "square kernels only"
    k = kh
    ho = (h + 2 * padding - k) // stride + 1
    wo = (w + 2 * padding - k) // stride + 1

    # Lane/vreg friendly padded channel dims (zero padding is numerically exact).
    cin_pad = _round_up(c_in, 8)
    c_pad = _round_up(c_out, 128)
    # TODO(synk): round c_pad to 256 for c_out > 128 on v6e/v7x once the kernel is
    # compute-bound (256-wide MXUs); 128 already matches v5e.

    # Row-tile selection: TH output rows per grid step, TH a multiple of 8 so the
    # (TH*Wo, Cpad) conv tile stays (8,128)-aligned; target ~1024 matmul rows per step.
    target_rows = 1024
    th = min(_round_up(ho, 8), max(8, _round_up(max(1, target_rows // wo), 8)))
    if n * pl.cdiv(ho, th) < 2 and th > 8:     # give megacore (v7x) >= 2 parallel steps
        th = max(8, _round_up(pl.cdiv(ho, 2), 8))
    n_row_tiles = pl.cdiv(ho, th)
    ho_pad = n_row_tiles * th
    mask_rows = ho_pad != ho

    tm1 = th * wo
    m_total = n * n_row_tiles * tm1

    # ---- layout glue: one cheap cast/pad pass over the activation (no HBM im2col) ------
    hp_alloc = (ho_pad - 1) * stride + k
    hp_nat = h + 2 * padding
    wp = w + 2 * padding
    xp = jnp.transpose(x_nchw, (0, 2, 3, 1)).astype(jnp.bfloat16)          # NHWC bf16
    xp = jnp.pad(xp, ((0, 0), (padding, padding), (padding, padding), (0, cin_pad - c_in)))
    if hp_alloc > hp_nat:
        xp = jnp.pad(xp, ((0, 0), (0, hp_alloc - hp_nat), (0, 0), (0, 0)))
    elif hp_alloc < hp_nat:
        xp = xp[:, :hp_alloc]

    w_taps = jnp.transpose(weight, (2, 3, 1, 0)).reshape(k * k, c_in, c_out)
    w_taps = jnp.pad(w_taps.astype(jnp.bfloat16),
                     ((0, 0), (0, cin_pad - c_in), (0, c_pad - c_out)))

    gamma_p = jnp.pad(gamma.astype(jnp.float32), (0, c_pad - c_out))
    beta_p = jnp.pad(beta.astype(jnp.float32), (0, c_pad - c_out))

    # ---- pass 1: conv via K*K in-kernel taps + per-tile channel stats -------------------
    x_blk_bytes = hp_alloc * _round_up(wp, 8) * _round_up(cin_pad, 128) * 2
    w_blk_bytes = k * k * _round_up(cin_pad, 8) * c_pad * 2
    step1 = x_blk_bytes + w_blk_bytes + tm1 * c_pad * (2 + 4) + 2 * 8 * c_pad * 4
    # TODO(synk): for Hp*Wp*Cin too large for VMEM, switch the x input to a manual
    # halo-slab DMA; and for very large K*K*Cin add a contraction grid axis / pl.Buffered.

    kern1 = functools.partial(conv_stats_kernel, k=k, th=th, wo=wo,
                              stride=stride, ho=ho, mask_rows=mask_rows)
    conv_out, tile_sum, tile_sumsq = pl.pallas_call(
        kern1,
        out_shape=(
            jax.ShapeDtypeStruct((m_total, c_pad), jnp.bfloat16),
            jax.ShapeDtypeStruct((n * n_row_tiles * 8, c_pad), jnp.float32),
            jax.ShapeDtypeStruct((n * n_row_tiles * 8, c_pad), jnp.float32),
        ),
        grid=(n, n_row_tiles),
        in_specs=[
            pl.BlockSpec((None, hp_alloc, wp, cin_pad), lambda b, r: (b, 0, 0, 0)),
            pl.BlockSpec((k * k, cin_pad, c_pad), lambda b, r: (0, 0, 0)),  # stays resident
        ],
        out_specs=(
            pl.BlockSpec((tm1, c_pad), lambda b, r: (b * n_row_tiles + r, 0)),
            pl.BlockSpec((8, c_pad), lambda b, r: (b * n_row_tiles + r, 0)),
            pl.BlockSpec((8, c_pad), lambda b, r: (b * n_row_tiles + r, 0)),
        ),
        compiler_params=pltpu.CompilerParams(
            dimension_semantics=("parallel", "parallel"),
            vmem_limit_bytes=_vmem_limit(step1),
        ),
        cost_estimate=pl.CostEstimate(
            flops=2 * m_total * k * k * cin_pad * c_pad,
            transcendentals=0,
            bytes_accessed=(xp.size * 2 + w_taps.size * 2 + m_total * c_pad * 2
                            + 2 * n * n_row_tiles * 8 * c_pad * 4),
        ),
    )(xp, w_taps)

    # ---- tiny JAX glue: global BN stats -> per-channel scale / shift --------------------
    m_valid = n * ho * wo
    total_sum = jnp.sum(tile_sum[0::8], axis=0)      # rows within an (8, c_pad) block identical
    total_sumsq = jnp.sum(tile_sumsq[0::8], axis=0)
    mean = total_sum / m_valid
    # One-pass biased variance E[y^2]-E[y]^2 in f32: fine at these magnitudes/counts.
    # TODO(synk): use a Chan/Welford-style per-tile combine if |mean| >> std or N*H*W ~ 1e6+.
    var = jnp.maximum(total_sumsq / m_valid - mean * mean, 0.0)
    inv = lax.rsqrt(var + eps)
    scale = (gamma_p * inv).reshape(1, c_pad)
    shift = (beta_p - mean * gamma_p * inv).reshape(1, c_pad)

    # ---- pass 2: y = conv * scale + shift; ReLU (HBM-bound, so use bigger tiles) --------
    t_tiles = n * n_row_tiles
    g = 1
    for cand in range(t_tiles, 0, -1):
        if (t_tiles % cand == 0 and cand * tm1 <= 2048
                and (t_tiles // cand >= 2 or t_tiles < 2)):
            g = cand
            break
    tm2 = g * tm1
    n_tiles2 = m_total // tm2

    step2 = tm2 * c_pad * (2 + 4) + 2 * c_pad * 4
    out2d = pl.pallas_call(
        bn_relu_kernel,
        out_shape=jax.ShapeDtypeStruct((m_total, c_pad), jnp.float32),
        grid=(n_tiles2,),
        in_specs=[
            pl.BlockSpec((tm2, c_pad), lambda i: (i, 0)),
            pl.BlockSpec((1, c_pad), lambda i: (0, 0)),
            pl.BlockSpec((1, c_pad), lambda i: (0, 0)),
        ],
        out_specs=pl.BlockSpec((tm2, c_pad), lambda i: (i, 0)),
        compiler_params=pltpu.CompilerParams(
            dimension_semantics=("parallel",),
            vmem_limit_bytes=_vmem_limit(step2),
        ),
        cost_estimate=pl.CostEstimate(
            flops=2 * m_total * c_pad,
            transcendentals=0,
            bytes_accessed=m_total * c_pad * (2 + 4),
        ),
    )(conv_out, scale, shift)

    # Crop + NHWC->NCHW: left to plain JAX so slice/reshape/transpose fuse into one XLA
    # copy pass; a consumer that accepts NHWC should take `out_nhwc` directly.
    out_nhwc = out2d.reshape(n, ho_pad, wo, c_pad)[:, :ho, :, :c_out]
    return jnp.transpose(out_nhwc, (0, 3, 1, 2))


def reference(x_nchw, weight, gamma, beta, *, stride, padding, eps=1e-5):
    """Pure-JAX f32 reference matching PyTorch Conv2d(bias=False)+BN(train)+ReLU."""
    y = lax.conv_general_dilated(
        x_nchw.astype(jnp.float32), weight.astype(jnp.float32),
        window_strides=(stride, stride),
        padding=[(padding, padding), (padding, padding)],
        dimension_numbers=("NCHW", "OIHW", "NCHW"))
    mean = jnp.mean(y, axis=(0, 2, 3), keepdims=True)
    var = jnp.mean((y - mean) ** 2, axis=(0, 2, 3), keepdims=True)
    yn = (y - mean) * lax.rsqrt(var + eps)
    yn = yn * gamma.reshape(1, -1, 1, 1) + beta.reshape(1, -1, 1, 1)
    return jnp.maximum(yn, 0.0)


if __name__ == "__main__":
    key = jax.random.PRNGKey(0)
    k1, k2, k3, k4 = jax.random.split(key, 4)

    # Module hyper-params (small, consistent with Conv2dBNRelu.__init__).
    N, C_in, H, W = 2, 4, 16, 16
    C_out, K, STRIDE, PAD = 8, 3, 1, 1

    x = jax.random.normal(k1, (N, C_in, H, W), jnp.float32)
    fan_in = C_in * K * K
    weight = jax.random.uniform(k2, (C_out, C_in, K, K), jnp.float32,
                                minval=-1.0, maxval=1.0) / jnp.sqrt(fan_in)
    gamma = 1.0 + 0.1 * jax.random.normal(k3, (C_out,), jnp.float32)   # BN weight
    beta = 0.1 * jax.random.normal(k4, (C_out,), jnp.float32)          # BN bias

    fn = jax.jit(functools.partial(conv2d_bn_relu, stride=STRIDE, padding=PAD))
    out = jax.block_until_ready(fn(x, weight, gamma, beta))

    ref = reference(x, weight, gamma, beta, stride=STRIDE, padding=PAD)
    assert out.shape == (N, C_out, H, W), out.shape
    max_err = float(jnp.max(jnp.abs(out - ref)))
    # bf16 MXU inputs + bf16 conv intermediate vs the pure-f32 reference (intentional).
    assert jnp.allclose(out, ref, atol=3e-2, rtol=3e-2), max_err
    print("KERNEL_OK")
</pallas_src>

<mosaic_0001>
module attributes {stable_mosaic.version = 11 : i64} {
  func.func @conv_stats_kernel(%arg0: i32, %arg1: i32, %arg2: memref<1x18x18x8xbf16, #tpu.memory_space<vmem>>, %arg3: memref<9x8x128xbf16, #tpu.memory_space<vmem>>, %arg4: memref<256x128xbf16, #tpu.memory_space<vmem>>, %arg5: memref<8x128xf32, #tpu.memory_space<vmem>>, %arg6: memref<8x128xf32, #tpu.memory_space<vmem>>) attributes {dimension_semantics = [#tpu.dimension_semantics<parallel>, #tpu.dimension_semantics<parallel>], iteration_bounds = array<i64: 2, 1>, scalar_prefetch = 0 : i64, scratch_operands = 0 : i64, tpu.core_type = #tpu.core_type<tc>, window_params = [{transform_indices = @transform_0, window_bounds = array<i64: 1, 18, 18, 8>}, {pipeline_mode = #tpu.pipeline_mode<synchronous>, transform_indices = @transform_1, window_bounds = array<i64: 9, 8, 128>}, {transform_indices = @transform_2, window_bounds = array<i64: 256, 128>}, {transform_indices = @transform_3, window_bounds = array<i64: 8, 128>}, {transform_indices = @transform_4, window_bounds = array<i64: 8, 128>}]} {
    %c16_i32 = arith.constant 16 : i32
    %0 = arith.muli %arg1, %c16_i32 : i32
    %1 = tpu.assume_multiple %0, 8 : i32
    %cst = arith.constant 0.000000e+00 : f32
    %2 = vector.broadcast %cst : f32 to vector<256x128xf32>
    %c0_i32 = arith.constant 0 : i32
    %3 = arith.addi %1, %c0_i32 : i32
    %c0 = arith.constant 0 : index
    %4 = arith.index_cast %3 : i32 to index
    %c0_0 = arith.constant 0 : index
    %c0_1 = arith.constant 0 : index
    %5 = vector.load %arg2[%c0, %4, %c0_0, %c0_1] : memref<1x18x18x8xbf16, #tpu.memory_space<vmem>>, vector<1x16x16x8xbf16>
    %6 = vector.shape_cast %5 : vector<1x16x16x8xbf16> to vector<16x16x8xbf16>
    %7 = vector.shape_cast %6 : vector<16x16x8xbf16> to vector<256x8xbf16>
    %c0_2 = arith.constant 0 : index
    %c0_3 = arith.constant 0 : index
    %c0_4 = arith.constant 0 : index
    %8 = vector.load %arg3[%c0_2, %c0_3, %c0_4] : memref<9x8x128xbf16, #tpu.memory_space<vmem>>, vector<1x8x128xbf16>
    %9 = vector.shape_cast %8 : vector<1x8x128xbf16> to vector<8x128xbf16>
    %cst_5 = arith.constant dense<0.000000e+00> : vector<256x128xf32>
    %10 = tpu.matmul %7, %9, %cst_5 {dimension_numbers = #tpu.dot_dimension_numbers<[1], [0], [0], [1], [0, 0, 1, 1], [], []>} : vector<256x8xbf16>, vector<8x128xbf16>, vector<256x128xf32> -> vector<256x128xf32>
    %11 = arith.addf %2, %10 : vector<256x128xf32>
    %c0_i32_6 = arith.constant 0 : i32
    %12 = arith.addi %1, %c0_i32_6 : i32
    %c0_7 = arith.constant 0 : index
    %13 = arith.index_cast %12 : i32 to index
    %c1 = arith.constant 1 : index
    %c0_8 = arith.constant 0 : index
    %14 = vector.load %arg2[%c0_7, %13, %c1, %c0_8] : memref<1x18x18x8xbf16, #tpu.memory_space<vmem>>, vector<1x16x16x8xbf16>
    %15 = vector.shape_cast %14 : vector<1x16x16x8xbf16> to vector<16x16x8xbf16>
    %16 = vector.shape_cast %15 : vector<16x16x8xbf16> to vector<256x8xbf16>
    %c1_9 = arith.constant 1 : index
    %c0_10 = arith.constant 0 : index
    %c0_11 = arith.constant 0 : index
    %17 = vector.load %arg3[%c1_9, %c0_10, %c0_11] : memref<9x8x128xbf16, #tpu.memory_space<vmem>>, vector<1x8x128xbf16>
    %18 = vector.shape_cast %17 : vector<1x8x128xbf16> to vector<8x128xbf16>
    %cst_12 = arith.constant dense<0.000000e+00> : vector<256x128xf32>
    %19 = tpu.matmul %16, %18, %cst_12 {dimension_numbers = #tpu.dot_dimension_numbers<[1], [0], [0], [1], [0, 0, 1, 1], [], []>} : vector<256x8xbf16>, vector<8x128xbf16>, vector<256x128xf32> -> vector<256x128xf32>
    %20 = arith.addf %11, %19 : vector<256x128xf32>
    %c0_i32_13 = arith.constant 0 : i32
    %21 = arith.addi %1, %c0_i32_13 : i32
    %c0_14 = arith.constant 0 : index
    %22 = arith.index_cast %21 : i32 to index
    %c2 = arith.constant 2 : index
    %c0_15 = arith.constant 0 : index
    %23 = vector.load %arg2[%c0_14, %22, %c2, %c0_15] : memref<1x18x18x8xbf16, #tpu.memory_space<vmem>>, vector<1x16x16x8xbf16>
    %24 = vector.shape_cast %23 : vector<1x16x16x8xbf16> to vector<16x16x8xbf16>
    %25 = vector.shape_cast %24 : vector<16x16x8xbf16> to vector<256x8xbf16>
    %c2_16 = arith.constant 2 : index
    %c0_17 = arith.constant 0 : index
    %c0_18 = arith.constant 0 : index
    %26 = vector.load %arg3[%c2_16, %c0_17, %c0_18] : memref<9x8x128xbf16, #tpu.memory_space<vmem>>, vector<1x8x128xbf16>
    %27 = vector.shape_cast %26 : vector<1x8x128xbf16> to vector<8x128xbf16>
    %cst_19 = arith.constant dense<0.000000e+00> : vector<256x128xf32>
    %28 = tpu.matmul %25, %27, %cst_19 {dimension_numbers = #tpu.dot_dimension_numbers<[1], [0], [0], [1], [0, 0, 1, 1], [], []>} : vector<256x8xbf16>, vector<8x128xbf16>, vector<256x128xf32> -> vector<256x128xf32>
    %29 = arith.addf %20, %28 : vector<256x128xf32>
    %c1_i32 = arith.constant 1 : i32
    %30 = arith.addi %1, %c1_i32 : i32
    %c0_20 = arith.constant 0 : index
    %31 = arith.index_cast %30 : i32 to index
    %c0_21 = arith.constant 0 : index
    %c0_22 = arith.constant 0 : index
    %32 = vector.load %arg2[%c0_20, %31, %c0_21, %c0_22] : memref<1x18x18x8xbf16, #tpu.memory_space<vmem>>, vector<1x16x16x8xbf16>
    %33 = vector.shape_cast %32 : vector<1x16x16x8xbf16> to vector<16x16x8xbf16>
    %34 = vector.shape_cast %33 : vector<16x16x8xbf16> to vector<256x8xbf16>
    %c3 = arith.constant 3 : index
    %c0_23 = arith.constant 0 : index
    %c0_24 = arith.constant 0 : index
    %35 = vector.load %arg3[%c3, %c0_23, %c0_24] : memref<9x8x128xbf16, #tpu.memory_space<vmem>>, vector<1x8x128xbf16>
    %36 = vector.shape_cast %35 : vector<1x8x128xbf16> to vector<8x128xbf16>
    %cst_25 = arith.constant dense<0.000000e+00> : vector<256x128xf32>
    %37 = tpu.matmul %34, %36, %cst_25 {dimension_numbers = #tpu.dot_dimension_numbers<[1], [0], [0], [1], [0, 0, 1, 1], [], []>} : vector<256x8xbf16>, vector<8x128xbf16>, vector<256x128xf32> -> vector<256x128xf32>
    %38 = arith.addf %29, %37 : vector<256x128xf32>
    %c1_i32_26 = arith.constant 1 : i32
    %39 = arith.addi %1, %c1_i32_26 : i32
    %c0_27 = arith.constant 0 : index
    %40 = arith.index_cast %39 : i32 to index
    %c1_28 = arith.constant 1 : index
    %c0_29 = arith.constant 0 : index
    %41 = vector.load %arg2[%c0_27, %40, %c1_28, %c0_29] : memref<1x18x18x8xbf16, #tpu.memory_space<vmem>>, vector<1x16x16x8xbf16>
    %42 = vector.shape_cast %41 : vector<1x16x16x8xbf16> to vector<16x16x8xbf16>
    %43 = vector.shape_cast %42 : vector<16x16x8xbf16> to vector<256x8xbf16>
    %c4 = arith.constant 4 : index
    %c0_30 = arith.constant 0 : index
    %c0_31 = arith.constant 0 : index
    %44 = vector.load %arg3[%c4, %c0_30, %c0_31] : memref<9x8x128xbf16, #tpu.memory_space<vmem>>, vector<1x8x128xbf16>
    %45 = vector.shape_cast %44 : vector<1x8x128xbf16> to vector<8x128xbf16>
    %cst_32 = arith.constant dense<0.000000e+00> : vector<256x128xf32>
    %46 = tpu.matmul %43, %45, %cst_32 {dimension_numbers = #tpu.dot_dimension_numbers<[1], [0], [0], [1], [0, 0, 1, 1], [], []>} : vector<256x8xbf16>, vector<8x128xbf16>, vector<256x128xf32> -> vector<256x128xf32>
    %47 = arith.addf %38, %46 : vector<256x128xf32>
    %c1_i32_33 = arith.constant 1 : i32
    %48 = arith.addi %1, %c1_i32_33 : i32
    %c0_34 = arith.constant 0 : index
    %49 = arith.index_cast %48 : i32 to index
    %c2_35 = arith.constant 2 : index
    %c0_36 = arith.constant 0 : index
    %50 = vector.load %arg2[%c0_34, %49, %c2_35, %c0_36] : memref<1x18x18x8xbf16, #tpu.memory_space<vmem>>, vector<1x16x16x8xbf16>
    %51 = vector.shape_cast %50 : vector<1x16x16x8xbf16> to vector<16x16x8xbf16>
    %52 = vector.shape_cast %51 : vector<16x16x8xbf16> to vector<256x8xbf16>
    %c5 = arith.constant 5 : index
    %c0_37 = arith.constant 0 : index
    %c0_38 = arith.constant 0 : index
    %53 = vector.load %arg3[%c5, %c0_37, %c0_38] : memref<9x8x128xbf16, #tpu.memory_space<vmem>>, vector<1x8x128xbf16>
    %54 = vector.shape_cast %53 : vector<1x8x128xbf16> to vector<8x128xbf16>
    %cst_39 = arith.constant dense<0.000000e+00> : vector<256x128xf32>
    %55 = tpu.matmul %52, %54, %cst_39 {dimension_numbers = #tpu.dot_dimension_numbers<[1], [0], [0], [1], [0, 0, 1, 1], [], []>} : vector<256x8xbf16>, vector<8x128xbf16>, vector<256x128xf32> -> vector<256x128xf32>
    %56 = arith.addf %47, %55 : vector<256x128xf32>
    %c2_i32 = arith.constant 2 : i32
    %57 = arith.addi %1, %c2_i32 : i32
    %c0_40 = arith.constant 0 : index
    %58 = arith.index_cast %57 : i32 to index
    %c0_41 = arith.constant 0 : index
    %c0_42 = arith.constant 0 : index
    %59 = vector.load %arg2[%c0_40, %58, %c0_41, %c0_42] : memref<1x18x18x8xbf16, #tpu.memory_space<vmem>>, vector<1x16x16x8xbf16>
    %60 = vector.shape_cast %59 : vector<1x16x16x8xbf16> to vector<16x16x8xbf16>
    %61 = vector.shape_cast %60 : vector<16x16x8xbf16> to vector<256x8xbf16>
    %c6 = arith.constant 6 : index
    %c0_43 = arith.constant 0 : index
    %c0_44 = arith.constant 0 : index
    %62 = vector.load %arg3[%c6, %c0_43, %c0_44] : memref<9x8x128xbf16, #tpu.memory_space<vmem>>, vector<1x8x128xbf16>
    %63 = vector.shape_cast %62 : vector<1x8x128xbf16> to vector<8x128xbf16>
    %cst_45 = arith.constant dense<0.000000e+00> : vector<256x128xf32>
    %64 = tpu.matmul %61, %63, %cst_45 {dimension_numbers = #tpu.dot_dimension_numbers<[1], [0], [0], [1], [0, 0, 1, 1], [], []>} : vector<256x8xbf16>, vector<8x128xbf16>, vector<256x128xf32> -> vector<256x128xf32>
    %65 = arith.addf %56, %64 : vector<256x128xf32>
    %c2_i32_46 = arith.constant 2 : i32
    %66 = arith.addi %1, %c2_i32_46 : i32
    %c0_47 = arith.constant 0 : index
    %67 = arith.index_cast %66 : i32 to index
    %c1_48 = arith.constant 1 : index
    %c0_49 = arith.constant 0 : index
    %68 = vector.load %arg2[%c0_47, %67, %c1_48, %c0_49] : memref<1x18x18x8xbf16, #tpu.memory_space<vmem>>, vector<1x16x16x8xbf16>
    %69 = vector.shape_cast %68 : vector<1x16x16x8xbf16> to vector<16x16x8xbf16>
    %70 = vector.shape_cast %69 : vector<16x16x8xbf16> to vector<256x8xbf16>
    %c7 = arith.constant 7 : index
    %c0_50 = arith.constant 0 : index
    %c0_51 = arith.constant 0 : index
    %71 = vector.load %arg3[%c7, %c0_50, %c0_51] : memref<9x8x128xbf16, #tpu.memory_space<vmem>>, vector<1x8x128xbf16>
    %72 = vector.shape_cast %71 : vector<1x8x128xbf16> to vector<8x128xbf16>
    %cst_52 = arith.constant dense<0.000000e+00> : vector<256x128xf32>
    %73 = tpu.matmul %70, %72, %cst_52 {dimension_numbers = #tpu.dot_dimension_numbers<[1], [0], [0], [1], [0, 0, 1, 1], [], []>} : vector<256x8xbf16>, vector<8x128xbf16>, vector<256x128xf32> -> vector<256x128xf32>
    %74 = arith.addf %65, %73 : vector<256x128xf32>
    %c2_i32_53 = arith.constant 2 : i32
    %75 = arith.addi %1, %c2_i32_53 : i32
    %c0_54 = arith.constant 0 : index
    %76 = arith.index_cast %75 : i32 to index
    %c2_55 = arith.constant 2 : index
    %c0_56 = arith.constant 0 : index
    %77 = vector.load %arg2[%c0_54, %76, %c2_55, %c0_56] : memref<1x18x18x8xbf16, #tpu.memory_space<vmem>>, vector<1x16x16x8xbf16>
    %78 = vector.shape_cast %77 : vector<1x16x16x8xbf16> to vector<16x16x8xbf16>
    %79 = vector.shape_cast %78 : vector<16x16x8xbf16> to vector<256x8xbf16>
    %c8 = arith.constant 8 : index
    %c0_57 = arith.constant 0 : index
    %c0_58 = arith.constant 0 : index
    %80 = vector.load %arg3[%c8, %c0_57, %c0_58] : memref<9x8x128xbf16, #tpu.memory_space<vmem>>, vector<1x8x128xbf16>
    %81 = vector.shape_cast %80 : vector<1x8x128xbf16> to vector<8x128xbf16>
    %cst_59 = arith.constant dense<0.000000e+00> : vector<256x128xf32>
    %82 = tpu.matmul %79, %81, %cst_59 {dimension_numbers = #tpu.dot_dimension_numbers<[1], [0], [0], [1], [0, 0, 1, 1], [], []>} : vector<256x8xbf16>, vector<8x128xbf16>, vector<256x128xf32> -> vector<256x128xf32>
    %83 = arith.addf %74, %82 : vector<256x128xf32>
    %84 = arith.truncf %83 : vector<256x128xf32> to vector<256x128xbf16>
    %c0_60 = arith.constant 0 : index
    %c0_61 = arith.constant 0 : index
    %85 = vector.load %arg4[%c0_60, %c0_61] : memref<256x128xbf16, #tpu.memory_space<vmem>>, vector<256x128xbf16>
    tpu.vector_store %arg4[%c0_60, %c0_61], %84 {strides = array<i32>} : memref<256x128xbf16, #tpu.memory_space<vmem>>, vector<256x128xbf16>,
    %cst_62 = arith.constant dense<0.000000e+00> : vector<128xf32>
    %86 = vector.multi_reduction <add>, %83, %cst_62 [0] : vector<256x128xf32> to vector<128xf32>
    %87 = vector.shape_cast %86 : vector<128xf32> to vector<1x128xf32>
    %88 = arith.mulf %83, %83 : vector<256x128xf32>
    %cst_63 = arith.constant dense<0.000000e+00> : vector<128xf32>
    %89 = vector.multi_reduction <add>, %88, %cst_63 [0] : vector<256x128xf32> to vector<128xf32>
    %90 = vector.shape_cast %89 : vector<128xf32> to vector<1x128xf32>
    %91 = vector.shape_cast %87 : vector<1x128xf32> to vector<1x128xf32>
    %92 = vector.broadcast %91 : vector<1x128xf32> to vector<8x128xf32>
    %c0_64 = arith.constant 0 : index
    %c0_65 = arith.constant 0 : index
    %93 = vector.load %arg5[%c0_64, %c0_65] : memref<8x128xf32, #tpu.memory_space<vmem>>, vector<8x128xf32>
    tpu.vector_store %arg5[%c0_64, %c0_65], %92 {strides = array<i32>} : memref<8x128xf32, #tpu.memory_space<vmem>>, vector<8x128xf32>,
    %94 = vector.shape_cast %90 : vector<1x128xf32> to vector<1x128xf32>
    %95 = vector.broadcast %94 : vector<1x128xf32> to vector<8x128xf32>
    %c0_66 = arith.constant 0 : index
    %c0_67 = arith.constant 0 : index
    %96 = vector.load %arg6[%c0_66, %c0_67] : memref<8x128xf32, #tpu.memory_space<vmem>>, vector<8x128xf32>
    tpu.vector_store %arg6[%c0_66, %c0_67], %95 {strides = array<i32>} : memref<8x128xf32, #tpu.memory_space<vmem>>, vector<8x128xf32>,
    return
  }
  func.func @transform_0(%arg0: i32, %arg1: i32) -> (i32, i32, i32, i32) {
    %c0_i32 = arith.constant 0 : i32
    %c0_i32_0 = arith.constant 0 : i32
    %c0_i32_1 = arith.constant 0 : i32
    %c0_i32_2 = arith.constant 0 : i32
    return %arg0, %c0_i32, %c0_i32_0, %c0_i32_1 : i32, i32, i32, i32
  }
  func.func @transform_1(%arg0: i32, %arg1: i32) -> (i32, i32, i32) {
    %c0_i32 = arith.constant 0 : i32
    %c0_i32_0 = arith.constant 0 : i32
    %c0_i32_1 = arith.constant 0 : i32
    %c0_i32_2 = arith.constant 0 : i32
    return %c0_i32, %c0_i32_0, %c0_i32_1 : i32, i32, i32
  }
  func.func @transform_2(%arg0: i32, %arg1: i32) -> (i32, i32) {
    %c1_i32 = arith.constant 1 : i32
    %0 = arith.muli %arg0, %c1_i32 : i32
    %1 = arith.addi %0, %arg1 : i32
    %c0_i32 = arith.constant 0 : i32
    %c0_i32_0 = arith.constant 0 : i32
    return %1, %c0_i32 : i32, i32
  }
  func.func @transform_3(%arg0: i32, %arg1: i32) -> (i32, i32) {
    %c1_i32 = arith.constant 1 : i32
    %0 = arith.muli %arg0, %c1_i32 : i32
    %1 = arith.addi %0, %arg1 : i32
    %c0_i32 = arith.constant 0 : i32
    %c0_i32_0 = arith.constant 0 : i32
    return %1, %c0_i32 : i32, i32
  }
  func.func @transform_4(%arg0: i32, %arg1: i32) -> (i32, i32) {
    %c1_i32 = arith.constant 1 : i32
    %0 = arith.muli %arg0, %c1_i32 : i32
    %1 = arith.addi %0, %arg1 : i32
    %c0_i32 = arith.constant 0 : i32
    %c0_i32_0 = arith.constant 0 : i32
    return %1, %c0_i32 : i32, i32
  }
}

module attributes {stable_mosaic.version = 11 : i64} {
  func.func @bn_relu_kernel(%arg0: i32, %arg1: memref<256x128xbf16, #tpu.memory_space<vmem>>, %arg2: memref<1x128xf32, #tpu.memory_space<vmem>>, %arg3: memref<1x128xf32, #tpu.memory_space<vmem>>, %arg4: memref<256x128xf32, #tpu.memory_space<vmem>>) attributes {dimension_semantics = [#tpu.dimension_semantics<parallel>], iteration_bounds = array<i64: 2>, scalar_prefetch = 0 : i64, scratch_operands = 0 : i64, tpu.core_type = #tpu.core_type<tc>, window_params = [{transform_indices = @transform_0, window_bounds = array<i64: 256, 128>}, {pipeline_mode = #tpu.pipeline_mode<synchronous>, transform_indices = @transform_1, window_bounds = array<i64: 1, 128>}, {pipeline_mode = #tpu.pipeline_mode<synchronous>, transform_indices = @transform_2, window_bounds = array<i64: 1, 128>}, {transform_indices = @transform_3, window_bounds = array<i64: 256, 128>}]} {
    %c0 = arith.constant 0 : index
    %c0_0 = arith.constant 0 : index
    %0 = vector.load %arg1[%c0, %c0_0] : memref<256x128xbf16, #tpu.memory_space<vmem>>, vector<256x128xbf16>
    %1 = arith.extf %0 : vector<256x128xbf16> to vector<256x128xf32>
    %c0_1 = arith.constant 0 : index
    %c0_2 = arith.constant 0 : index
    %2 = vector.load %arg2[%c0_1, %c0_2] : memref<1x128xf32, #tpu.memory_space<vmem>>, vector<1x128xf32>
    %3 = vector.broadcast %2 : vector<1x128xf32> to vector<256x128xf32>
    %4 = arith.mulf %1, %3 : vector<256x128xf32>
    %c0_3 = arith.constant 0 : index
    %c0_4 = arith.constant 0 : index
    %5 = vector.load %arg3[%c0_3, %c0_4] : memref<1x128xf32, #tpu.memory_space<vmem>>, vector<1x128xf32>
    %6 = vector.broadcast %5 : vector<1x128xf32> to vector<256x128xf32>
    %7 = arith.addf %4, %6 : vector<256x128xf32>
    %cst = arith.constant 0.000000e+00 : f32
    %8 = vector.broadcast %cst : f32 to vector<256x128xf32>
    %9 = arith.maximumf %7, %8 : vector<256x128xf32>
    %c0_5 = arith.constant 0 : index
    %c0_6 = arith.constant 0 : index
    %10 = vector.load %arg4[%c0_5, %c0_6] : memref<256x128xf32, #tpu.memory_space<vmem>>, vector<256x128xf32>
    tpu.vector_store %arg4[%c0_5, %c0_6], %9 {strides = array<i32>} : memref<256x128xf32, #tpu.memory_space<vmem>>, vector<256x128xf32>,
    return
  }
  func.func @transform_0(%arg0: i32) -> (i32, i32) {
    %c0_i32 = arith.constant 0 : i32
    %c0_i32_0 = arith.constant 0 : i32
    return %arg0, %c0_i32 : i32, i32
  }
  func.func @transform_1(%arg0: i32) -> (i32, i32) {
    %c0_i32 = arith.constant 0 : i32
    %c0_i32_0 = arith.constant 0 : i32
    %c0_i32_1 = arith.constant 0 : i32
    return %c0_i32, %c0_i32_0 : i32, i32
  }
  func.func @transform_2(%arg0: i32) -> (i32, i32) {
    %c0_i32 = arith.constant 0 : i32
    %c0_i32_0 = arith.constant 0 : i32
    %c0_i32_1 = arith.constant 0 : i32
    return %c0_i32, %c0_i32_0 : i32, i32
  }
  func.func @transform_3(%arg0: i32) -> (i32, i32) {
    %c0_i32 = arith.constant 0 : i32
    %c0_i32_0 = arith.constant 0 : i32
    return %arg0, %c0_i32 : i32, i32
  }
}

</mosaic_0001>

<llo_original>
// kernel: conv2d_bn_relu.3
$region0: #{conv2d_bn_relu.3}
  #allocation0 [shape = 'u32[]', space=smem, size = 0x4, offset = 0x4, fixed_abs, tag = 'smem constant byte address 0x4 - core index']
  #allocation1 [shape = 'u32[72,128]{1,0:T(1,128)}', space=vmem, size = 0x9000, scoped, tag = 'internal scratch']
  %s0 = inlined_call_operand.vmem [shape: bf16[512,128], index: 0, kind: input, shape index: {}]
  %s1 = inlined_call_operand.vmem [shape: f32[1,128], index: 1, kind: input, shape index: {}]
  %s2 = inlined_call_operand.vmem [shape: f32[1,128], index: 2, kind: input, shape index: {}]
  %s3 = inlined_call_operand.vmem [shape: f32[512,128], index: 3, kind: output, shape index: {}]
  %s4 = sld [smem:[#allocation0]]
  $region45: #{conv2d_bn_relu.3} parent=0
    _
  %s6 = ssub.s32 1, %s4
  %s7 = scalar_select 0, %s6, %s4
  loop: start=0, step=1, limit=4
  $region2: #{conv2d_bn_relu.3} parent=0 // loop_pre_header
    _
  $region3: #{conv2d_bn_relu.3} parent=0 // loop_header
    %s9 = sphi 0, %s13
    %p10 = scmp.ge.s32.totalorder %s9, 4
    %s19 = sphi 0, %s21
    %s22 = sphi 0, %s19
    %s23 = sphi 0, %s22
    %s39 = sphi 0, %s23
    %s43 = sphi 0, %s43
    %s45 = sphi 0, %s43
    %s46 = sphi 0, %s45
    %s60 = sphi 0, %s46
    %s64 = sphi 0, %s64
    %s66 = sphi 0, %s64
    %s67 = sphi 0, %s66
    %s81 = sphi 0, %s67
    %s87 = sphi 0, %s89
    %s90 = sphi 0, %s87
    %s91 = sphi 0, %s90
    %s107 = sphi 0, %s91
  $region4: #{conv2d_bn_relu.3} parent=0 // loop_header_branch
    %12 = sbr.rel (%p10) target = $region8
  $region5: #{conv2d_bn_relu.3} parent=0 // loop_body
    %s14 = ssub.s32 %s9, 1
    %s15 = ssub.s32 %s9, 2
    %s16 = sadd.s32 %s9, 1
    %s17 = ssub.s32 %s9, %s16
    %p18 = scmp.eq.s32.totalorder %s17, 0
    %s20 = sadd.s32 %s19, 1
    %s21 = scalar_select %p18, %s19, %s20
    %p24 = pneg %p18
    %p25 = scmp.eq.s32.totalorder %s9, 1
    %p26 = por %p24, %p25
    %p27 = scmp.ne.s32.totalorder %s19, %s22
    %p28 = scmp.eq.s32.totalorder %s9, 0
    %p29 = por %p27, %p28
    %p30 = scmp.ne.s32.totalorder %s19, %s22
    %p31 = scmp.eq.s32.totalorder %s14, 1
    %p32 = por %p30, %p31
    %p33 = scmp.ne.s32.totalorder %s22, %s23
    %p34 = scmp.eq.s32.totalorder %s14, 0
    %p35 = por %p33, %p34
    %p36 = scmp.ne.s32.totalorder %s22, %s23
    %p37 = scmp.eq.s32.totalorder %s15, 1
    %p38 = por %p36, %p37
    %p40 = scmp.ne.s32.totalorder %s23, %s39
    %p41 = scmp.eq.s32.totalorder %s15, 0
    %p42 = por %p40, %p41
    %s44 = sadd.s32 %s43, 1
    %p47 = scmp.eq.s32.totalorder %s9, 1
    %p48 = scmp.ne.s32.totalorder %s43, %s45
    %p49 = scmp.eq.s32.totalorder %s9, 0
    %p50 = por %p48, %p49
    %p51 = scmp.ne.s32.totalorder %s43, %s45
    %p52 = scmp.eq.s32.totalorder %s14, 1
    %p53 = por %p51, %p52
    %p54 = scmp.ne.s32.totalorder %s45, %s46
    %p55 = scmp.eq.s32.totalorder %s14, 0
    %p56 = por %p54, %p55
    %p57 = scmp.ne.s32.totalorder %s45, %s46
    %p58 = scmp.eq.s32.totalorder %s15, 1
    %p59 = por %p57, %p58
    %p61 = scmp.ne.s32.totalorder %s46, %s60
    %p62 = scmp.eq.s32.totalorder %s15, 0
    %p63 = por %p61, %p62
    %s65 = sadd.s32 %s64, 1
    %p68 = scmp.eq.s32.totalorder %s9, 1
    %p69 = scmp.ne.s32.totalorder %s64, %s66
    %p70 = scmp.eq.s32.totalorder %s9, 0
    %p71 = por %p69, %p70
    %p72 = scmp.ne.s32.totalorder %s64, %s66
    %p73 = scmp.eq.s32.totalorder %s14, 1
    %p74 = por %p72, %p73
    %p75 = scmp.ne.s32.totalorder %s66, %s67
    %p76 = scmp.eq.s32.totalorder %s14, 0
    %p77 = por %p75, %p76
    %p78 = scmp.ne.s32.totalorder %s66, %s67
    %p79 = scmp.eq.s32.totalorder %s15, 1
    %p80 = por %p78, %p79
    %p82 = scmp.ne.s32.totalorder %s67, %s81
    %p83 = scmp.eq.s32.totalorder %s15, 0
    %p84 = por %p82, %p83
    %s85 = ssub.s32 %s9, %s16
    %p86 = scmp.eq.s32.totalorder %s85, 0
    %s88 = sadd.s32 %s87, 1
    %s89 = scalar_select %p86, %s87, %s88
    %p92 = pneg %p86
    %p93 = scmp.eq.s32.totalorder %s9, 1
    %p94 = por %p92, %p93
    %p95 = scmp.ne.s32.totalorder %s87, %s90
    %p96 = scmp.eq.s32.totalorder %s9, 0
    %p97 = por %p95, %p96
    %p98 = scmp.ne.s32.totalorder %s87, %s90
    %p99 = scmp.eq.s32.totalorder %s14, 1
    %p100 = por %p98, %p99
    %p101 = scmp.ne.s32.totalorder %s90, %s91
    %p102 = scmp.eq.s32.totalorder %s14, 0
    %p103 = por %p101, %p102
    %p104 = scmp.ne.s32.totalorder %s90, %s91
    %p105 = scmp.eq.s32.totalorder %s15, 1
    %p106 = por %p104, %p105
    %p108 = scmp.ne.s32.totalorder %s91, %s107
    %p109 = scmp.eq.s32.totalorder %s15, 0
    %p110 = por %p108, %p109
    %p111 = scmp.le.s32.totalorder 1, %s9
    %p112 = scmp.lt.s32.totalorder %s9, 3
    %p113 = pnand %p111, %p112
    %p114 = pneg %p113
    // Predicated region
    $region9: #{conv2d_bn_relu.3} parent=5 // pred_check
      _
    $region10: #{conv2d_bn_relu.3} parent=5 // pred_check_branch
      %116 = sbr.rel (%p113) target = $region12
    $region11: #{conv2d_bn_relu.3} parent=5 // pred_region
      %s117 = ssub.s32 %s9, 1
      // Predicated region
      $region13: #{conv2d_bn_relu.3} parent=11 // pred_check
        %p118 = pneg %p56
      $region14: #{conv2d_bn_relu.3} parent=11 // pred_check_branch
        %120 = sbr.rel (%p118) target = $region16
      $region15: #{conv2d_bn_relu.3} parent=11 // pred_region
        _
      $region16: #{conv2d_bn_relu.3} parent=11 // pred_fallthru
        _
      // Predicated region
      $region17: #{conv2d_bn_relu.3} parent=11 // pred_check
        %p121 = pneg %p77
      $region18: #{conv2d_bn_relu.3} parent=11 // pred_check_branch
        %123 = sbr.rel (%p121) target = $region20
      $region19: #{conv2d_bn_relu.3} parent=11 // pred_region
        _
      $region20: #{conv2d_bn_relu.3} parent=11 // pred_fallthru
        _
    $region12: #{conv2d_bn_relu.3} parent=5 // pred_fallthru
      _
    %p124 = scmp.lt.s32.totalorder %s9, 2
    // Predicated region
    $region21: #{conv2d_bn_relu.3} parent=5 // pred_check
      %p125 = pneg %p124
    $region22: #{conv2d_bn_relu.3} parent=5 // pred_check_branch
      %127 = sbr.rel (%p125) target = $region24
    $region23: #{conv2d_bn_relu.3} parent=5 // pred_region
      // Predicated region
      $region25: #{conv2d_bn_relu.3} parent=23 // pred_check
        %p128 = pneg %p29
      $region26: #{conv2d_bn_relu.3} parent=23 // pred_check_branch
        %130 = sbr.rel (%p128) target = $region28
      $region27: #{conv2d_bn_relu.3} parent=23 // pred_region
        %s131 = smul.u32 32, %s9
        %p132 = scmp.lt.s32.totalorder %s131, 63
        %s133 = scalar_select %p132, %s131, 63
        %s134 = smul.addr %s133, 4
        %s135 = scalar_lea.vmem %s0, %s134
        %s136 = smul.u32 32, %s9
      $region28: #{conv2d_bn_relu.3} parent=23 // pred_fallthru
        _
    $region24: #{conv2d_bn_relu.3} parent=5 // pred_fallthru
      _
    %p137 = scmp.le.s32.totalorder 1, %s9
    %p138 = scmp.lt.s32.totalorder %s9, 3
    %p139 = pnand %p137, %p138
    %p140 = pneg %p139
    // Predicated region
    $region29: #{conv2d_bn_relu.3} parent=5 // pred_check
      _
    $region30: #{conv2d_bn_relu.3} parent=5 // pred_check_branch
      %142 = sbr.rel (%p139) target = $region32
    $region31: #{conv2d_bn_relu.3} parent=5 // pred_region
      %s143 = ssub.s32 %s9, 1
      %s144 = smul.u32 32, %s14
      %p145 = scmp.lt.s32.totalorder %s144, 63
      %s146 = scalar_select %p145, %s144, 63
      %s147 = smul.addr %s146, 4
      %s148 = scalar_lea.vmem %s0, %s147
      %p149 = pneg %p35
      %p150 = pneg %p32
      %p151 = pneg %p56
      %p152 = pneg %p53
      %p153 = pneg %p77
      %p154 = pneg %p74
      %p155 = pneg %p103
      %p156 = pneg %p100
      %s157 = smul.u32 32, %s14
      %p158 = scmp.lt.s32.totalorder %s157, 63
      %s159 = scalar_select %p158, %s157, 63
      %s160 = smul.addr %s159, 8
      %s161 = scalar_lea.vmem %s3, %s160
      %s162 = smul.u32 32, %s14
      %p163 = scmp.lt.s32.totalorder %s162, 63
      %s164 = scalar_select %p163, %s162, 63
      %s165 = smul.addr %s164, 4
      %s166 = scalar_lea.vmem %s0, %s165
      %s167 = smul.u32 32, %s14
      %s168 = smul.u32 32, %s14
      %p169 = scmp.lt.s32.totalorder %s168, 63
      %s170 = scalar_select %p169, %s168, 63
      %s171 = smul.addr %s170, 8
      %s172 = scalar_lea.vmem %s3, %s171
      %s173 = smul.u32 32, %s14
      %v174 = vld [vmem:[%s166] sm:$0xf]
      %v175 = vld [vmem:[%s166 + $0x4] sm:$0xf]
      %v176 = vld [vmem:[%s166 + $0x8] sm:$0xf]
      %v177 = vld [vmem:[%s166 + $0xc] sm:$0xf]
      %v178 = vld [vmem:[%s166 + $0x10] sm:$0xf]
      %v179 = vld [vmem:[%s166 + $0x14] sm:$0xf]
      %v180 = vld [vmem:[%s166 + $0x18] sm:$0xf]
      %v181 = vld [vmem:[%s166 + $0x1c] sm:$0xf]
      %v182 = vld [vmem:[%s166 + $0x20] sm:$0xf]
      %v183 = vld [vmem:[%s166 + $0x24] sm:$0xf]
      %v184 = vld [vmem:[%s166 + $0x28] sm:$0xf]
      %v185 = vld [vmem:[%s166 + $0x2c] sm:$0xf]
      %v186 = vld [vmem:[%s166 + $0x30] sm:$0xf]
      %v187 = vld [vmem:[%s166 + $0x34] sm:$0xf]
      %v188 = vld [vmem:[%s166 + $0x38] sm:$0xf]
      %v189 = vld [vmem:[%s166 + $0x3c] sm:$0xf]
      %v190 = vld [vmem:[%s166 + $0x40] sm:$0xf]
      %v191 = vld [vmem:[%s166 + $0x44] sm:$0xf]
      %v192 = vld [vmem:[%s166 + $0x48] sm:$0xf]
      %v193 = vld [vmem:[%s166 + $0x4c] sm:$0xf]
      %v194 = vld [vmem:[%s166 + $0x50] sm:$0xf]
      %v195 = vld [vmem:[%s166 + $0x54] sm:$0xf]
      %v196 = vld [vmem:[%s166 + $0x58] sm:$0xf]
      %v197 = vld [vmem:[%s166 + $0x5c] sm:$0xf]
      %v198 = vld [vmem:[%s166 + $0x60] sm:$0xf]
      %v199 = vld [vmem:[%s166 + $0x64] sm:$0xf]
      %v200 = vld [vmem:[%s166 + $0x68] sm:$0xf]
      %v201 = vld [vmem:[%s166 + $0x6c] sm:$0xf]
      %v202 = vld [vmem:[%s166 + $0x70] sm:$0xf]
      %v203 = vld [vmem:[%s166 + $0x74] sm:$0xf]
      %v204 = vld [vmem:[%s166 + $0x78] sm:$0xf]
      %v205 = vld [vmem:[%s166 + $0x7c] sm:$0xf]
      %v206 = vunpack.c.l.bf16 %v174
      %v207 = vunpack.c.l.bf16 %v175
      %v208 = vunpack.c.l.bf16 %v176
      %v209 = vunpack.c.l.bf16 %v177
      %v210 = vunpack.c.l.bf16 %v178
      %v211 = vunpack.c.l.bf16 %v179
      %v212 = vunpack.c.l.bf16 %v180
      %v213 = vunpack.c.l.bf16 %v181
      %v214 = vunpack.c.l.bf16 %v182
      %v215 = vunpack.c.l.bf16 %v183
      %v216 = vunpack.c.l.bf16 %v184
      %v217 = vunpack.c.l.bf16 %v185
      %v218 = vunpack.c.l.bf16 %v186
      %v219 = vunpack.c.l.bf16 %v187
      %v220 = vunpack.c.l.bf16 %v188
      %v221 = vunpack.c.l.bf16 %v189
      %v222 = vunpack.c.l.bf16 %v190
      %v223 = vunpack.c.l.bf16 %v191
      %v224 = vunpack.c.l.bf16 %v192
      %v225 = vunpack.c.l.bf16 %v193
      %v226 = vunpack.c.l.bf16 %v194
      %v227 = vunpack.c.l.bf16 %v195
      %v228 = vunpack.c.l.bf16 %v196
      %v229 = vunpack.c.l.bf16 %v197
      %v230 = vunpack.c.l.bf16 %v198
      %v231 = vunpack.c.l.bf16 %v199
      %v232 = vunpack.c.l.bf16 %v200
      %v233 = vunpack.c.l.bf16 %v201
      %v234 = vunpack.c.l.bf16 %v202
      %v235 = vunpack.c.l.bf16 %v203
      %v236 = vunpack.c.l.bf16 %v204
      %v237 = vunpack.c.l.bf16 %v205
      %v238 = vld [vmem:[%s1] sm:$0x1]
      %v240 = vperm.slane %v238, 0
      %v242 = vmul.f32 %v206, %v240
      %v243 = vmul.f32 %v207, %v240
      %v244 = vmul.f32 %v208, %v240
      %v245 = vmul.f32 %v209, %v240
      %v246 = vmul.f32 %v210, %v240
      %v247 = vmul.f32 %v211, %v240
      %v248 = vmul.f32 %v212, %v240
      %v249 = vmul.f32 %v213, %v240
      %v250 = vmul.f32 %v214, %v240
      %v251 = vmul.f32 %v215, %v240
      %v252 = vmul.f32 %v216, %v240
      %v253 = vmul.f32 %v217, %v240
      %v254 = vmul.f32 %v218, %v240
      %v255 = vmul.f32 %v219, %v240
      %v256 = vmul.f32 %v220, %v240
      %v257 = vmul.f32 %v221, %v240
      %v258 = vmul.f32 %v222, %v240
      %v259 = vmul.f32 %v223, %v240
      %v260 = vmul.f32 %v224, %v240
      %v261 = vmul.f32 %v225, %v240
      %v262 = vmul.f32 %v226, %v240
      %v263 = vmul.f32 %v227, %v240
      %v264 = vmul.f32 %v228, %v240
      %v265 = vmul.f32 %v229, %v240
      %v266 = vmul.f32 %v230, %v240
      %v267 = vmul.f32 %v231, %v240
      %v268 = vmul.f32 %v232, %v240
      %v269 = vmul.f32 %v233, %v240
      %v270 = vmul.f32 %v234, %v240
      %v271 = vmul.f32 %v235, %v240
      %v272 = vmul.f32 %v236, %v240
      %v273 = vmul.f32 %v237, %v240
      %v274 = vld [vmem:[%s2] sm:$0x1]
      %v276 = vperm.slane %v274, 0
      %v278 = vadd.f32 %v242, %v276
      %v279 = vadd.f32 %v243, %v276
      %v280 = vadd.f32 %v244, %v276
      %v281 = vadd.f32 %v245, %v276
      %v282 = vadd.f32 %v246, %v276
      %v283 = vadd.f32 %v247, %v276
      %v284 = vadd.f32 %v248, %v276
      %v285 = vadd.f32 %v249, %v276
      %v286 = vadd.f32 %v250, %v276
      %v287 = vadd.f32 %v251, %v276
      %v288 = vadd.f32 %v252, %v276
      %v289 = vadd.f32 %v253, %v276
      %v290 = vadd.f32 %v254, %v276
      %v291 = vadd.f32 %v255, %v276
      %v292 = vadd.f32 %v256, %v276
      %v293 = vadd.f32 %v257, %v276
      %v294 = vadd.f32 %v258, %v276
      %v295 = vadd.f32 %v259, %v276
      %v296 = vadd.f32 %v260, %v276
      %v297 = vadd.f32 %v261, %v276
      %v298 = vadd.f32 %v262, %v276
      %v299 = vadd.f32 %v263, %v276
      %v300 = vadd.f32 %v264, %v276
      %v301 = vadd.f32 %v265, %v276
      %v302 = vadd.f32 %v266, %v276
      %v303 = vadd.f32 %v267, %v276
      %v304 = vadd.f32 %v268, %v276
      %v305 = vadd.f32 %v269, %v276
      %v306 = vadd.f32 %v270, %v276
      %v307 = vadd.f32 %v271, %v276
      %v308 = vadd.f32 %v272, %v276
      %v309 = vadd.f32 %v273, %v276
      %v310 = vmax.f32 %v278, 0.0
      %v311 = vmax.f32 %v279, 0.0
      %v312 = vmax.f32 %v280, 0.0
      %v313 = vmax.f32 %v281, 0.0
      %v314 = vmax.f32 %v282, 0.0
      %v315 = vmax.f32 %v283, 0.0
      %v316 = vmax.f32 %v284, 0.0
      %v317 = vmax.f32 %v285, 0.0
      %v318 = vmax.f32 %v286, 0.0
      %v319 = vmax.f32 %v287, 0.0
      %v320 = vmax.f32 %v288, 0.0
      %v321 = vmax.f32 %v289, 0.0
      %v322 = vmax.f32 %v290, 0.0
      %v323 = vmax.f32 %v291, 0.0
      %v324 = vmax.f32 %v292, 0.0
      %v325 = vmax.f32 %v293, 0.0
      %v326 = vmax.f32 %v294, 0.0
      %v327 = vmax.f32 %v295, 0.0
      %v328 = vmax.f32 %v296, 0.0
      %v329 = vmax.f32 %v297, 0.0
      %v330 = vmax.f32 %v298, 0.0
      %v331 = vmax.f32 %v299, 0.0
      %v332 = vmax.f32 %v300, 0.0
      %v333 = vmax.f32 %v301, 0.0
      %v334 = vmax.f32 %v302, 0.0
      %v335 = vmax.f32 %v303, 0.0
      %v336 = vmax.f32 %v304, 0.0
      %v337 = vmax.f32 %v305, 0.0
      %v338 = vmax.f32 %v306, 0.0
      %v339 = vmax.f32 %v307, 0.0
      %v340 = vmax.f32 %v308, 0.0
      %v341 = vmax.f32 %v309, 0.0
      %342 = vst [vmem:[%s172] sm:$0xff] %v310
      %343 = vst [vmem:[%s172 + $0x8] sm:$0xff] %v311
      %344 = vst [vmem:[%s172 + $0x10] sm:$0xff] %v312
      %345 = vst [vmem:[%s172 + $0x18] sm:$0xff] %v313
      %346 = vst [vmem:[%s172 + $0x20] sm:$0xff] %v314
      %347 = vst [vmem:[%s172 + $0x28] sm:$0xff] %v315
      %348 = vst [vmem:[%s172 + $0x30] sm:$0xff] %v316
      %349 = vst [vmem:[%s172 + $0x38] sm:$0xff] %v317
      %350 = vst [vmem:[%s172 + $0x40] sm:$0xff] %v318
      %351 = vst [vmem:[%s172 + $0x48] sm:$0xff] %v319
      %352 = vst [vmem:[%s172 + $0x50] sm:$0xff] %v320
      %353 = vst [vmem:[%s172 + $0x58] sm:$0xff] %v321
      %354 = vst [vmem:[%s172 + $0x60] sm:$0xff] %v322
      %355 = vst [vmem:[%s172 + $0x68] sm:$0xff] %v323
      %356 = vst [vmem:[%s172 + $0x70] sm:$0xff] %v324
      %357 = vst [vmem:[%s172 + $0x78] sm:$0xff] %v325
      %358 = vst [vmem:[%s172 + $0x80] sm:$0xff] %v326
      %359 = vst [vmem:[%s172 + $0x88] sm:$0xff] %v327
      %360 = vst [vmem:[%s172 + $0x90] sm:$0xff] %v328
      %361 = vst [vmem:[%s172 + $0x98] sm:$0xff] %v329
      %362 = vst [vmem:[%s172 + $0xa0] sm:$0xff] %v330
      %363 = vst [vmem:[%s172 + $0xa8] sm:$0xff] %v331
      %364 = vst [vmem:[%s172 + $0xb0] sm:$0xff] %v332
      %365 = vst [vmem:[%s172 + $0xb8] sm:$0xff] %v333
      %366 = vst [vmem:[%s172 + $0xc0] sm:$0xff] %v334
      %367 = vst [vmem:[%s172 + $0xc8] sm:$0xff] %v335
      %368 = vst [vmem:[%s172 + $0xd0] sm:$0xff] %v336
      %369 = vst [vmem:[%s172 + $0xd8] sm:$0xff] %v337
      %370 = vst [vmem:[%s172 + $0xe0] sm:$0xff] %v338
      %371 = vst [vmem:[%s172 + $0xe8] sm:$0xff] %v339
      %372 = vst [vmem:[%s172 + $0xf0] sm:$0xff] %v340
      %373 = vst [vmem:[%s172 + $0xf8] sm:$0xff] %v341
      %s374 = smul.u32 32, %s14
      %p375 = scmp.lt.s32.totalorder %s374, 63
      %s376 = scalar_select %p375, %s374, 63
      %s377 = smul.addr %s376, 8
      %s378 = scalar_lea.vmem %s3, %s377
      // Predicated region
      $region33: #{conv2d_bn_relu.3} parent=31 // pred_check
        %p379 = pneg %p100
      $region34: #{conv2d_bn_relu.3} parent=31 // pred_check_branch
        %381 = sbr.rel (%p379) target = $region36
      $region35: #{conv2d_bn_relu.3} parent=31 // pred_region
        %s382 = smul.u32 32, %s14
      $region36: #{conv2d_bn_relu.3} parent=31 // pred_fallthru
        _
    $region32: #{conv2d_bn_relu.3} parent=5 // pred_fallthru
      _
    %p383 = scmp.le.s32.totalorder 2, %s9
    // Predicated region
    $region37: #{conv2d_bn_relu.3} parent=5 // pred_check
      %p384 = pneg %p383
    $region38: #{conv2d_bn_relu.3} parent=5 // pred_check_branch
      %386 = sbr.rel (%p384) target = $region40
    $region39: #{conv2d_bn_relu.3} parent=5 // pred_region
      %s387 = ssub.s32 %s9, 2
      // Predicated region
      $region41: #{conv2d_bn_relu.3} parent=39 // pred_check
        %p388 = pneg %p106
      $region42: #{conv2d_bn_relu.3} parent=39 // pred_check_branch
        %390 = sbr.rel (%p388) target = $region44
      $region43: #{conv2d_bn_relu.3} parent=39 // pred_region
        %s391 = smul.u32 32, %s15
        %p392 = scmp.lt.s32.totalorder %s391, 63
        %s393 = scalar_select %p392, %s391, 63
        %s394 = smul.addr %s393, 8
        %s395 = scalar_lea.vmem %s3, %s394
      $region44: #{conv2d_bn_relu.3} parent=39 // pred_fallthru
        _
    $region40: #{conv2d_bn_relu.3} parent=5 // pred_fallthru
      _
  $region6: #{conv2d_bn_relu.3} parent=0 // loop_footer
    %s13 = sadd.s32 1, %s9
  $region7: #{conv2d_bn_relu.3} parent=0 // loop_footer_branch
    %8 = sbr.rel target = $region3
  $region8: #{conv2d_bn_relu.3} parent=0 // loop_exit
    _

// kernel: conv2d_bn_relu.2
$region0: #{conv2d_bn_relu.2}
  #allocation0 [shape = 'u32[]', space=smem, size = 0x4, offset = 0x4, fixed_abs, tag = 'smem constant byte address 0x4 - core index']
  #allocation1 [shape = 'u32[72,128]{1,0:T(1,128)}', space=vmem, size = 0x9000, scoped, tag = 'internal scratch']
  %s0 = inlined_call_operand.vmem [shape: bf16[2,18,18,8], index: 0, kind: input, shape index: {}]
  %s1 = inlined_call_operand.vmem [shape: bf16[9,8,128], index: 1, kind: input, shape index: {}]
  %s2 = inlined_call_operand.vmem [shape: bf16[512,128], index: 2, kind: output, shape index: {0}]
  %s3 = inlined_call_operand.vmem [shape: f32[16,128], index: 3, kind: output, shape index: {1}]
  %s4 = inlined_call_operand.vmem [shape: f32[16,128], index: 4, kind: output, shape index: {2}]
  %5 = xla_tuple %s2, %s3, %s4
  %s6 = sld [smem:[#allocation0]]
  $region57: #{conv2d_bn_relu.2} parent=0
    _
  %s8 = ssub.s32 1, %s6
  %s9 = scalar_select 0, %s8, %s6
  loop: start=0, step=1, limit=4
  $region2: #{conv2d_bn_relu.2} parent=0 // loop_pre_header
    _
  $region3: #{conv2d_bn_relu.2} parent=0 // loop_header
    %s11 = sphi 0, %s15
    %p12 = scmp.ge.s32.totalorder %s11, 4
    %s18 = sphi 0, %s30
    %s19 = sphi 0, %s26
    %s20 = sphi 0, %s18
    %s21 = sphi 0, %s19
    %s22 = sphi 0, %s20
    %s23 = sphi 0, %s21
    %s33 = sphi 0, %s35
    %s36 = sphi 0, %s33
    %s37 = sphi 0, %s36
    %s53 = sphi 0, %s37
    %s57 = sphi 0, %s57
    %s59 = sphi 0, %s57
    %s60 = sphi 0, %s59
    %s74 = sphi 0, %s60
    %s82 = sphi 0, %s84
    %s85 = sphi 0, %s82
    %s86 = sphi 0, %s85
    %s102 = sphi 0, %s86
    %s110 = sphi 0, %s112
    %s113 = sphi 0, %s110
    %s114 = sphi 0, %s113
    %s130 = sphi 0, %s114
    %s138 = sphi 0, %s140
    %s141 = sphi 0, %s138
    %s142 = sphi 0, %s141
    %s158 = sphi 0, %s142
  $region4: #{conv2d_bn_relu.2} parent=0 // loop_header_branch
    %14 = sbr.rel (%p12) target = $region8
  $region5: #{conv2d_bn_relu.2} parent=0 // loop_body
    %s16 = ssub.s32 %s11, 1
    %s17 = ssub.s32 %s11, 2
    %s24 = sadd.s32 1, %s19
    %p25 = scmp.ge.s32.totalorder %s24, 1
    %s26 = scalar_select %p25, 0, %s24
    %s27 = sadd.s32 1, %s18
    %s28 = scalar_select %p25, %s27, %s18
    %p29 = scmp.ge.s32.totalorder %s28, 2
    %s30 = scalar_select %p29, 0, %s28
    %s31 = ssub.s32 %s18, %s30
    %p32 = scmp.eq.s32.totalorder %s31, 0
    %s34 = sadd.s32 %s33, 1
    %s35 = scalar_select %p32, %s33, %s34
    %p38 = pneg %p32
    %p39 = scmp.eq.s32.totalorder %s11, 1
    %p40 = por %p38, %p39
    %p41 = scmp.ne.s32.totalorder %s33, %s36
    %p42 = scmp.eq.s32.totalorder %s11, 0
    %p43 = por %p41, %p42
    %p44 = scmp.ne.s32.totalorder %s33, %s36
    %p45 = scmp.eq.s32.totalorder %s16, 1
    %p46 = por %p44, %p45
    %p47 = scmp.ne.s32.totalorder %s36, %s37
    %p48 = scmp.eq.s32.totalorder %s16, 0
    %p49 = por %p47, %p48
    %p50 = scmp.ne.s32.totalorder %s36, %s37
    %p51 = scmp.eq.s32.totalorder %s17, 1
    %p52 = por %p50, %p51
    %p54 = scmp.ne.s32.totalorder %s37, %s53
    %p55 = scmp.eq.s32.totalorder %s17, 0
    %p56 = por %p54, %p55
    %s58 = sadd.s32 %s57, 1
    %p61 = scmp.eq.s32.totalorder %s11, 1
    %p62 = scmp.ne.s32.totalorder %s57, %s59
    %p63 = scmp.eq.s32.totalorder %s11, 0
    %p64 = por %p62, %p63
    %p65 = scmp.ne.s32.totalorder %s57, %s59
    %p66 = scmp.eq.s32.totalorder %s16, 1
    %p67 = por %p65, %p66
    %p68 = scmp.ne.s32.totalorder %s59, %s60
    %p69 = scmp.eq.s32.totalorder %s16, 0
    %p70 = por %p68, %p69
    %p71 = scmp.ne.s32.totalorder %s59, %s60
    %p72 = scmp.eq.s32.totalorder %s17, 1
    %p73 = por %p71, %p72
    %p75 = scmp.ne.s32.totalorder %s60, %s74
    %p76 = scmp.eq.s32.totalorder %s17, 0
    %p77 = por %p75, %p76
    %s78 = sadd.s32 %s18, %s19
    %s79 = sadd.s32 %s30, %s26
    %s80 = ssub.s32 %s78, %s79
    %p81 = scmp.eq.s32.totalorder %s80, 0
    %s83 = sadd.s32 %s82, 1
    %s84 = scalar_select %p81, %s82, %s83
    %p87 = pneg %p81
    %p88 = scmp.eq.s32.totalorder %s11, 1
    %p89 = por %p87, %p88
    %p90 = scmp.ne.s32.totalorder %s82, %s85
    %p91 = scmp.eq.s32.totalorder %s11, 0
    %p92 = por %p90, %p91
    %p93 = scmp.ne.s32.totalorder %s82, %s85
    %p94 = scmp.eq.s32.totalorder %s16, 1
    %p95 = por %p93, %p94
    %p96 = scmp.ne.s32.totalorder %s85, %s86
    %p97 = scmp.eq.s32.totalorder %s16, 0
    %p98 = por %p96, %p97
    %p99 = scmp.ne.s32.totalorder %s85, %s86
    %p100 = scmp.eq.s32.totalorder %s17, 1
    %p101 = por %p99, %p100
    %p103 = scmp.ne.s32.totalorder %s86, %s102
    %p104 = scmp.eq.s32.totalorder %s17, 0
    %p105 = por %p103, %p104
    %s106 = sadd.s32 %s18, %s19
    %s107 = sadd.s32 %s30, %s26
    %s108 = ssub.s32 %s106, %s107
    %p109 = scmp.eq.s32.totalorder %s108, 0
    %s111 = sadd.s32 %s110, 1
    %s112 = scalar_select %p109, %s110, %s111
    %p115 = pneg %p109
    %p116 = scmp.eq.s32.totalorder %s11, 1
    %p117 = por %p115, %p116
    %p118 = scmp.ne.s32.totalorder %s110, %s113
    %p119 = scmp.eq.s32.totalorder %s11, 0
    %p120 = por %p118, %p119
    %p121 = scmp.ne.s32.totalorder %s110, %s113
    %p122 = scmp.eq.s32.totalorder %s16, 1
    %p123 = por %p121, %p122
    %p124 = scmp.ne.s32.totalorder %s113, %s114
    %p125 = scmp.eq.s32.totalorder %s16, 0
    %p126 = por %p124, %p125
    %p127 = scmp.ne.s32.totalorder %s113, %s114
    %p128 = scmp.eq.s32.totalorder %s17, 1
    %p129 = por %p127, %p128
    %p131 = scmp.ne.s32.totalorder %s114, %s130
    %p132 = scmp.eq.s32.totalorder %s17, 0
    %p133 = por %p131, %p132
    %s134 = sadd.s32 %s18, %s19
    %s135 = sadd.s32 %s30, %s26
    %s136 = ssub.s32 %s134, %s135
    %p137 = scmp.eq.s32.totalorder %s136, 0
    %s139 = sadd.s32 %s138, 1
    %s140 = scalar_select %p137, %s138, %s139
    %p143 = pneg %p137
    %p144 = scmp.eq.s32.totalorder %s11, 1
    %p145 = por %p143, %p144
    %p146 = scmp.ne.s32.totalorder %s138, %s141
    %p147 = scmp.eq.s32.totalorder %s11, 0
    %p148 = por %p146, %p147
    %p149 = scmp.ne.s32.totalorder %s138, %s141
    %p150 = scmp.eq.s32.totalorder %s16, 1
    %p151 = por %p149, %p150
    %p152 = scmp.ne.s32.totalorder %s141, %s142
    %p153 = scmp.eq.s32.totalorder %s16, 0
    %p154 = por %p152, %p153
    %p155 = scmp.ne.s32.totalorder %s141, %s142
    %p156 = scmp.eq.s32.totalorder %s17, 1
    %p157 = por %p155, %p156
    %p159 = scmp.ne.s32.totalorder %s142, %s158
    %p160 = scmp.eq.s32.totalorder %s17, 0
    %p161 = por %p159, %p160
    %p162 = scmp.le.s32.totalorder 1, %s11
    %p163 = scmp.lt.s32.totalorder %s11, 3
    %p164 = pnand %p162, %p163
    %p165 = pneg %p164
    // Predicated region
    $region9: #{conv2d_bn_relu.2} parent=5 // pred_check
      _
    $region10: #{conv2d_bn_relu.2} parent=5 // pred_check_branch
      %167 = sbr.rel (%p164) target = $region12
    $region11: #{conv2d_bn_relu.2} parent=5 // pred_region
      %s168 = ssub.s32 %s11, 1
      // Predicated region
      $region13: #{conv2d_bn_relu.2} parent=11 // pred_check
        %p169 = pneg %p70
      $region14: #{conv2d_bn_relu.2} parent=11 // pred_check_branch
        %171 = sbr.rel (%p169) target = $region16
      $region15: #{conv2d_bn_relu.2} parent=11 // pred_region
        _
      $region16: #{conv2d_bn_relu.2} parent=11 // pred_fallthru
        _
    $region12: #{conv2d_bn_relu.2} parent=5 // pred_fallthru
      _
    %p172 = scmp.lt.s32.totalorder %s11, 2
    // Predicated region
    $region17: #{conv2d_bn_relu.2} parent=5 // pred_check
      %p173 = pneg %p172
    $region18: #{conv2d_bn_relu.2} parent=5 // pred_check_branch
      %175 = sbr.rel (%p173) target = $region20
    $region19: #{conv2d_bn_relu.2} parent=5 // pred_region
      // Predicated region
      $region21: #{conv2d_bn_relu.2} parent=19 // pred_check
        %p176 = pneg %p43
      $region22: #{conv2d_bn_relu.2} parent=19 // pred_check_branch
        %178 = sbr.rel (%p176) target = $region24
      $region23: #{conv2d_bn_relu.2} parent=19 // pred_region
        %p179 = scmp.lt.s32.totalorder %s18, 1
        %s180 = scalar_select %p179, %s18, 1
        %s181 = smul.addr %s180, 54
        %s182 = smul.addr %s181, 4
        %s183 = scalar_lea.vmem %s0, %s182
      $region24: #{conv2d_bn_relu.2} parent=19 // pred_fallthru
        _
    $region20: #{conv2d_bn_relu.2} parent=5 // pred_fallthru
      _
    %p184 = scmp.le.s32.totalorder 1, %s11
    %p185 = scmp.lt.s32.totalorder %s11, 3
    %p186 = pnand %p184, %p185
    %p187 = pneg %p186
    // Predicated region
    $region25: #{conv2d_bn_relu.2} parent=5 // pred_check
      _
    $region26: #{conv2d_bn_relu.2} parent=5 // pred_check_branch
      %189 = sbr.rel (%p186) target = $region28
    $region27: #{conv2d_bn_relu.2} parent=5 // pred_region
      %s190 = ssub.s32 %s11, 1
      %p191 = scmp.lt.s32.totalorder %s20, 1
      %s192 = scalar_select %p191, %s20, 1
      %s193 = smul.addr %s192, 54
      %s194 = smul.addr %s193, 4
      %s195 = scalar_lea.vmem %s0, %s194
      %p196 = pneg %p49
      %p197 = pneg %p46
      %p198 = pneg %p70
      %p199 = pneg %p67
      %p200 = pneg %p98
      %p201 = pneg %p95
      %s202 = sadd.s32 %s20, %s21
      %s203 = smul.u32 32, %s202
      %p204 = scmp.lt.s32.totalorder %s203, 63
      %s205 = scalar_select %p204, %s203, 63
      %s206 = smul.addr %s205, 4
      %s207 = scalar_lea.vmem %s2, %s206
      %p208 = pneg %p126
      %p209 = pneg %p123
      %s210 = sadd.s32 %s20, %s21
      %p211 = scmp.lt.s32.totalorder %s210, 1
      %s212 = scalar_select %p211, %s210, 1
      %s213 = smul.addr %s212, 8
      %s214 = scalar_lea.vmem %s3, %s213
      %p215 = pneg %p154
      %p216 = pneg %p151
      %s217 = sadd.s32 %s20, %s21
      %p218 = scmp.lt.s32.totalorder %s217, 1
      %s219 = scalar_select %p218, %s217, 1
      %s220 = smul.addr %s219, 8
      %s221 = scalar_lea.vmem %s4, %s220
      %p222 = scmp.lt.s32.totalorder %s20, 1
      %s223 = scalar_select %p222, %s20, 1
      %s224 = smul.addr %s223, 54
      %s225 = smul.addr %s224, 4
      %s226 = scalar_lea.vmem %s0, %s225
      %s227 = sadd.s32 %s20, %s21
      %s228 = smul.u32 32, %s227
      %p229 = scmp.lt.s32.totalorder %s228, 63
      %s230 = scalar_select %p229, %s228, 63
      %s231 = smul.addr %s230, 4
      %s232 = scalar_lea.vmem %s2, %s231
      %s233 = sadd.s32 %s20, %s21
      %s234 = smul.u32 32, %s233
      %s235 = sadd.s32 %s20, %s21
      %p236 = scmp.lt.s32.totalorder %s235, 1
      %s237 = scalar_select %p236, %s235, 1
      %s238 = smul.addr %s237, 8
      %s239 = scalar_lea.vmem %s3, %s238
      %s240 = sadd.s32 %s20, %s21
      %s241 = sadd.s32 %s20, %s21
      %p242 = scmp.lt.s32.totalorder %s241, 1
      %s243 = scalar_select %p242, %s241, 1
      %s244 = smul.addr %s243, 8
      %s245 = scalar_lea.vmem %s4, %s244
      %s246 = sadd.s32 %s20, %s21
      %s248 = smul.u32 %s21, 16
      %s249 = smul.u32 %s248, 3
      %s250 = smul.addr %s249, 4
      %s251 = scalar_lea.vmem %s226, %s250
      %v252 = vld [vmem:[%s251] sm:$0xf]
      %v253 = vld [vmem:[%s251 + $0x4] sm:$0xf]
      %v254 = vld [vmem:[%s251 + $0xc] sm:$0xf]
      %v255 = vld [vmem:[%s251 + $0x10] sm:$0xf]
      %v256 = vld [vmem:[%s251 + $0x18] sm:$0xf]
      %v257 = vld [vmem:[%s251 + $0x1c] sm:$0xf]
      %v258 = vld [vmem:[%s251 + $0x24] sm:$0xf]
      %v259 = vld [vmem:[%s251 + $0x28] sm:$0xf]
      %v260 = vld [vmem:[%s251 + $0x30] sm:$0xf]
      %v261 = vld [vmem:[%s251 + $0x34] sm:$0xf]
      %v262 = vld [vmem:[%s251 + $0x3c] sm:$0xf]
      %v263 = vld [vmem:[%s251 + $0x40] sm:$0xf]
      %v264 = vld [vmem:[%s251 + $0x48] sm:$0xf]
      %v265 = vld [vmem:[%s251 + $0x4c] sm:$0xf]
      %v266 = vld [vmem:[%s251 + $0x54] sm:$0xf]
      %v267 = vld [vmem:[%s251 + $0x58] sm:$0xf]
      %v268 = vld [vmem:[%s251 + $0x60] sm:$0xf]
      %v269 = vld [vmem:[%s251 + $0x64] sm:$0xf]
      %v270 = vld [vmem:[%s251 + $0x6c] sm:$0xf]
      %v271 = vld [vmem:[%s251 + $0x70] sm:$0xf]
      %v272 = vld [vmem:[%s251 + $0x78] sm:$0xf]
      %v273 = vld [vmem:[%s251 + $0x7c] sm:$0xf]
      %v274 = vld [vmem:[%s251 + $0x84] sm:$0xf]
      %v275 = vld [vmem:[%s251 + $0x88] sm:$0xf]
      %v276 = vld [vmem:[%s251 + $0x90] sm:$0xf]
      %v277 = vld [vmem:[%s251 + $0x94] sm:$0xf]
      %v278 = vld [vmem:[%s251 + $0x9c] sm:$0xf]
      %v279 = vld [vmem:[%s251 + $0xa0] sm:$0xf]
      %v280 = vld [vmem:[%s251 + $0xa8] sm:$0xf]
      %v281 = vld [vmem:[%s251 + $0xac] sm:$0xf]
      %v282 = vld [vmem:[%s251 + $0xb4] sm:$0xf]
      %v283 = vld [vmem:[%s251 + $0xb8] sm:$0xf]
      %v284 = vld [vmem:[%s1] sm:$0xf]
      %v285 = vld [vmem:[%s251 + $0x8] sm:$0x1]
      %v286 = vld [vmem:[%s251 + $0x14] sm:$0x1]
      %v287 = vld [vmem:[%s251 + $0x20] sm:$0x1]
      %v288 = vld [vmem:[%s251 + $0x2c] sm:$0x1]
      %v289 = vld [vmem:[%s251 + $0x38] sm:$0x1]
      %v290 = vld [vmem:[%s251 + $0x44] sm:$0x1]
      %v291 = vld [vmem:[%s251 + $0x50] sm:$0x1]
      %v292 = vld [vmem:[%s251 + $0x5c] sm:$0x1]
      %v293 = vld [vmem:[%s251 + $0x68] sm:$0x1]
      %v294 = vld [vmem:[%s251 + $0x74] sm:$0x1]
      %v295 = vld [vmem:[%s251 + $0x80] sm:$0x1]
      %v296 = vld [vmem:[%s251 + $0x8c] sm:$0x1]
      %v297 = vld [vmem:[%s251 + $0x98] sm:$0x1]
      %v298 = vld [vmem:[%s251 + $0xa4] sm:$0x1]
      %v299 = vld [vmem:[%s251 + $0xb0] sm:$0x1]
      %v300 = vld [vmem:[%s251 + $0xbc] sm:$0x1]
      %vm301 = vsmask.f32 3328
      %vm302 = vsmask.f32 7440
      %vm303 = vmor %vm301, %vm302
      %v305 = vshrl.u32 %v252, 16
      %v307 = vrot.slane %v305, 4
      %v308 = vshll.u32 %v252, 16
      %v310 = vrot.slane %v308, 5
      %v311 = vor.u32 %v307, %v310
      %v312 = vrot.slane %v311, 4
      %v314 = vshll.u32 %v253, 16
      %v316 = vrot.slane %v314, 5
      %v317 = vsel %vm303, %v312, %v316
      %v318 = vshrl.u32 %v253, 16
      %v320 = vrot.slane %v318, 4
      %v321 = vor.u32 %v320, %v316
      %v322 = vrot.slane %v321, 4
      %v324 = vshll.u32 %v285, 16
      %v326 = vrot.slane %v324, 5
      %v327 = vsel %vm303, %v322, %v326
      %v329 = vshrl.u32 %v254, 16
      %v331 = vrot.slane %v329, 4
      %v332 = vshll.u32 %v254, 16
      %v334 = vrot.slane %v332, 5
      %v335 = vor.u32 %v331, %v334
      %v336 = vrot.slane %v335, 4
      %v338 = vshll.u32 %v255, 16
      %v340 = vrot.slane %v338, 5
      %v341 = vsel %vm303, %v336, %v340
      %v342 = vshrl.u32 %v255, 16
      %v344 = vrot.slane %v342, 4
      %v345 = vor.u32 %v344, %v340
      %v346 = vrot.slane %v345, 4
      %v348 = vshll.u32 %v286, 16
      %v350 = vrot.slane %v348, 5
      %v351 = vsel %vm303, %v346, %v350
      %v353 = vshrl.u32 %v256, 16
      %v355 = vrot.slane %v353, 4
      %v356 = vshll.u32 %v256, 16
      %v358 = vrot.slane %v356, 5
      %v359 = vor.u32 %v355, %v358
      %v360 = vrot.slane %v359, 4
      %v362 = vshll.u32 %v257, 16
      %v364 = vrot.slane %v362, 5
      %v365 = vsel %vm303, %v360, %v364
      %v366 = vshrl.u32 %v257, 16
      %v368 = vrot.slane %v366, 4
      %v369 = vor.u32 %v368, %v364
      %v370 = vrot.slane %v369, 4
      %v372 = vshll.u32 %v287, 16
      %v374 = vrot.slane %v372, 5
      %v375 = vsel %vm303, %v370, %v374
      %v377 = vshrl.u32 %v258, 16
      %v379 = vrot.slane %v377, 4
      %v380 = vshll.u32 %v258, 16
      %v382 = vrot.slane %v380, 5
      %v383 = vor.u32 %v379, %v382
      %v384 = vrot.slane %v383, 4
      %v386 = vshll.u32 %v259, 16
      %v388 = vrot.slane %v386, 5
      %v389 = vsel %vm303, %v384, %v388
      %v390 = vshrl.u32 %v259, 16
      %v392 = vrot.slane %v390, 4
      %v393 = vor.u32 %v392, %v388
      %v394 = vrot.slane %v393, 4
      %v396 = vshll.u32 %v288, 16
      %v398 = vrot.slane %v396, 5
      %v399 = vsel %vm303, %v394, %v398
      %v401 = vshrl.u32 %v260, 16
      %v403 = vrot.slane %v401, 4
      %v404 = vshll.u32 %v260, 16
      %v406 = vrot.slane %v404, 5
      %v407 = vor.u32 %v403, %v406
      %v408 = vrot.slane %v407, 4
      %v410 = vshll.u32 %v261, 16
      %v412 = vrot.slane %v410, 5
      %v413 = vsel %vm303, %v408, %v412
      %v414 = vshrl.u32 %v261, 16
      %v416 = vrot.slane %v414, 4
      %v417 = vor.u32 %v416, %v412
      %v418 = vrot.slane %v417, 4
      %v420 = vshll.u32 %v289, 16
      %v422 = vrot.slane %v420, 5
      %v423 = vsel %vm303, %v418, %v422
      %v425 = vshrl.u32 %v262, 16
      %v427 = vrot.slane %v425, 4
      %v428 = vshll.u32 %v262, 16
      %v430 = vrot.slane %v428, 5
      %v431 = vor.u32 %v427, %v430
      %v432 = vrot.slane %v431, 4
      %v434 = vshll.u32 %v263, 16
      %v436 = vrot.slane %v434, 5
      %v437 = vsel %vm303, %v432, %v436
      %v438 = vshrl.u32 %v263, 16
      %v440 = vrot.slane %v438, 4
      %v441 = vor.u32 %v440, %v436
      %v442 = vrot.slane %v441, 4
      %v444 = vshll.u32 %v290, 16
      %v446 = vrot.slane %v444, 5
      %v447 = vsel %vm303, %v442, %v446
      %v449 = vshrl.u32 %v264, 16
      %v451 = vrot.slane %v449, 4
      %v452 = vshll.u32 %v264, 16
      %v454 = vrot.slane %v452, 5
      %v455 = vor.u32 %v451, %v454
      %v456 = vrot.slane %v455, 4
      %v458 = vshll.u32 %v265, 16
      %v460 = vrot.slane %v458, 5
      %v461 = vsel %vm303, %v456, %v460
      %v462 = vshrl.u32 %v265, 16
      %v464 = vrot.slane %v462, 4
      %v465 = vor.u32 %v464, %v460
      %v466 = vrot.slane %v465, 4
      %v468 = vshll.u32 %v291, 16
      %v470 = vrot.slane %v468, 5
      %v471 = vsel %vm303, %v466, %v470
      %v473 = vshrl.u32 %v266, 16
      %v475 = vrot.slane %v473, 4
      %v476 = vshll.u32 %v266, 16
      %v478 = vrot.slane %v476, 5
      %v479 = vor.u32 %v475, %v478
      %v480 = vrot.slane %v479, 4
      %v482 = vshll.u32 %v267, 16
      %v484 = vrot.slane %v482, 5
      %v485 = vsel %vm303, %v480, %v484
      %v486 = vshrl.u32 %v267, 16
      %v488 = vrot.slane %v486, 4
      %v489 = vor.u32 %v488, %v484
      %v490 = vrot.slane %v489, 4
      %v492 = vshll.u32 %v292, 16
      %v494 = vrot.slane %v492, 5
      %v495 = vsel %vm303, %v490, %v494
      %v497 = vshrl.u32 %v268, 16
      %v499 = vrot.slane %v497, 4
      %v500 = vshll.u32 %v268, 16
      %v502 = vrot.slane %v500, 5
      %v503 = vor.u32 %v499, %v502
      %v504 = vrot.slane %v503, 4
      %v506 = vshll.u32 %v269, 16
      %v508 = vrot.slane %v506, 5
      %v509 = vsel %vm303, %v504, %v508
      %v510 = vshrl.u32 %v269, 16
      %v512 = vrot.slane %v510, 4
      %v513 = vor.u32 %v512, %v508
      %v514 = vrot.slane %v513, 4
      %v516 = vshll.u32 %v293, 16
      %v518 = vrot.slane %v516, 5
      %v519 = vsel %vm303, %v514, %v518
      %v521 = vshrl.u32 %v270, 16
      %v523 = vrot.slane %v521, 4
      %v524 = vshll.u32 %v270, 16
      %v526 = vrot.slane %v524, 5
      %v527 = vor.u32 %v523, %v526
      %v528 = vrot.slane %v527, 4
      %v530 = vshll.u32 %v271, 16
      %v532 = vrot.slane %v530, 5
      %v533 = vsel %vm303, %v528, %v532
      %v534 = vshrl.u32 %v271, 16
      %v536 = vrot.slane %v534, 4
      %v537 = vor.u32 %v536, %v532
      %v538 = vrot.slane %v537, 4
      %v540 = vshll.u32 %v294, 16
      %v542 = vrot.slane %v540, 5
      %v543 = vsel %vm303, %v538, %v542
      %v545 = vshrl.u32 %v272, 16
      %v547 = vrot.slane %v545, 4
      %v548 = vshll.u32 %v272, 16
      %v550 = vrot.slane %v548, 5
      %v551 = vor.u32 %v547, %v550
      %v552 = vrot.slane %v551, 4
      %v554 = vshll.u32 %v273, 16
      %v556 = vrot.slane %v554, 5
      %v557 = vsel %vm303, %v552, %v556
      %v558 = vshrl.u32 %v273, 16
      %v560 = vrot.slane %v558, 4
      %v561 = vor.u32 %v560, %v556
      %v562 = vrot.slane %v561, 4
      %v564 = vshll.u32 %v295, 16
      %v566 = vrot.slane %v564, 5
      %v567 = vsel %vm303, %v562, %v566
      %v569 = vshrl.u32 %v274, 16
      %v571 = vrot.slane %v569, 4
      %v572 = vshll.u32 %v274, 16
      %v574 = vrot.slane %v572, 5
      %v575 = vor.u32 %v571, %v574
      %v576 = vrot.slane %v575, 4
      %v578 = vshll.u32 %v275, 16
      %v580 = vrot.slane %v578, 5
      %v581 = vsel %vm303, %v576, %v580
      %v582 = vshrl.u32 %v275, 16
      %v584 = vrot.slane %v582, 4
      %v585 = vor.u32 %v584, %v580
      %v586 = vrot.slane %v585, 4
      %v588 = vshll.u32 %v296, 16
      %v590 = vrot.slane %v588, 5
      %v591 = vsel %vm303, %v586, %v590
      %v593 = vshrl.u32 %v276, 16
      %v595 = vrot.slane %v593, 4
      %v596 = vshll.u32 %v276, 16
      %v598 = vrot.slane %v596, 5
      %v599 = vor.u32 %v595, %v598
      %v600 = vrot.slane %v599, 4
      %v602 = vshll.u32 %v277, 16
      %v604 = vrot.slane %v602, 5
      %v605 = vsel %vm303, %v600, %v604
      %v606 = vshrl.u32 %v277, 16
      %v608 = vrot.slane %v606, 4
      %v609 = vor.u32 %v608, %v604
      %v610 = vrot.slane %v609, 4
      %v612 = vshll.u32 %v297, 16
      %v614 = vrot.slane %v612, 5
      %v615 = vsel %vm303, %v610, %v614
      %v617 = vshrl.u32 %v278, 16
      %v619 = vrot.slane %v617, 4
      %v620 = vshll.u32 %v278, 16
      %v622 = vrot.slane %v620, 5
      %v623 = vor.u32 %v619, %v622
      %v624 = vrot.slane %v623, 4
      %v626 = vshll.u32 %v279, 16
      %v628 = vrot.slane %v626, 5
      %v629 = vsel %vm303, %v624, %v628
      %v630 = vshrl.u32 %v279, 16
      %v632 = vrot.slane %v630, 4
      %v633 = vor.u32 %v632, %v628
      %v634 = vrot.slane %v633, 4
      %v636 = vshll.u32 %v298, 16
      %v638 = vrot.slane %v636, 5
      %v639 = vsel %vm303, %v634, %v638
      %v641 = vshrl.u32 %v280, 16
      %v643 = vrot.slane %v641, 4
      %v644 = vshll.u32 %v280, 16
      %v646 = vrot.slane %v644, 5
      %v647 = vor.u32 %v643, %v646
      %v648 = vrot.slane %v647, 4
      %v650 = vshll.u32 %v281, 16
      %v652 = vrot.slane %v650, 5
      %v653 = vsel %vm303, %v648, %v652
      %v654 = vshrl.u32 %v281, 16
      %v656 = vrot.slane %v654, 4
      %v657 = vor.u32 %v656, %v652
      %v658 = vrot.slane %v657, 4
      %v660 = vshll.u32 %v299, 16
      %v662 = vrot.slane %v660, 5
      %v663 = vsel %vm303, %v658, %v662
      %v665 = vshrl.u32 %v282, 16
      %v667 = vrot.slane %v665, 4
      %v668 = vshll.u32 %v282, 16
      %v670 = vrot.slane %v668, 5
      %v671 = vor.u32 %v667, %v670
      %v672 = vrot.slane %v671, 4
      %v674 = vshll.u32 %v283, 16
      %v676 = vrot.slane %v674, 5
      %v677 = vsel %vm303, %v672, %v676
      %v678 = vshrl.u32 %v283, 16
      %v680 = vrot.slane %v678, 4
      %v681 = vor.u32 %v680, %v676
      %v682 = vrot.slane %v681, 4
      %v684 = vshll.u32 %v300, 16
      %v686 = vrot.slane %v684, 5
      %v687 = vsel %vm303, %v682, %v686
      %s688 = scalar_lea.vmem %s1, 4
      %v689 = vld [vmem:[%s688] sm:$0xf]
      %v690 = vunpack.c.l.b16 %v317
      %v691 = vunpack.c.l.b16 %v327
      %v692 = vunpack.c.l.b16 %v341
      %v693 = vunpack.c.l.b16 %v351
      %v694 = vunpack.c.l.b16 %v365
      %v695 = vunpack.c.l.b16 %v375
      %v696 = vunpack.c.l.b16 %v389
      %v697 = vunpack.c.l.b16 %v399
      %v698 = vunpack.c.l.b16 %v413
      %v699 = vunpack.c.l.b16 %v423
      %v700 = vunpack.c.l.b16 %v437
      %v701 = vunpack.c.l.b16 %v447
      %v702 = vunpack.c.l.b16 %v461
      %v703 = vunpack.c.l.b16 %v471
      %v704 = vunpack.c.l.b16 %v485
      %v705 = vunpack.c.l.b16 %v495
      %v706 = vunpack.c.l.b16 %v509
      %v707 = vunpack.c.l.b16 %v519
      %v708 = vunpack.c.l.b16 %v533
      %v709 = vunpack.c.l.b16 %v543
      %v710 = vunpack.c.l.b16 %v557
      %v711 = vunpack.c.l.b16 %v567
      %v712 = vunpack.c.l.b16 %v581
      %v713 = vunpack.c.l.b16 %v591
      %v714 = vunpack.c.l.b16 %v605
      %v715 = vunpack.c.l.b16 %v615
      %v716 = vunpack.c.l.b16 %v629
      %v717 = vunpack.c.l.b16 %v639
      %v718 = vunpack.c.l.b16 %v653
      %v719 = vunpack.c.l.b16 %v663
      %v720 = vunpack.c.l.b16 %v677
      %v721 = vunpack.c.l.b16 %v687
      %v722 = vpack.c.b16 %v691, %v690
      %v723 = vpack.c.b16 %v693, %v692
      %v724 = vpack.c.b16 %v695, %v694
      %v725 = vpack.c.b16 %v697, %v696
      %v726 = vpack.c.b16 %v699, %v698
      %v727 = vpack.c.b16 %v701, %v700
      %v728 = vpack.c.b16 %v703, %v702
      %v729 = vpack.c.b16 %v705, %v704
      %v730 = vpack.c.b16 %v707, %v706
      %v731 = vpack.c.b16 %v709, %v708
      %v732 = vpack.c.b16 %v711, %v710
      %v733 = vpack.c.b16 %v713, %v712
      %v734 = vpack.c.b16 %v715, %v714
      %v735 = vpack.c.b16 %v717, %v716
      %v736 = vpack.c.b16 %v719, %v718
      %v737 = vpack.c.b16 %v721, %v720
      %vm738 = vcmask 64512
      %v740 = vsel %vm738, %v722, 0
      %v743 = vsel %vm738, %v723, 0
      %v746 = vsel %vm738, %v724, 0
      %v749 = vsel %vm738, %v725, 0
      %v752 = vsel %vm738, %v726, 0
      %v755 = vsel %vm738, %v727, 0
      %v758 = vsel %vm738, %v728, 0
      %v761 = vsel %vm738, %v729, 0
      %v764 = vsel %vm738, %v730, 0
      %v767 = vsel %vm738, %v731, 0
      %v770 = vsel %vm738, %v732, 0
      %v773 = vsel %vm738, %v733, 0
      %v776 = vsel %vm738, %v734, 0
      %v779 = vsel %vm738, %v735, 0
      %v782 = vsel %vm738, %v736, 0
      %v785 = vsel %vm738, %v737, 0
      %vm787 = vcmask 1043456
      %v789 = vsel %vm787, %v689, 0
      %791 = vmatpush.bf16.msra.mxu0 0
      %792 = vmatpush.bf16.msra.mxu0 0
      %793 = vmatpush.bf16.msra.mxu0 0
      %794 = vmatpush.bf16.msra.mxu0 0
      %795 = vmatpush.bf16.msra.mxu0 0
      %796 = vmatpush.bf16.msra.mxu0 0
      %797 = vmatpush.bf16.msra.mxu0 0
      %798 = vmatpush.bf16.msra.mxu0 %v789
      %799 = vmatmul.bf16.gmra.mxu0 %v740
      %v800 = vpop.f32.mrf.mxu0
      %v801 = vadd.f32 0.0, %v800
      %v802 = vpop.f32.mrf.mxu0
      %v803 = vadd.f32 0.0, %v802
      %804 = vmatmul.bf16.gmra.mxu0 %v743
      %v805 = vpop.f32.mrf.mxu0
      %v806 = vadd.f32 0.0, %v805
      %v807 = vpop.f32.mrf.mxu0
      %v808 = vadd.f32 0.0, %v807
      %809 = vmatmul.bf16.gmra.mxu0 %v746
      %v810 = vpop.f32.mrf.mxu0
      %v811 = vadd.f32 0.0, %v810
      %v812 = vpop.f32.mrf.mxu0
      %v813 = vadd.f32 0.0, %v812
      %814 = vmatmul.bf16.gmra.mxu0 %v749
      %v815 = vpop.f32.mrf.mxu0
      %v816 = vadd.f32 0.0, %v815
      %v817 = vpop.f32.mrf.mxu0
      %v818 = vadd.f32 0.0, %v817
      %819 = vmatmul.bf16.gmra.mxu0 %v752
      %v820 = vpop.f32.mrf.mxu0
      %v821 = vadd.f32 0.0, %v820
      %v822 = vpop.f32.mrf.mxu0
      %v823 = vadd.f32 0.0, %v822
      %824 = vmatmul.bf16.gmra.mxu0 %v755
      %v825 = vpop.f32.mrf.mxu0
      %v826 = vadd.f32 0.0, %v825
      %v827 = vpop.f32.mrf.mxu0
      %v828 = vadd.f32 0.0, %v827
      %829 = vmatmul.bf16.gmra.mxu0 %v758
      %v830 = vpop.f32.mrf.mxu0
      %v831 = vadd.f32 0.0, %v830
      %v832 = vpop.f32.mrf.mxu0
      %v833 = vadd.f32 0.0, %v832
      %834 = vmatmul.bf16.gmra.mxu0 %v761
      %v835 = vpop.f32.mrf.mxu0
      %v836 = vadd.f32 0.0, %v835
      %v837 = vpop.f32.mrf.mxu0
      %v838 = vadd.f32 0.0, %v837
      %839 = vmatmul.bf16.gmra.mxu0 %v764
      %v840 = vpop.f32.mrf.mxu0
      %v841 = vadd.f32 0.0, %v840
      %v842 = vpop.f32.mrf.mxu0
      %v843 = vadd.f32 0.0, %v842
      %844 = vmatmul.bf16.gmra.mxu0 %v767
      %v845 = vpop.f32.mrf.mxu0
      %v846 = vadd.f32 0.0, %v845
      %v847 = vpop.f32.mrf.mxu0
      %v848 = vadd.f32 0.0, %v847
      %849 = vmatmul.bf16.gmra.mxu0 %v770
      %v850 = vpop.f32.mrf.mxu0
      %v851 = vadd.f32 0.0, %v850
      %v852 = vpop.f32.mrf.mxu0
      %v853 = vadd.f32 0.0, %v852
      %854 = vmatmul.bf16.gmra.mxu0 %v773
      %v855 = vpop.f32.mrf.mxu0
      %v856 = vadd.f32 0.0, %v855
      %v857 = vpop.f32.mrf.mxu0
      %v858 = vadd.f32 0.0, %v857
      %859 = vmatmul.bf16.gmra.mxu0 %v776
      %v860 = vpop.f32.mrf.mxu0
      %v861 = vadd.f32 0.0, %v860
      %v862 = vpop.f32.mrf.mxu0
      %v863 = vadd.f32 0.0, %v862
      %864 = vmatmul.bf16.gmra.mxu0 %v779
      %v865 = vpop.f32.mrf.mxu0
      %v866 = vadd.f32 0.0, %v865
      %v867 = vpop.f32.mrf.mxu0
      %v868 = vadd.f32 0.0, %v867
      %869 = vmatmul.bf16.gmra.mxu0 %v782
      %v870 = vpop.f32.mrf.mxu0
      %v871 = vadd.f32 0.0, %v870
      %v872 = vpop.f32.mrf.mxu0
      %v873 = vadd.f32 0.0, %v872
      %874 = vmatmul.bf16.gmra.mxu0 %v785
      %v875 = vpop.f32.mrf.mxu0
      %v876 = vadd.f32 0.0, %v875
      %v877 = vpop.f32.mrf.mxu0
      %v878 = vadd.f32 0.0, %v877
      %879 = vdwg.mxu0
      %v912 = vunpack.c.l.b16 %v252
      %v913 = vunpack.c.l.b16 %v253
      %v914 = vunpack.c.l.b16 %v254
      %v915 = vunpack.c.l.b16 %v255
      %v916 = vunpack.c.l.b16 %v256
      %v917 = vunpack.c.l.b16 %v257
      %v918 = vunpack.c.l.b16 %v258
      %v919 = vunpack.c.l.b16 %v259
      %v920 = vunpack.c.l.b16 %v260
      %v921 = vunpack.c.l.b16 %v261
      %v922 = vunpack.c.l.b16 %v262
      %v923 = vunpack.c.l.b16 %v263
      %v924 = vunpack.c.l.b16 %v264
      %v925 = vunpack.c.l.b16 %v265
      %v926 = vunpack.c.l.b16 %v266
      %v927 = vunpack.c.l.b16 %v267
      %v928 = vunpack.c.l.b16 %v268
      %v929 = vunpack.c.l.b16 %v269
      %v930 = vunpack.c.l.b16 %v270
      %v931 = vunpack.c.l.b16 %v271
      %v932 = vunpack.c.l.b16 %v272
      %v933 = vunpack.c.l.b16 %v273
      %v934 = vunpack.c.l.b16 %v274
      %v935 = vunpack.c.l.b16 %v275
      %v936 = vunpack.c.l.b16 %v276
      %v937 = vunpack.c.l.b16 %v277
      %v938 = vunpack.c.l.b16 %v278
      %v939 = vunpack.c.l.b16 %v279
      %v940 = vunpack.c.l.b16 %v280
      %v941 = vunpack.c.l.b16 %v281
      %v942 = vunpack.c.l.b16 %v282
      %v943 = vunpack.c.l.b16 %v283
      %v944 = vpack.c.b16 %v913, %v912
      %v945 = vpack.c.b16 %v915, %v914
      %v946 = vpack.c.b16 %v917, %v916
      %v947 = vpack.c.b16 %v919, %v918
      %v948 = vpack.c.b16 %v921, %v920
      %v949 = vpack.c.b16 %v923, %v922
      %v950 = vpack.c.b16 %v925, %v924
      %v951 = vpack.c.b16 %v927, %v926
      %v952 = vpack.c.b16 %v929, %v928
      %v953 = vpack.c.b16 %v931, %v930
      %v954 = vpack.c.b16 %v933, %v932
      %v955 = vpack.c.b16 %v935, %v934
      %v956 = vpack.c.b16 %v937, %v936
      %v957 = vpack.c.b16 %v939, %v938
      %v958 = vpack.c.b16 %v941, %v940
      %v959 = vpack.c.b16 %v943, %v942
      %v961 = vsel %vm738, %v944, 0
      %v964 = vsel %vm738, %v945, 0
      %v967 = vsel %vm738, %v946, 0
      %v970 = vsel %vm738, %v947, 0
      %v973 = vsel %vm738, %v948, 0
      %v976 = vsel %vm738, %v949, 0
      %v979 = vsel %vm738, %v950, 0
      %v982 = vsel %vm738, %v951, 0
      %v985 = vsel %vm738, %v952, 0
      %v988 = vsel %vm738, %v953, 0
      %v991 = vsel %vm738, %v954, 0
      %v994 = vsel %vm738, %v955, 0
      %v997 = vsel %vm738, %v956, 0
      %v1000 = vsel %vm738, %v957, 0
      %v1003 = vsel %vm738, %v958, 0
      %v1006 = vsel %vm738, %v959, 0
      %v1009 = vsel %vm787, %v284, 0
      %1011 = vmatpush.bf16.msra.mxu0 0
      %1012 = vmatpush.bf16.msra.mxu0 0
      %1013 = vmatpush.bf16.msra.mxu0 0
      %1014 = vmatpush.bf16.msra.mxu0 0
      %1015 = vmatpush.bf16.msra.mxu0 0
      %1016 = vmatpush.bf16.msra.mxu0 0
      %1017 = vmatpush.bf16.msra.mxu0 0
      %1018 = vmatpush.bf16.msra.mxu0 %v1009
      %1019 = vmatmul.bf16.gmra.mxu0 %v961
      %v1020 = vpop.f32.mrf.mxu0
      %v1021 = vadd.f32 %v801, %v1020
      %v1022 = vpop.f32.mrf.mxu0
      %v1023 = vadd.f32 %v803, %v1022
      %1024 = vmatmul.bf16.gmra.mxu0 %v964
      %v1025 = vpop.f32.mrf.mxu0
      %v1026 = vadd.f32 %v806, %v1025
      %v1027 = vpop.f32.mrf.mxu0
      %v1028 = vadd.f32 %v808, %v1027
      %1029 = vmatmul.bf16.gmra.mxu0 %v967
      %v1030 = vpop.f32.mrf.mxu0
      %v1031 = vadd.f32 %v811, %v1030
      %v1032 = vpop.f32.mrf.mxu0
      %v1033 = vadd.f32 %v813, %v1032
      %1034 = vmatmul.bf16.gmra.mxu0 %v970
      %v1035 = vpop.f32.mrf.mxu0
      %v1036 = vadd.f32 %v816, %v1035
      %v1037 = vpop.f32.mrf.mxu0
      %v1038 = vadd.f32 %v818, %v1037
      %1039 = vmatmul.bf16.gmra.mxu0 %v973
      %v1040 = vpop.f32.mrf.mxu0
      %v1041 = vadd.f32 %v821, %v1040
      %v1042 = vpop.f32.mrf.mxu0
      %v1043 = vadd.f32 %v823, %v1042
      %1044 = vmatmul.bf16.gmra.mxu0 %v976
      %v1045 = vpop.f32.mrf.mxu0
      %v1046 = vadd.f32 %v826, %v1045
      %v1047 = vpop.f32.mrf.mxu0
      %v1048 = vadd.f32 %v828, %v1047
      %1049 = vmatmul.bf16.gmra.mxu0 %v979
      %v1050 = vpop.f32.mrf.mxu0
      %v1051 = vadd.f32 %v831, %v1050
      %v1052 = vpop.f32.mrf.mxu0
      %v1053 = vadd.f32 %v833, %v1052
      %1054 = vmatmul.bf16.gmra.mxu0 %v982
      %v1055 = vpop.f32.mrf.mxu0
      %v1056 = vadd.f32 %v836, %v1055
      %v1057 = vpop.f32.mrf.mxu0
      %v1058 = vadd.f32 %v838, %v1057
      %1059 = vmatmul.bf16.gmra.mxu0 %v985
      %v1060 = vpop.f32.mrf.mxu0
      %v1061 = vadd.f32 %v841, %v1060
      %v1062 = vpop.f32.mrf.mxu0
      %v1063 = vadd.f32 %v843, %v1062
      %1064 = vmatmul.bf16.gmra.mxu0 %v988
      %v1065 = vpop.f32.mrf.mxu0
      %v1066 = vadd.f32 %v846, %v1065
      %v1067 = vpop.f32.mrf.mxu0
      %v1068 = vadd.f32 %v848, %v1067
      %1069 = vmatmul.bf16.gmra.mxu0 %v991
      %v1070 = vpop.f32.mrf.mxu0
      %v1071 = vadd.f32 %v851, %v1070
      %v1072 = vpop.f32.mrf.mxu0
      %v1073 = vadd.f32 %v853, %v1072
      %1074 = vmatmul.bf16.gmra.mxu0 %v994
      %v1075 = vpop.f32.mrf.mxu0
      %v1076 = vadd.f32 %v856, %v1075
      %v1077 = vpop.f32.mrf.mxu0
      %v1078 = vadd.f32 %v858, %v1077
      %1079 = vmatmul.bf16.gmra.mxu0 %v997
      %v1080 = vpop.f32.mrf.mxu0
      %v1081 = vadd.f32 %v861, %v1080
      %v1082 = vpop.f32.mrf.mxu0
      %v1083 = vadd.f32 %v863, %v1082
      %1084 = vmatmul.bf16.gmra.mxu0 %v1000
      %v1085 = vpop.f32.mrf.mxu0
      %v1086 = vadd.f32 %v866, %v1085
      %v1087 = vpop.f32.mrf.mxu0
      %v1088 = vadd.f32 %v868, %v1087
      %1089 = vmatmul.bf16.gmra.mxu0 %v1003
      %v1090 = vpop.f32.mrf.mxu0
      %v1091 = vadd.f32 %v871, %v1090
      %v1092 = vpop.f32.mrf.mxu0
      %v1093 = vadd.f32 %v873, %v1092
      %1094 = vmatmul.bf16.gmra.mxu0 %v1006
      %v1095 = vpop.f32.mrf.mxu0
      %v1096 = vadd.f32 %v876, %v1095
      %v1097 = vpop.f32.mrf.mxu0
      %v1098 = vadd.f32 %v878, %v1097
      %1099 = vdwg.mxu0
      %v1100 = vld [vmem:[%s251] sm:$0xe]
      %v1101 = vld [vmem:[%s251 + $0xc] sm:$0xe]
      %v1102 = vld [vmem:[%s251 + $0x18] sm:$0xe]
      %v1103 = vld [vmem:[%s251 + $0x24] sm:$0xe]
      %v1104 = vld [vmem:[%s251 + $0x30] sm:$0xe]
      %v1105 = vld [vmem:[%s251 + $0x3c] sm:$0xe]
      %v1106 = vld [vmem:[%s251 + $0x48] sm:$0xe]
      %v1107 = vld [vmem:[%s251 + $0x54] sm:$0xe]
      %v1108 = vld [vmem:[%s251 + $0x60] sm:$0xe]
      %v1109 = vld [vmem:[%s251 + $0x6c] sm:$0xe]
      %v1110 = vld [vmem:[%s251 + $0x78] sm:$0xe]
      %v1111 = vld [vmem:[%s251 + $0x84] sm:$0xe]
      %v1112 = vld [vmem:[%s251 + $0x90] sm:$0xe]
      %v1113 = vld [vmem:[%s251 + $0x9c] sm:$0xe]
      %v1114 = vld [vmem:[%s251 + $0xa8] sm:$0xe]
      %v1115 = vld [vmem:[%s251 + $0xb4] sm:$0xe]
      %vm1148 = vcmask 1042432
      %vm1149 = vcmask 1046532
      %vm1150 = vmor %vm1148, %vm1149
      %v1151 = vrot.slane %v1100, 5
      %v1152 = vrot.slane %v1151, 4
      %v1153 = vrot.slane %v253, 5
      %v1154 = vsel %vm1150, %v1152, %v1153
      %v1155 = vrot.slane %v1153, 4
      %v1156 = vrot.slane %v285, 5
      %v1157 = vsel %vm1150, %v1155, %v1156
      %v1158 = vrot.slane %v1101, 5
      %v1159 = vrot.slane %v1158, 4
      %v1160 = vrot.slane %v255, 5
      %v1161 = vsel %vm1150, %v1159, %v1160
      %v1162 = vrot.slane %v1160, 4
      %v1163 = vrot.slane %v286, 5
      %v1164 = vsel %vm1150, %v1162, %v1163
      %v1165 = vrot.slane %v1102, 5
      %v1166 = vrot.slane %v1165, 4
      %v1167 = vrot.slane %v257, 5
      %v1168 = vsel %vm1150, %v1166, %v1167
      %v1169 = vrot.slane %v1167, 4
      %v1170 = vrot.slane %v287, 5
      %v1171 = vsel %vm1150, %v1169, %v1170
      %v1172 = vrot.slane %v1103, 5
      %v1173 = vrot.slane %v1172, 4
      %v1174 = vrot.slane %v259, 5
      %v1175 = vsel %vm1150, %v1173, %v1174
      %v1176 = vrot.slane %v1174, 4
      %v1177 = vrot.slane %v288, 5
      %v1178 = vsel %vm1150, %v1176, %v1177
      %v1179 = vrot.slane %v1104, 5
      %v1180 = vrot.slane %v1179, 4
      %v1181 = vrot.slane %v261, 5
      %v1182 = vsel %vm1150, %v1180, %v1181
      %v1183 = vrot.slane %v1181, 4
      %v1184 = vrot.slane %v289, 5
      %v1185 = vsel %vm1150, %v1183, %v1184
      %v1186 = vrot.slane %v1105, 5
      %v1187 = vrot.slane %v1186, 4
      %v1188 = vrot.slane %v263, 5
      %v1189 = vsel %vm1150, %v1187, %v1188
      %v1190 = vrot.slane %v1188, 4
      %v1191 = vrot.slane %v290, 5
      %v1192 = vsel %vm1150, %v1190, %v1191
      %v1193 = vrot.slane %v1106, 5
      %v1194 = vrot.slane %v1193, 4
      %v1195 = vrot.slane %v265, 5
      %v1196 = vsel %vm1150, %v1194, %v1195
      %v1197 = vrot.slane %v1195, 4
      %v1198 = vrot.slane %v291, 5
      %v1199 = vsel %vm1150, %v1197, %v1198
      %v1200 = vrot.slane %v1107, 5
      %v1201 = vrot.slane %v1200, 4
      %v1202 = vrot.slane %v267, 5
      %v1203 = vsel %vm1150, %v1201, %v1202
      %v1204 = vrot.slane %v1202, 4
      %v1205 = vrot.slane %v292, 5
      %v1206 = vsel %vm1150, %v1204, %v1205
      %v1207 = vrot.slane %v1108, 5
      %v1208 = vrot.slane %v1207, 4
      %v1209 = vrot.slane %v269, 5
      %v1210 = vsel %vm1150, %v1208, %v1209
      %v1211 = vrot.slane %v1209, 4
      %v1212 = vrot.slane %v293, 5
      %v1213 = vsel %vm1150, %v1211, %v1212
      %v1214 = vrot.slane %v1109, 5
      %v1215 = vrot.slane %v1214, 4
      %v1216 = vrot.slane %v271, 5
      %v1217 = vsel %vm1150, %v1215, %v1216
      %v1218 = vrot.slane %v1216, 4
      %v1219 = vrot.slane %v294, 5
      %v1220 = vsel %vm1150, %v1218, %v1219
      %v1221 = vrot.slane %v1110, 5
      %v1222 = vrot.slane %v1221, 4
      %v1223 = vrot.slane %v273, 5
      %v1224 = vsel %vm1150, %v1222, %v1223
      %v1225 = vrot.slane %v1223, 4
      %v1226 = vrot.slane %v295, 5
      %v1227 = vsel %vm1150, %v1225, %v1226
      %v1228 = vrot.slane %v1111, 5
      %v1229 = vrot.slane %v1228, 4
      %v1230 = vrot.slane %v275, 5
      %v1231 = vsel %vm1150, %v1229, %v1230
      %v1232 = vrot.slane %v1230, 4
      %v1233 = vrot.slane %v296, 5
      %v1234 = vsel %vm1150, %v1232, %v1233
      %v1235 = vrot.slane %v1112, 5
      %v1236 = vrot.slane %v1235, 4
      %v1237 = vrot.slane %v277, 5
      %v1238 = vsel %vm1150, %v1236, %v1237
      %v1239 = vrot.slane %v1237, 4
      %v1240 = vrot.slane %v297, 5
      %v1241 = vsel %vm1150, %v1239, %v1240
      %v1242 = vrot.slane %v1113, 5
      %v1243 = vrot.slane %v1242, 4
      %v1244 = vrot.slane %v279, 5
      %v1245 = vsel %vm1150, %v1243, %v1244
      %v1246 = vrot.slane %v1244, 4
      %v1247 = vrot.slane %v298, 5
      %v1248 = vsel %vm1150, %v1246, %v1247
      %v1249 = vrot.slane %v1114, 5
      %v1250 = vrot.slane %v1249, 4
      %v1251 = vrot.slane %v281, 5
      %v1252 = vsel %vm1150, %v1250, %v1251
      %v1253 = vrot.slane %v1251, 4
      %v1254 = vrot.slane %v299, 5
      %v1255 = vsel %vm1150, %v1253, %v1254
      %v1256 = vrot.slane %v1115, 5
      %v1257 = vrot.slane %v1256, 4
      %v1258 = vrot.slane %v283, 5
      %v1259 = vsel %vm1150, %v1257, %v1258
      %v1260 = vrot.slane %v1258, 4
      %v1261 = vrot.slane %v300, 5
      %v1262 = vsel %vm1150, %v1260, %v1261
      %s1263 = scalar_lea.vmem %s1, 8
      %v1264 = vld [vmem:[%s1263] sm:$0xf]
      %v1265 = vunpack.c.l.b16 %v1154
      %v1266 = vunpack.c.l.b16 %v1157
      %v1267 = vunpack.c.l.b16 %v1161
      %v1268 = vunpack.c.l.b16 %v1164
      %v1269 = vunpack.c.l.b16 %v1168
      %v1270 = vunpack.c.l.b16 %v1171
      %v1271 = vunpack.c.l.b16 %v1175
      %v1272 = vunpack.c.l.b16 %v1178
      %v1273 = vunpack.c.l.b16 %v1182
      %v1274 = vunpack.c.l.b16 %v1185
      %v1275 = vunpack.c.l.b16 %v1189
      %v1276 = vunpack.c.l.b16 %v1192
      %v1277 = vunpack.c.l.b16 %v1196
      %v1278 = vunpack.c.l.b16 %v1199
      %v1279 = vunpack.c.l.b16 %v1203
      %v1280 = vunpack.c.l.b16 %v1206
      %v1281 = vunpack.c.l.b16 %v1210
      %v1282 = vunpack.c.l.b16 %v1213
      %v1283 = vunpack.c.l.b16 %v1217
      %v1284 = vunpack.c.l.b16 %v1220
      %v1285 = vunpack.c.l.b16 %v1224
      %v1286 = vunpack.c.l.b16 %v1227
      %v1287 = vunpack.c.l.b16 %v1231
      %v1288 = vunpack.c.l.b16 %v1234
      %v1289 = vunpack.c.l.b16 %v1238
      %v1290 = vunpack.c.l.b16 %v1241
      %v1291 = vunpack.c.l.b16 %v1245
      %v1292 = vunpack.c.l.b16 %v1248
      %v1293 = vunpack.c.l.b16 %v1252
      %v1294 = vunpack.c.l.b16 %v1255
      %v1295 = vunpack.c.l.b16 %v1259
      %v1296 = vunpack.c.l.b16 %v1262
      %v1297 = vpack.c.b16 %v1266, %v1265
      %v1298 = vpack.c.b16 %v1268, %v1267
      %v1299 = vpack.c.b16 %v1270, %v1269
      %v1300 = vpack.c.b16 %v1272, %v1271
      %v1301 = vpack.c.b16 %v1274, %v1273
      %v1302 = vpack.c.b16 %v1276, %v1275
      %v1303 = vpack.c.b16 %v1278, %v1277
      %v1304 = vpack.c.b16 %v1280, %v1279
      %v1305 = vpack.c.b16 %v1282, %v1281
      %v1306 = vpack.c.b16 %v1284, %v1283
      %v1307 = vpack.c.b16 %v1286, %v1285
      %v1308 = vpack.c.b16 %v1288, %v1287
      %v1309 = vpack.c.b16 %v1290, %v1289
      %v1310 = vpack.c.b16 %v1292, %v1291
      %v1311 = vpack.c.b16 %v1294, %v1293
      %v1312 = vpack.c.b16 %v1296, %v1295
      %v1314 = vsel %vm738, %v1297, 0
      %v1317 = vsel %vm738, %v1298, 0
      %v1320 = vsel %vm738, %v1299, 0
      %v1323 = vsel %vm738, %v1300, 0
      %v1326 = vsel %vm738, %v1301, 0
      %v1329 = vsel %vm738, %v1302, 0
      %v1332 = vsel %vm738, %v1303, 0
      %v1335 = vsel %vm738, %v1304, 0
      %v1338 = vsel %vm738, %v1305, 0
      %v1341 = vsel %vm738, %v1306, 0
      %v1344 = vsel %vm738, %v1307, 0
      %v1347 = vsel %vm738, %v1308, 0
      %v1350 = vsel %vm738, %v1309, 0
      %v1353 = vsel %vm738, %v1310, 0
      %v1356 = vsel %vm738, %v1311, 0
      %v1359 = vsel %vm738, %v1312, 0
      %v1362 = vsel %vm787, %v1264, 0
      %1364 = vmatpush.bf16.msra.mxu0 0
      %1365 = vmatpush.bf16.msra.mxu0 0
      %1366 = vmatpush.bf16.msra.mxu0 0
      %1367 = vmatpush.bf16.msra.mxu0 0
      %1368 = vmatpush.bf16.msra.mxu0 0
      %1369 = vmatpush.bf16.msra.mxu0 0
      %1370 = vmatpush.bf16.msra.mxu0 0
      %1371 = vmatpush.bf16.msra.mxu0 %v1362
      %1372 = vmatmul.bf16.gmra.mxu0 %v1314
      %v1373 = vpop.f32.mrf.mxu0
      %v1374 = vadd.f32 0.0, %v1373
      %v1375 = vpop.f32.mrf.mxu0
      %v1376 = vadd.f32 0.0, %v1375
      %1377 = vmatmul.bf16.gmra.mxu0 %v1317
      %v1378 = vpop.f32.mrf.mxu0
      %v1379 = vadd.f32 0.0, %v1378
      %v1380 = vpop.f32.mrf.mxu0
      %v1381 = vadd.f32 0.0, %v1380
      %1382 = vmatmul.bf16.gmra.mxu0 %v1320
      %v1383 = vpop.f32.mrf.mxu0
      %v1384 = vadd.f32 0.0, %v1383
      %v1385 = vpop.f32.mrf.mxu0
      %v1386 = vadd.f32 0.0, %v1385
      %1387 = vmatmul.bf16.gmra.mxu0 %v1323
      %v1388 = vpop.f32.mrf.mxu0
      %v1389 = vadd.f32 0.0, %v1388
      %v1390 = vpop.f32.mrf.mxu0
      %v1391 = vadd.f32 0.0, %v1390
      %1392 = vmatmul.bf16.gmra.mxu0 %v1326
      %v1393 = vpop.f32.mrf.mxu0
      %v1394 = vadd.f32 0.0, %v1393
      %v1395 = vpop.f32.mrf.mxu0
      %v1396 = vadd.f32 0.0, %v1395
      %1397 = vmatmul.bf16.gmra.mxu0 %v1329
      %v1398 = vpop.f32.mrf.mxu0
      %v1399 = vadd.f32 0.0, %v1398
      %v1400 = vpop.f32.mrf.mxu0
      %v1401 = vadd.f32 0.0, %v1400
      %1402 = vmatmul.bf16.gmra.mxu0 %v1332
      %v1403 = vpop.f32.mrf.mxu0
      %v1404 = vadd.f32 0.0, %v1403
      %v1405 = vpop.f32.mrf.mxu0
      %v1406 = vadd.f32 0.0, %v1405
      %1407 = vmatmul.bf16.gmra.mxu0 %v1335
      %v1408 = vpop.f32.mrf.mxu0
      %v1409 = vadd.f32 0.0, %v1408
      %v1410 = vpop.f32.mrf.mxu0
      %v1411 = vadd.f32 0.0, %v1410
      %1412 = vmatmul.bf16.gmra.mxu0 %v1338
      %v1413 = vpop.f32.mrf.mxu0
      %v1414 = vadd.f32 0.0, %v1413
      %v1415 = vpop.f32.mrf.mxu0
      %v1416 = vadd.f32 0.0, %v1415
      %1417 = vmatmul.bf16.gmra.mxu0 %v1341
      %v1418 = vpop.f32.mrf.mxu0
      %v1419 = vadd.f32 0.0, %v1418
      %v1420 = vpop.f32.mrf.mxu0
      %v1421 = vadd.f32 0.0, %v1420
      %1422 = vmatmul.bf16.gmra.mxu0 %v1344
      %v1423 = vpop.f32.mrf.mxu0
      %v1424 = vadd.f32 0.0, %v1423
      %v1425 = vpop.f32.mrf.mxu0
      %v1426 = vadd.f32 0.0, %v1425
      %1427 = vmatmul.bf16.gmra.mxu0 %v1347
      %v1428 = vpop.f32.mrf.mxu0
      %v1429 = vadd.f32 0.0, %v1428
      %v1430 = vpop.f32.mrf.mxu0
      %v1431 = vadd.f32 0.0, %v1430
      %1432 = vmatmul.bf16.gmra.mxu0 %v1350
      %v1433 = vpop.f32.mrf.mxu0
      %v1434 = vadd.f32 0.0, %v1433
      %v1435 = vpop.f32.mrf.mxu0
      %v1436 = vadd.f32 0.0, %v1435
      %1437 = vmatmul.bf16.gmra.mxu0 %v1353
      %v1438 = vpop.f32.mrf.mxu0
      %v1439 = vadd.f32 0.0, %v1438
      %v1440 = vpop.f32.mrf.mxu0
      %v1441 = vadd.f32 0.0, %v1440
      %1442 = vmatmul.bf16.gmra.mxu0 %v1356
      %v1443 = vpop.f32.mrf.mxu0
      %v1444 = vadd.f32 0.0, %v1443
      %v1445 = vpop.f32.mrf.mxu0
      %v1446 = vadd.f32 0.0, %v1445
      %1447 = vmatmul.bf16.gmra.mxu0 %v1359
      %v1448 = vpop.f32.mrf.mxu0
      %v1449 = vadd.f32 0.0, %v1448
      %v1450 = vpop.f32.mrf.mxu0
      %v1451 = vadd.f32 0.0, %v1450
      %1452 = vdwg.mxu0
      %v1453 = vadd.f32 %v1021, %v1374
      %v1454 = vadd.f32 %v1023, %v1376
      %v1455 = vadd.f32 %v1026, %v1379
      %v1456 = vadd.f32 %v1028, %v1381
      %v1457 = vadd.f32 %v1031, %v1384
      %v1458 = vadd.f32 %v1033, %v1386
      %v1459 = vadd.f32 %v1036, %v1389
      %v1460 = vadd.f32 %v1038, %v1391
      %v1461 = vadd.f32 %v1041, %v1394
      %v1462 = vadd.f32 %v1043, %v1396
      %v1463 = vadd.f32 %v1046, %v1399
      %v1464 = vadd.f32 %v1048, %v1401
      %v1465 = vadd.f32 %v1051, %v1404
      %v1466 = vadd.f32 %v1053, %v1406
      %v1467 = vadd.f32 %v1056, %v1409
      %v1468 = vadd.f32 %v1058, %v1411
      %v1469 = vadd.f32 %v1061, %v1414
      %v1470 = vadd.f32 %v1063, %v1416
      %v1471 = vadd.f32 %v1066, %v1419
      %v1472 = vadd.f32 %v1068, %v1421
      %v1473 = vadd.f32 %v1071, %v1424
      %v1474 = vadd.f32 %v1073, %v1426
      %v1475 = vadd.f32 %v1076, %v1429
      %v1476 = vadd.f32 %v1078, %v1431
      %v1477 = vadd.f32 %v1081, %v1434
      %v1478 = vadd.f32 %v1083, %v1436
      %v1479 = vadd.f32 %v1086, %v1439
      %v1480 = vadd.f32 %v1088, %v1441
      %v1481 = vadd.f32 %v1091, %v1444
      %v1482 = vadd.f32 %v1093, %v1446
      %v1483 = vadd.f32 %v1096, %v1449
      %v1484 = vadd.f32 %v1098, %v1451
      %s1485 = sadd.s32 %s248, 1
      %s1486 = smul.u32 %s1485, 3
      %s1487 = smul.addr %s1486, 4
      %s1488 = scalar_lea.vmem %s226, %s1487
      %v1489 = vld [vmem:[%s1488] sm:$0xf]
      %v1490 = vld [vmem:[%s1488 + $0x4] sm:$0xf]
      %v1491 = vld [vmem:[%s1488 + $0xc] sm:$0xf]
      %v1492 = vld [vmem:[%s1488 + $0x10] sm:$0xf]
      %v1493 = vld [vmem:[%s1488 + $0x18] sm:$0xf]
      %v1494 = vld [vmem:[%s1488 + $0x1c] sm:$0xf]
      %v1495 = vld [vmem:[%s1488 + $0x24] sm:$0xf]
      %v1496 = vld [vmem:[%s1488 + $0x28] sm:$0xf]
      %v1497 = vld [vmem:[%s1488 + $0x30] sm:$0xf]
      %v1498 = vld [vmem:[%s1488 + $0x34] sm:$0xf]
      %v1499 = vld [vmem:[%s1488 + $0x3c] sm:$0xf]
      %v1500 = vld [vmem:[%s1488 + $0x40] sm:$0xf]
      %v1501 = vld [vmem:[%s1488 + $0x48] sm:$0xf]
      %v1502 = vld [vmem:[%s1488 + $0x4c] sm:$0xf]
      %v1503 = vld [vmem:[%s1488 + $0x54] sm:$0xf]
      %v1504 = vld [vmem:[%s1488 + $0x58] sm:$0xf]
      %v1505 = vld [vmem:[%s1488 + $0x60] sm:$0xf]
      %v1506 = vld [vmem:[%s1488 + $0x64] sm:$0xf]
      %v1507 = vld [vmem:[%s1488 + $0x6c] sm:$0xf]
      %v1508 = vld [vmem:[%s1488 + $0x70] sm:$0xf]
      %v1509 = vld [vmem:[%s1488 + $0x78] sm:$0xf]
      %v1510 = vld [vmem:[%s1488 + $0x7c] sm:$0xf]
      %v1511 = vld [vmem:[%s1488 + $0x84] sm:$0xf]
      %v1512 = vld [vmem:[%s1488 + $0x88] sm:$0xf]
      %v1513 = vld [vmem:[%s1488 + $0x90] sm:$0xf]
      %v1514 = vld [vmem:[%s1488 + $0x94] sm:$0xf]
      %v1515 = vld [vmem:[%s1488 + $0x9c] sm:$0xf]
      %v1516 = vld [vmem:[%s1488 + $0xa0] sm:$0xf]
      %v1517 = vld [vmem:[%s1488 + $0xa8] sm:$0xf]
      %v1518 = vld [vmem:[%s1488 + $0xac] sm:$0xf]
      %v1519 = vld [vmem:[%s1488 + $0xb4] sm:$0xf]
      %v1520 = vld [vmem:[%s1488 + $0xb8] sm:$0xf]
      %s1521 = scalar_lea.vmem %s1, 12
      %v1522 = vld [vmem:[%s1521] sm:$0xf]
      %v1555 = vunpack.c.l.b16 %v1489
      %v1556 = vunpack.c.l.b16 %v1490
      %v1557 = vunpack.c.l.b16 %v1491
      %v1558 = vunpack.c.l.b16 %v1492
      %v1559 = vunpack.c.l.b16 %v1493
      %v1560 = vunpack.c.l.b16 %v1494
      %v1561 = vunpack.c.l.b16 %v1495
      %v1562 = vunpack.c.l.b16 %v1496
      %v1563 = vunpack.c.l.b16 %v1497
      %v1564 = vunpack.c.l.b16 %v1498
      %v1565 = vunpack.c.l.b16 %v1499
      %v1566 = vunpack.c.l.b16 %v1500
      %v1567 = vunpack.c.l.b16 %v1501
      %v1568 = vunpack.c.l.b16 %v1502
      %v1569 = vunpack.c.l.b16 %v1503
      %v1570 = vunpack.c.l.b16 %v1504
      %v1571 = vunpack.c.l.b16 %v1505
      %v1572 = vunpack.c.l.b16 %v1506
      %v1573 = vunpack.c.l.b16 %v1507
      %v1574 = vunpack.c.l.b16 %v1508
      %v1575 = vunpack.c.l.b16 %v1509
      %v1576 = vunpack.c.l.b16 %v1510
      %v1577 = vunpack.c.l.b16 %v1511
      %v1578 = vunpack.c.l.b16 %v1512
      %v1579 = vunpack.c.l.b16 %v1513
      %v1580 = vunpack.c.l.b16 %v1514
      %v1581 = vunpack.c.l.b16 %v1515
      %v1582 = vunpack.c.l.b16 %v1516
      %v1583 = vunpack.c.l.b16 %v1517
      %v1584 = vunpack.c.l.b16 %v1518
      %v1585 = vunpack.c.l.b16 %v1519
      %v1586 = vunpack.c.l.b16 %v1520
      %v1587 = vpack.c.b16 %v1556, %v1555
      %v1588 = vpack.c.b16 %v1558, %v1557
      %v1589 = vpack.c.b16 %v1560, %v1559
      %v1590 = vpack.c.b16 %v1562, %v1561
      %v1591 = vpack.c.b16 %v1564, %v1563
      %v1592 = vpack.c.b16 %v1566, %v1565
      %v1593 = vpack.c.b16 %v1568, %v1567
      %v1594 = vpack.c.b16 %v1570, %v1569
      %v1595 = vpack.c.b16 %v1572, %v1571
      %v1596 = vpack.c.b16 %v1574, %v1573
      %v1597 = vpack.c.b16 %v1576, %v1575
      %v1598 = vpack.c.b16 %v1578, %v1577
      %v1599 = vpack.c.b16 %v1580, %v1579
      %v1600 = vpack.c.b16 %v1582, %v1581
      %v1601 = vpack.c.b16 %v1584, %v1583
      %v1602 = vpack.c.b16 %v1586, %v1585
      %v1604 = vsel %vm738, %v1587, 0
      %v1607 = vsel %vm738, %v1588, 0
      %v1610 = vsel %vm738, %v1589, 0
      %v1613 = vsel %vm738, %v1590, 0
      %v1616 = vsel %vm738, %v1591, 0
      %v1619 = vsel %vm738, %v1592, 0
      %v1622 = vsel %vm738, %v1593, 0
      %v1625 = vsel %vm738, %v1594, 0
      %v1628 = vsel %vm738, %v1595, 0
      %v1631 = vsel %vm738, %v1596, 0
      %v1634 = vsel %vm738, %v1597, 0
      %v1637 = vsel %vm738, %v1598, 0
      %v1640 = vsel %vm738, %v1599, 0
      %v1643 = vsel %vm738, %v1600, 0
      %v1646 = vsel %vm738, %v1601, 0
      %v1649 = vsel %vm738, %v1602, 0
      %v1652 = vsel %vm787, %v1522, 0
      %1654 = vmatpush.bf16.msra.mxu0 0
      %1655 = vmatpush.bf16.msra.mxu0 0
      %1656 = vmatpush.bf16.msra.mxu0 0
      %1657 = vmatpush.bf16.msra.mxu0 0
      %1658 = vmatpush.bf16.msra.mxu0 0
      %1659 = vmatpush.bf16.msra.mxu0 0
      %1660 = vmatpush.bf16.msra.mxu0 0
      %1661 = vmatpush.bf16.msra.mxu0 %v1652
      %1662 = vmatmul.bf16.gmra.mxu0 %v1604
      %v1663 = vpop.f32.mrf.mxu0
      %v1664 = vadd.f32 0.0, %v1663
      %v1665 = vpop.f32.mrf.mxu0
      %v1666 = vadd.f32 0.0, %v1665
      %1667 = vmatmul.bf16.gmra.mxu0 %v1607
      %v1668 = vpop.f32.mrf.mxu0
      %v1669 = vadd.f32 0.0, %v1668
      %v1670 = vpop.f32.mrf.mxu0
      %v1671 = vadd.f32 0.0, %v1670
      %1672 = vmatmul.bf16.gmra.mxu0 %v1610
      %v1673 = vpop.f32.mrf.mxu0
      %v1674 = vadd.f32 0.0, %v1673
      %v1675 = vpop.f32.mrf.mxu0
      %v1676 = vadd.f32 0.0, %v1675
      %1677 = vmatmul.bf16.gmra.mxu0 %v1613
      %v1678 = vpop.f32.mrf.mxu0
      %v1679 = vadd.f32 0.0, %v1678
      %v1680 = vpop.f32.mrf.mxu0
      %v1681 = vadd.f32 0.0, %v1680
      %1682 = vmatmul.bf16.gmra.mxu0 %v1616
      %v1683 = vpop.f32.mrf.mxu0
      %v1684 = vadd.f32 0.0, %v1683
      %v1685 = vpop.f32.mrf.mxu0
      %v1686 = vadd.f32 0.0, %v1685
      %1687 = vmatmul.bf16.gmra.mxu0 %v1619
      %v1688 = vpop.f32.mrf.mxu0
      %v1689 = vadd.f32 0.0, %v1688
      %v1690 = vpop.f32.mrf.mxu0
      %v1691 = vadd.f32 0.0, %v1690
      %1692 = vmatmul.bf16.gmra.mxu0 %v1622
      %v1693 = vpop.f32.mrf.mxu0
      %v1694 = vadd.f32 0.0, %v1693
      %v1695 = vpop.f32.mrf.mxu0
      %v1696 = vadd.f32 0.0, %v1695
      %1697 = vmatmul.bf16.gmra.mxu0 %v1625
      %v1698 = vpop.f32.mrf.mxu0
      %v1699 = vadd.f32 0.0, %v1698
      %v1700 = vpop.f32.mrf.mxu0
      %v1701 = vadd.f32 0.0, %v1700
      %1702 = vmatmul.bf16.gmra.mxu0 %v1628
      %v1703 = vpop.f32.mrf.mxu0
      %v1704 = vadd.f32 0.0, %v1703
      %v1705 = vpop.f32.mrf.mxu0
      %v1706 = vadd.f32 0.0, %v1705
      %1707 = vmatmul.bf16.gmra.mxu0 %v1631
      %v1708 = vpop.f32.mrf.mxu0
      %v1709 = vadd.f32 0.0, %v1708
      %v1710 = vpop.f32.mrf.mxu0
      %v1711 = vadd.f32 0.0, %v1710
      %1712 = vmatmul.bf16.gmra.mxu0 %v1634
      %v1713 = vpop.f32.mrf.mxu0
      %v1714 = vadd.f32 0.0, %v1713
      %v1715 = vpop.f32.mrf.mxu0
      %v1716 = vadd.f32 0.0, %v1715
      %1717 = vmatmul.bf16.gmra.mxu0 %v1637
      %v1718 = vpop.f32.mrf.mxu0
      %v1719 = vadd.f32 0.0, %v1718
      %v1720 = vpop.f32.mrf.mxu0
      %v1721 = vadd.f32 0.0, %v1720
      %1722 = vmatmul.bf16.gmra.mxu0 %v1640
      %v1723 = vpop.f32.mrf.mxu0
      %v1724 = vadd.f32 0.0, %v1723
      %v1725 = vpop.f32.mrf.mxu0
      %v1726 = vadd.f32 0.0, %v1725
      %1727 = vmatmul.bf16.gmra.mxu0 %v1643
      %v1728 = vpop.f32.mrf.mxu0
      %v1729 = vadd.f32 0.0, %v1728
      %v1730 = vpop.f32.mrf.mxu0
      %v1731 = vadd.f32 0.0, %v1730
      %1732 = vmatmul.bf16.gmra.mxu0 %v1646
      %v1733 = vpop.f32.mrf.mxu0
      %v1734 = vadd.f32 0.0, %v1733
      %v1735 = vpop.f32.mrf.mxu0
      %v1736 = vadd.f32 0.0, %v1735
      %1737 = vmatmul.bf16.gmra.mxu0 %v1649
      %v1738 = vpop.f32.mrf.mxu0
      %v1739 = vadd.f32 0.0, %v1738
      %v1740 = vpop.f32.mrf.mxu0
      %v1741 = vadd.f32 0.0, %v1740
      %1742 = vdwg.mxu0
      %v1743 = vadd.f32 %v1453, %v1664
      %v1744 = vadd.f32 %v1454, %v1666
      %v1745 = vadd.f32 %v1455, %v1669
      %v1746 = vadd.f32 %v1456, %v1671
      %v1747 = vadd.f32 %v1457, %v1674
      %v1748 = vadd.f32 %v1458, %v1676
      %v1749 = vadd.f32 %v1459, %v1679
      %v1750 = vadd.f32 %v1460, %v1681
      %v1751 = vadd.f32 %v1461, %v1684
      %v1752 = vadd.f32 %v1462, %v1686
      %v1753 = vadd.f32 %v1463, %v1689
      %v1754 = vadd.f32 %v1464, %v1691
      %v1755 = vadd.f32 %v1465, %v1694
      %v1756 = vadd.f32 %v1466, %v1696
      %v1757 = vadd.f32 %v1467, %v1699
      %v1758 = vadd.f32 %v1468, %v1701
      %v1759 = vadd.f32 %v1469, %v1704
      %v1760 = vadd.f32 %v1470, %v1706
      %v1761 = vadd.f32 %v1471, %v1709
      %v1762 = vadd.f32 %v1472, %v1711
      %v1763 = vadd.f32 %v1473, %v1714
      %v1764 = vadd.f32 %v1474, %v1716
      %v1765 = vadd.f32 %v1475, %v1719
      %v1766 = vadd.f32 %v1476, %v1721
      %v1767 = vadd.f32 %v1477, %v1724
      %v1768 = vadd.f32 %v1478, %v1726
      %v1769 = vadd.f32 %v1479, %v1729
      %v1770 = vadd.f32 %v1480, %v1731
      %v1771 = vadd.f32 %v1481, %v1734
      %v1772 = vadd.f32 %v1482, %v1736
      %v1773 = vadd.f32 %v1483, %v1739
      %v1774 = vadd.f32 %v1484, %v1741
      %v1775 = vld [vmem:[%s1488] sm:$0xf]
      %v1776 = vld [vmem:[%s1488 + $0x4] sm:$0xf]
      %v1777 = vld [vmem:[%s1488 + $0x8] sm:$0x1]
      %v1778 = vld [vmem:[%s1488 + $0xc] sm:$0xf]
      %v1779 = vld [vmem:[%s1488 + $0x10] sm:$0xf]
      %v1780 = vld [vmem:[%s1488 + $0x14] sm:$0x1]
      %v1781 = vld [vmem:[%s1488 + $0x18] sm:$0xf]
      %v1782 = vld [vmem:[%s1488 + $0x1c] sm:$0xf]
      %v1783 = vld [vmem:[%s1488 + $0x20] sm:$0x1]
      %v1784 = vld [vmem:[%s1488 + $0x24] sm:$0xf]
      %v1785 = vld [vmem:[%s1488 + $0x28] sm:$0xf]
      %v1786 = vld [vmem:[%s1488 + $0x2c] sm:$0x1]
      %v1787 = vld [vmem:[%s1488 + $0x30] sm:$0xf]
      %v1788 = vld [vmem:[%s1488 + $0x34] sm:$0xf]
      %v1789 = vld [vmem:[%s1488 + $0x38] sm:$0x1]
      %v1790 = vld [vmem:[%s1488 + $0x3c] sm:$0xf]
      %v1791 = vld [vmem:[%s1488 + $0x40] sm:$0xf]
      %v1792 = vld [vmem:[%s1488 + $0x44] sm:$0x1]
      %v1793 = vld [vmem:[%s1488 + $0x48] sm:$0xf]
      %v1794 = vld [vmem:[%s1488 + $0x4c] sm:$0xf]
      %v1795 = vld [vmem:[%s1488 + $0x50] sm:$0x1]
      %v1796 = vld [vmem:[%s1488 + $0x54] sm:$0xf]
      %v1797 = vld [vmem:[%s1488 + $0x58] sm:$0xf]
      %v1798 = vld [vmem:[%s1488 + $0x5c] sm:$0x1]
      %v1799 = vld [vmem:[%s1488 + $0x60] sm:$0xf]
      %v1800 = vld [vmem:[%s1488 + $0x64] sm:$0xf]
      %v1801 = vld [vmem:[%s1488 + $0x68] sm:$0x1]
      %v1802 = vld [vmem:[%s1488 + $0x6c] sm:$0xf]
      %v1803 = vld [vmem:[%s1488 + $0x70] sm:$0xf]
      %v1804 = vld [vmem:[%s1488 + $0x74] sm:$0x1]
      %v1805 = vld [vmem:[%s1488 + $0x78] sm:$0xf]
      %v1806 = vld [vmem:[%s1488 + $0x7c] sm:$0xf]
      %v1807 = vld [vmem:[%s1488 + $0x80] sm:$0x1]
      %v1808 = vld [vmem:[%s1488 + $0x84] sm:$0xf]
      %v1809 = vld [vmem:[%s1488 + $0x88] sm:$0xf]
      %v1810 = vld [vmem:[%s1488 + $0x8c] sm:$0x1]
      %v1811 = vld [vmem:[%s1488 + $0x90] sm:$0xf]
      %v1812 = vld [vmem:[%s1488 + $0x94] sm:$0xf]
      %v1813 = vld [vmem:[%s1488 + $0x98] sm:$0x1]
      %v1814 = vld [vmem:[%s1488 + $0x9c] sm:$0xf]
      %v1815 = vld [vmem:[%s1488 + $0xa0] sm:$0xf]
      %v1816 = vld [vmem:[%s1488 + $0xa4] sm:$0x1]
      %v1817 = vld [vmem:[%s1488 + $0xa8] sm:$0xf]
      %v1818 = vld [vmem:[%s1488 + $0xac] sm:$0xf]
      %v1819 = vld [vmem:[%s1488 + $0xb0] sm:$0x1]
      %v1820 = vld [vmem:[%s1488 + $0xb4] sm:$0xf]
      %v1821 = vld [vmem:[%s1488 + $0xb8] sm:$0xf]
      %v1822 = vld [vmem:[%s1488 + $0xbc] sm:$0x1]
      %v1824 = vshrl.u32 %v1775, 16
      %v1826 = vrot.slane %v1824, 4
      %v1827 = vshll.u32 %v1775, 16
      %v1829 = vrot.slane %v1827, 5
      %v1830 = vor.u32 %v1826, %v1829
      %v1831 = vrot.slane %v1830, 4
      %v1833 = vshll.u32 %v1776, 16
      %v1835 = vrot.slane %v1833, 5
      %v1836 = vsel %vm303, %v1831, %v1835
      %v1837 = vshrl.u32 %v1776, 16
      %v1839 = vrot.slane %v1837, 4
      %v1840 = vor.u32 %v1839, %v1835
      %v1841 = vrot.slane %v1840, 4
      %v1843 = vshll.u32 %v1777, 16
      %v1845 = vrot.slane %v1843, 5
      %v1846 = vsel %vm303, %v1841, %v1845
      %v1848 = vshrl.u32 %v1778, 16
      %v1850 = vrot.slane %v1848, 4
      %v1851 = vshll.u32 %v1778, 16
      %v1853 = vrot.slane %v1851, 5
      %v1854 = vor.u32 %v1850, %v1853
      %v1855 = vrot.slane %v1854, 4
      %v1857 = vshll.u32 %v1779, 16
      %v1859 = vrot.slane %v1857, 5
      %v1860 = vsel %vm303, %v1855, %v1859
      %v1861 = vshrl.u32 %v1779, 16
      %v1863 = vrot.slane %v1861, 4
      %v1864 = vor.u32 %v1863, %v1859
      %v1865 = vrot.slane %v1864, 4
      %v1867 = vshll.u32 %v1780, 16
      %v1869 = vrot.slane %v1867, 5
      %v1870 = vsel %vm303, %v1865, %v1869
      %v1872 = vshrl.u32 %v1781, 16
      %v1874 = vrot.slane %v1872, 4
      %v1875 = vshll.u32 %v1781, 16
      %v1877 = vrot.slane %v1875, 5
      %v1878 = vor.u32 %v1874, %v1877
      %v1879 = vrot.slane %v1878, 4
      %v1881 = vshll.u32 %v1782, 16
      %v1883 = vrot.slane %v1881, 5
      %v1884 = vsel %vm303, %v1879, %v1883
      %v1885 = vshrl.u32 %v1782, 16
      %v1887 = vrot.slane %v1885, 4
      %v1888 = vor.u32 %v1887, %v1883
      %v1889 = vrot.slane %v1888, 4
      %v1891 = vshll.u32 %v1783, 16
      %v1893 = vrot.slane %v1891, 5
      %v1894 = vsel %vm303, %v1889, %v1893
      %v1896 = vshrl.u32 %v1784, 16
      %v1898 = vrot.slane %v1896, 4
      %v1899 = vshll.u32 %v1784, 16
      %v1901 = vrot.slane %v1899, 5
      %v1902 = vor.u32 %v1898, %v1901
      %v1903 = vrot.slane %v1902, 4
      %v1905 = vshll.u32 %v1785, 16
      %v1907 = vrot.slane %v1905, 5
      %v1908 = vsel %vm303, %v1903, %v1907
      %v1909 = vshrl.u32 %v1785, 16
      %v1911 = vrot.slane %v1909, 4
      %v1912 = vor.u32 %v1911, %v1907
      %v1913 = vrot.slane %v1912, 4
      %v1915 = vshll.u32 %v1786, 16
      %v1917 = vrot.slane %v1915, 5
      %v1918 = vsel %vm303, %v1913, %v1917
      %v1920 = vshrl.u32 %v1787, 16
      %v1922 = vrot.slane %v1920, 4
      %v1923 = vshll.u32 %v1787, 16
      %v1925 = vrot.slane %v1923, 5
      %v1926 = vor.u32 %v1922, %v1925
      %v1927 = vrot.slane %v1926, 4
      %v1929 = vshll.u32 %v1788, 16
      %v1931 = vrot.slane %v1929, 5
      %v1932 = vsel %vm303, %v1927, %v1931
      %v1933 = vshrl.u32 %v1788, 16
      %v1935 = vrot.slane %v1933, 4
      %v1936 = vor.u32 %v1935, %v1931
      %v1937 = vrot.slane %v1936, 4
      %v1939 = vshll.u32 %v1789, 16
      %v1941 = vrot.slane %v1939, 5
      %v1942 = vsel %vm303, %v1937, %v1941
      %v1944 = vshrl.u32 %v1790, 16
      %v1946 = vrot.slane %v1944, 4
      %v1947 = vshll.u32 %v1790, 16
      %v1949 = vrot.slane %v1947, 5
      %v1950 = vor.u32 %v1946, %v1949
      %v1951 = vrot.slane %v1950, 4
      %v1953 = vshll.u32 %v1791, 16
      %v1955 = vrot.slane %v1953, 5
      %v1956 = vsel %vm303, %v1951, %v1955
      %v1957 = vshrl.u32 %v1791, 16
      %v1959 = vrot.slane %v1957, 4
      %v1960 = vor.u32 %v1959, %v1955
      %v1961 = vrot.slane %v1960, 4
      %v1963 = vshll.u32 %v1792, 16
      %v1965 = vrot.slane %v1963, 5
      %v1966 = vsel %vm303, %v1961, %v1965
      %v1968 = vshrl.u32 %v1793, 16
      %v1970 = vrot.slane %v1968, 4
      %v1971 = vshll.u32 %v1793, 16
      %v1973 = vrot.slane %v1971, 5
      %v1974 = vor.u32 %v1970, %v1973
      %v1975 = vrot.slane %v1974, 4
      %v1977 = vshll.u32 %v1794, 16
      %v1979 = vrot.slane %v1977, 5
      %v1980 = vsel %vm303, %v1975, %v1979
      %v1981 = vshrl.u32 %v1794, 16
      %v1983 = vrot.slane %v1981, 4
      %v1984 = vor.u32 %v1983, %v1979
      %v1985 = vrot.slane %v1984, 4
      %v1987 = vshll.u32 %v1795, 16
      %v1989 = vrot.slane %v1987, 5
      %v1990 = vsel %vm303, %v1985, %v1989
      %v1992 = vshrl.u32 %v1796, 16
      %v1994 = vrot.slane %v1992, 4
      %v1995 = vshll.u32 %v1796, 16
      %v1997 = vrot.slane %v1995, 5
      %v1998 = vor.u32 %v1994, %v1997
      %v1999 = vrot.slane %v1998, 4
      %v2001 = vshll.u32 %v1797, 16
      %v2003 = vrot.slane %v2001, 5
      %v2004 = vsel %vm303, %v1999, %v2003
      %v2005 = vshrl.u32 %v1797, 16
      %v2007 = vrot.slane %v2005, 4
      %v2008 = vor.u32 %v2007, %v2003
      %v2009 = vrot.slane %v2008, 4
      %v2011 = vshll.u32 %v1798, 16
      %v2013 = vrot.slane %v2011, 5
      %v2014 = vsel %vm303, %v2009, %v2013
      %v2016 = vshrl.u32 %v1799, 16
      %v2018 = vrot.slane %v2016, 4
      %v2019 = vshll.u32 %v1799, 16
      %v2021 = vrot.slane %v2019, 5
      %v2022 = vor.u32 %v2018, %v2021
      %v2023 = vrot.slane %v2022, 4
      %v2025 = vshll.u32 %v1800, 16
      %v2027 = vrot.slane %v2025, 5
      %v2028 = vsel %vm303, %v2023, %v2027
      %v2029 = vshrl.u32 %v1800, 16
      %v2031 = vrot.slane %v2029, 4
      %v2032 = vor.u32 %v2031, %v2027
      %v2033 = vrot.slane %v2032, 4
      %v2035 = vshll.u32 %v1801, 16
      %v2037 = vrot.slane %v2035, 5
      %v2038 = vsel %vm303, %v2033, %v2037
      %v2040 = vshrl.u32 %v1802, 16
      %v2042 = vrot.slane %v2040, 4
      %v2043 = vshll.u32 %v1802, 16
      %v2045 = vrot.slane %v2043, 5
      %v2046 = vor.u32 %v2042, %v2045
      %v2047 = vrot.slane %v2046, 4
      %v2049 = vshll.u32 %v1803, 16
      %v2051 = vrot.slane %v2049, 5
      %v2052 = vsel %vm303, %v2047, %v2051
      %v2053 = vshrl.u32 %v1803, 16
      %v2055 = vrot.slane %v2053, 4
      %v2056 = vor.u32 %v2055, %v2051
      %v2057 = vrot.slane %v2056, 4
      %v2059 = vshll.u32 %v1804, 16
      %v2061 = vrot.slane %v2059, 5
      %v2062 = vsel %vm303, %v2057, %v2061
      %v2064 = vshrl.u32 %v1805, 16
      %v2066 = vrot.slane %v2064, 4
      %v2067 = vshll.u32 %v1805, 16
      %v2069 = vrot.slane %v2067, 5
      %v2070 = vor.u32 %v2066, %v2069
      %v2071 = vrot.slane %v2070, 4
      %v2073 = vshll.u32 %v1806, 16
      %v2075 = vrot.slane %v2073, 5
      %v2076 = vsel %vm303, %v2071, %v2075
      %v2077 = vshrl.u32 %v1806, 16
      %v2079 = vrot.slane %v2077, 4
      %v2080 = vor.u32 %v2079, %v2075
      %v2081 = vrot.slane %v2080, 4
      %v2083 = vshll.u32 %v1807, 16
      %v2085 = vrot.slane %v2083, 5
      %v2086 = vsel %vm303, %v2081, %v2085
      %v2088 = vshrl.u32 %v1808, 16
      %v2090 = vrot.slane %v2088, 4
      %v2091 = vshll.u32 %v1808, 16
      %v2093 = vrot.slane %v2091, 5
      %v2094 = vor.u32 %v2090, %v2093
      %v2095 = vrot.slane %v2094, 4
      %v2097 = vshll.u32 %v1809, 16
      %v2099 = vrot.slane %v2097, 5
      %v2100 = vsel %vm303, %v2095, %v2099
      %v2101 = vshrl.u32 %v1809, 16
      %v2103 = vrot.slane %v2101, 4
      %v2104 = vor.u32 %v2103, %v2099
      %v2105 = vrot.slane %v2104, 4
      %v2107 = vshll.u32 %v1810, 16
      %v2109 = vrot.slane %v2107, 5
      %v2110 = vsel %vm303, %v2105, %v2109
      %v2112 = vshrl.u32 %v1811, 16
      %v2114 = vrot.slane %v2112, 4
      %v2115 = vshll.u32 %v1811, 16
      %v2117 = vrot.slane %v2115, 5
      %v2118 = vor.u32 %v2114, %v2117
      %v2119 = vrot.slane %v2118, 4
      %v2121 = vshll.u32 %v1812, 16
      %v2123 = vrot.slane %v2121, 5
      %v2124 = vsel %vm303, %v2119, %v2123
      %v2125 = vshrl.u32 %v1812, 16
      %v2127 = vrot.slane %v2125, 4
      %v2128 = vor.u32 %v2127, %v2123
      %v2129 = vrot.slane %v2128, 4
      %v2131 = vshll.u32 %v1813, 16
      %v2133 = vrot.slane %v2131, 5
      %v2134 = vsel %vm303, %v2129, %v2133
      %v2136 = vshrl.u32 %v1814, 16
      %v2138 = vrot.slane %v2136, 4
      %v2139 = vshll.u32 %v1814, 16
      %v2141 = vrot.slane %v2139, 5
      %v2142 = vor.u32 %v2138, %v2141
      %v2143 = vrot.slane %v2142, 4
      %v2145 = vshll.u32 %v1815, 16
      %v2147 = vrot.slane %v2145, 5
      %v2148 = vsel %vm303, %v2143, %v2147
      %v2149 = vshrl.u32 %v1815, 16
      %v2151 = vrot.slane %v2149, 4
      %v2152 = vor.u32 %v2151, %v2147
      %v2153 = vrot.slane %v2152, 4
      %v2155 = vshll.u32 %v1816, 16
      %v2157 = vrot.slane %v2155, 5
      %v2158 = vsel %vm303, %v2153, %v2157
      %v2160 = vshrl.u32 %v1817, 16
      %v2162 = vrot.slane %v2160, 4
      %v2163 = vshll.u32 %v1817, 16
      %v2165 = vrot.slane %v2163, 5
      %v2166 = vor.u32 %v2162, %v2165
      %v2167 = vrot.slane %v2166, 4
      %v2169 = vshll.u32 %v1818, 16
      %v2171 = vrot.slane %v2169, 5
      %v2172 = vsel %vm303, %v2167, %v2171
      %v2173 = vshrl.u32 %v1818, 16
      %v2175 = vrot.slane %v2173, 4
      %v2176 = vor.u32 %v2175, %v2171
      %v2177 = vrot.slane %v2176, 4
      %v2179 = vshll.u32 %v1819, 16
      %v2181 = vrot.slane %v2179, 5
      %v2182 = vsel %vm303, %v2177, %v2181
      %v2184 = vshrl.u32 %v1820, 16
      %v2186 = vrot.slane %v2184, 4
      %v2187 = vshll.u32 %v1820, 16
      %v2189 = vrot.slane %v2187, 5
      %v2190 = vor.u32 %v2186, %v2189
      %v2191 = vrot.slane %v2190, 4
      %v2193 = vshll.u32 %v1821, 16
      %v2195 = vrot.slane %v2193, 5
      %v2196 = vsel %vm303, %v2191, %v2195
      %v2197 = vshrl.u32 %v1821, 16
      %v2199 = vrot.slane %v2197, 4
      %v2200 = vor.u32 %v2199, %v2195
      %v2201 = vrot.slane %v2200, 4
      %v2203 = vshll.u32 %v1822, 16
      %v2205 = vrot.slane %v2203, 5
      %v2206 = vsel %vm303, %v2201, %v2205
      %s2207 = scalar_lea.vmem %s1, 16
      %v2208 = vld [vmem:[%s2207] sm:$0xf]
      %v2209 = vunpack.c.l.b16 %v1836
      %v2210 = vunpack.c.l.b16 %v1846
      %v2211 = vunpack.c.l.b16 %v1860
      %v2212 = vunpack.c.l.b16 %v1870
      %v2213 = vunpack.c.l.b16 %v1884
      %v2214 = vunpack.c.l.b16 %v1894
      %v2215 = vunpack.c.l.b16 %v1908
      %v2216 = vunpack.c.l.b16 %v1918
      %v2217 = vunpack.c.l.b16 %v1932
      %v2218 = vunpack.c.l.b16 %v1942
      %v2219 = vunpack.c.l.b16 %v1956
      %v2220 = vunpack.c.l.b16 %v1966
      %v2221 = vunpack.c.l.b16 %v1980
      %v2222 = vunpack.c.l.b16 %v1990
      %v2223 = vunpack.c.l.b16 %v2004
      %v2224 = vunpack.c.l.b16 %v2014
      %v2225 = vunpack.c.l.b16 %v2028
      %v2226 = vunpack.c.l.b16 %v2038
      %v2227 = vunpack.c.l.b16 %v2052
      %v2228 = vunpack.c.l.b16 %v2062
      %v2229 = vunpack.c.l.b16 %v2076
      %v2230 = vunpack.c.l.b16 %v2086
      %v2231 = vunpack.c.l.b16 %v2100
      %v2232 = vunpack.c.l.b16 %v2110
      %v2233 = vunpack.c.l.b16 %v2124
      %v2234 = vunpack.c.l.b16 %v2134
      %v2235 = vunpack.c.l.b16 %v2148
      %v2236 = vunpack.c.l.b16 %v2158
      %v2237 = vunpack.c.l.b16 %v2172
      %v2238 = vunpack.c.l.b16 %v2182
      %v2239 = vunpack.c.l.b16 %v2196
      %v2240 = vunpack.c.l.b16 %v2206
      %v2241 = vpack.c.b16 %v2210, %v2209
      %v2242 = vpack.c.b16 %v2212, %v2211
      %v2243 = vpack.c.b16 %v2214, %v2213
      %v2244 = vpack.c.b16 %v2216, %v2215
      %v2245 = vpack.c.b16 %v2218, %v2217
      %v2246 = vpack.c.b16 %v2220, %v2219
      %v2247 = vpack.c.b16 %v2222, %v2221
      %v2248 = vpack.c.b16 %v2224, %v2223
      %v2249 = vpack.c.b16 %v2226, %v2225
      %v2250 = vpack.c.b16 %v2228, %v2227
      %v2251 = vpack.c.b16 %v2230, %v2229
      %v2252 = vpack.c.b16 %v2232, %v2231
      %v2253 = vpack.c.b16 %v2234, %v2233
      %v2254 = vpack.c.b16 %v2236, %v2235
      %v2255 = vpack.c.b16 %v2238, %v2237
      %v2256 = vpack.c.b16 %v2240, %v2239
      %v2258 = vsel %vm738, %v2241, 0
      %v2261 = vsel %vm738, %v2242, 0
      %v2264 = vsel %vm738, %v2243, 0
      %v2267 = vsel %vm738, %v2244, 0
      %v2270 = vsel %vm738, %v2245, 0
      %v2273 = vsel %vm738, %v2246, 0
      %v2276 = vsel %vm738, %v2247, 0
      %v2279 = vsel %vm738, %v2248, 0
      %v2282 = vsel %vm738, %v2249, 0
      %v2285 = vsel %vm738, %v2250, 0
      %v2288 = vsel %vm738, %v2251, 0
      %v2291 = vsel %vm738, %v2252, 0
      %v2294 = vsel %vm738, %v2253, 0
      %v2297 = vsel %vm738, %v2254, 0
      %v2300 = vsel %vm738, %v2255, 0
      %v2303 = vsel %vm738, %v2256, 0
      %v2306 = vsel %vm787, %v2208, 0
      %2308 = vmatpush.bf16.msra.mxu0 0
      %2309 = vmatpush.bf16.msra.mxu0 0
      %2310 = vmatpush.bf16.msra.mxu0 0
      %2311 = vmatpush.bf16.msra.mxu0 0
      %2312 = vmatpush.bf16.msra.mxu0 0
      %2313 = vmatpush.bf16.msra.mxu0 0
      %2314 = vmatpush.bf16.msra.mxu0 0
      %2315 = vmatpush.bf16.msra.mxu0 %v2306
      %2316 = vmatmul.bf16.gmra.mxu0 %v2258
      %v2317 = vpop.f32.mrf.mxu0
      %v2318 = vadd.f32 0.0, %v2317
      %v2319 = vpop.f32.mrf.mxu0
      %v2320 = vadd.f32 0.0, %v2319
      %2321 = vmatmul.bf16.gmra.mxu0 %v2261
      %v2322 = vpop.f32.mrf.mxu0
      %v2323 = vadd.f32 0.0, %v2322
      %v2324 = vpop.f32.mrf.mxu0
      %v2325 = vadd.f32 0.0, %v2324
      %2326 = vmatmul.bf16.gmra.mxu0 %v2264
      %v2327 = vpop.f32.mrf.mxu0
      %v2328 = vadd.f32 0.0, %v2327
      %v2329 = vpop.f32.mrf.mxu0
      %v2330 = vadd.f32 0.0, %v2329
      %2331 = vmatmul.bf16.gmra.mxu0 %v2267
      %v2332 = vpop.f32.mrf.mxu0
      %v2333 = vadd.f32 0.0, %v2332
      %v2334 = vpop.f32.mrf.mxu0
      %v2335 = vadd.f32 0.0, %v2334
      %2336 = vmatmul.bf16.gmra.mxu0 %v2270
      %v2337 = vpop.f32.mrf.mxu0
      %v2338 = vadd.f32 0.0, %v2337
      %v2339 = vpop.f32.mrf.mxu0
      %v2340 = vadd.f32 0.0, %v2339
      %2341 = vmatmul.bf16.gmra.mxu0 %v2273
      %v2342 = vpop.f32.mrf.mxu0
      %v2343 = vadd.f32 0.0, %v2342
      %v2344 = vpop.f32.mrf.mxu0
      %v2345 = vadd.f32 0.0, %v2344
      %2346 = vmatmul.bf16.gmra.mxu0 %v2276
      %v2347 = vpop.f32.mrf.mxu0
      %v2348 = vadd.f32 0.0, %v2347
      %v2349 = vpop.f32.mrf.mxu0
      %v2350 = vadd.f32 0.0, %v2349
      %2351 = vmatmul.bf16.gmra.mxu0 %v2279
      %v2352 = vpop.f32.mrf.mxu0
      %v2353 = vadd.f32 0.0, %v2352
      %v2354 = vpop.f32.mrf.mxu0
      %v2355 = vadd.f32 0.0, %v2354
      %2356 = vmatmul.bf16.gmra.mxu0 %v2282
      %v2357 = vpop.f32.mrf.mxu0
      %v2358 = vadd.f32 0.0, %v2357
      %v2359 = vpop.f32.mrf.mxu0
      %v2360 = vadd.f32 0.0, %v2359
      %2361 = vmatmul.bf16.gmra.mxu0 %v2285
      %v2362 = vpop.f32.mrf.mxu0
      %v2363 = vadd.f32 0.0, %v2362
      %v2364 = vpop.f32.mrf.mxu0
      %v2365 = vadd.f32 0.0, %v2364
      %2366 = vmatmul.bf16.gmra.mxu0 %v2288
      %v2367 = vpop.f32.mrf.mxu0
      %v2368 = vadd.f32 0.0, %v2367
      %v2369 = vpop.f32.mrf.mxu0
      %v2370 = vadd.f32 0.0, %v2369
      %2371 = vmatmul.bf16.gmra.mxu0 %v2291
      %v2372 = vpop.f32.mrf.mxu0
      %v2373 = vadd.f32 0.0, %v2372
      %v2374 = vpop.f32.mrf.mxu0
      %v2375 = vadd.f32 0.0, %v2374
      %2376 = vmatmul.bf16.gmra.mxu0 %v2294
      %v2377 = vpop.f32.mrf.mxu0
      %v2378 = vadd.f32 0.0, %v2377
      %v2379 = vpop.f32.mrf.mxu0
      %v2380 = vadd.f32 0.0, %v2379
      %2381 = vmatmul.bf16.gmra.mxu0 %v2297
      %v2382 = vpop.f32.mrf.mxu0
      %v2383 = vadd.f32 0.0, %v2382
      %v2384 = vpop.f32.mrf.mxu0
      %v2385 = vadd.f32 0.0, %v2384
      %2386 = vmatmul.bf16.gmra.mxu0 %v2300
      %v2387 = vpop.f32.mrf.mxu0
      %v2388 = vadd.f32 0.0, %v2387
      %v2389 = vpop.f32.mrf.mxu0
      %v2390 = vadd.f32 0.0, %v2389
      %2391 = vmatmul.bf16.gmra.mxu0 %v2303
      %v2392 = vpop.f32.mrf.mxu0
      %v2393 = vadd.f32 0.0, %v2392
      %v2394 = vpop.f32.mrf.mxu0
      %v2395 = vadd.f32 0.0, %v2394
      %2396 = vdwg.mxu0
      %v2397 = vadd.f32 %v1743, %v2318
      %v2398 = vadd.f32 %v1744, %v2320
      %v2399 = vadd.f32 %v1745, %v2323
      %v2400 = vadd.f32 %v1746, %v2325
      %v2401 = vadd.f32 %v1747, %v2328
      %v2402 = vadd.f32 %v1748, %v2330
      %v2403 = vadd.f32 %v1749, %v2333
      %v2404 = vadd.f32 %v1750, %v2335
      %v2405 = vadd.f32 %v1751, %v2338
      %v2406 = vadd.f32 %v1752, %v2340
      %v2407 = vadd.f32 %v1753, %v2343
      %v2408 = vadd.f32 %v1754, %v2345
      %v2409 = vadd.f32 %v1755, %v2348
      %v2410 = vadd.f32 %v1756, %v2350
      %v2411 = vadd.f32 %v1757, %v2353
      %v2412 = vadd.f32 %v1758, %v2355
      %v2413 = vadd.f32 %v1759, %v2358
      %v2414 = vadd.f32 %v1760, %v2360
      %v2415 = vadd.f32 %v1761, %v2363
      %v2416 = vadd.f32 %v1762, %v2365
      %v2417 = vadd.f32 %v1763, %v2368
      %v2418 = vadd.f32 %v1764, %v2370
      %v2419 = vadd.f32 %v1765, %v2373
      %v2420 = vadd.f32 %v1766, %v2375
      %v2421 = vadd.f32 %v1767, %v2378
      %v2422 = vadd.f32 %v1768, %v2380
      %v2423 = vadd.f32 %v1769, %v2383
      %v2424 = vadd.f32 %v1770, %v2385
      %v2425 = vadd.f32 %v1771, %v2388
      %v2426 = vadd.f32 %v1772, %v2390
      %v2427 = vadd.f32 %v1773, %v2393
      %v2428 = vadd.f32 %v1774, %v2395
      %v2429 = vld [vmem:[%s1488] sm:$0xe]
      %v2430 = vld [vmem:[%s1488 + $0xc] sm:$0xe]
      %v2431 = vld [vmem:[%s1488 + $0x18] sm:$0xe]
      %v2432 = vld [vmem:[%s1488 + $0x24] sm:$0xe]
      %v2433 = vld [vmem:[%s1488 + $0x30] sm:$0xe]
      %v2434 = vld [vmem:[%s1488 + $0x3c] sm:$0xe]
      %v2435 = vld [vmem:[%s1488 + $0x48] sm:$0xe]
      %v2436 = vld [vmem:[%s1488 + $0x54] sm:$0xe]
      %v2437 = vld [vmem:[%s1488 + $0x60] sm:$0xe]
      %v2438 = vld [vmem:[%s1488 + $0x6c] sm:$0xe]
      %v2439 = vld [vmem:[%s1488 + $0x78] sm:$0xe]
      %v2440 = vld [vmem:[%s1488 + $0x84] sm:$0xe]
      %v2441 = vld [vmem:[%s1488 + $0x90] sm:$0xe]
      %v2442 = vld [vmem:[%s1488 + $0x9c] sm:$0xe]
      %v2443 = vld [vmem:[%s1488 + $0xa8] sm:$0xe]
      %v2444 = vld [vmem:[%s1488 + $0xb4] sm:$0xe]
      %v2493 = vrot.slane %v2429, 5
      %v2494 = vrot.slane %v2493, 4
      %v2495 = vrot.slane %v1776, 5
      %v2496 = vsel %vm1150, %v2494, %v2495
      %v2497 = vrot.slane %v2495, 4
      %v2498 = vrot.slane %v1777, 5
      %v2499 = vsel %vm1150, %v2497, %v2498
      %v2500 = vrot.slane %v2430, 5
      %v2501 = vrot.slane %v2500, 4
      %v2502 = vrot.slane %v1779, 5
      %v2503 = vsel %vm1150, %v2501, %v2502
      %v2504 = vrot.slane %v2502, 4
      %v2505 = vrot.slane %v1780, 5
      %v2506 = vsel %vm1150, %v2504, %v2505
      %v2507 = vrot.slane %v2431, 5
      %v2508 = vrot.slane %v2507, 4
      %v2509 = vrot.slane %v1782, 5
      %v2510 = vsel %vm1150, %v2508, %v2509
      %v2511 = vrot.slane %v2509, 4
      %v2512 = vrot.slane %v1783, 5
      %v2513 = vsel %vm1150, %v2511, %v2512
      %v2514 = vrot.slane %v2432, 5
      %v2515 = vrot.slane %v2514, 4
      %v2516 = vrot.slane %v1785, 5
      %v2517 = vsel %vm1150, %v2515, %v2516
      %v2518 = vrot.slane %v2516, 4
      %v2519 = vrot.slane %v1786, 5
      %v2520 = vsel %vm1150, %v2518, %v2519
      %v2521 = vrot.slane %v2433, 5
      %v2522 = vrot.slane %v2521, 4
      %v2523 = vrot.slane %v1788, 5
      %v2524 = vsel %vm1150, %v2522, %v2523
      %v2525 = vrot.slane %v2523, 4
      %v2526 = vrot.slane %v1789, 5
      %v2527 = vsel %vm1150, %v2525, %v2526
      %v2528 = vrot.slane %v2434, 5
      %v2529 = vrot.slane %v2528, 4
      %v2530 = vrot.slane %v1791, 5
      %v2531 = vsel %vm1150, %v2529, %v2530
      %v2532 = vrot.slane %v2530, 4
      %v2533 = vrot.slane %v1792, 5
      %v2534 = vsel %vm1150, %v2532, %v2533
      %v2535 = vrot.slane %v2435, 5
      %v2536 = vrot.slane %v2535, 4
      %v2537 = vrot.slane %v1794, 5
      %v2538 = vsel %vm1150, %v2536, %v2537
      %v2539 = vrot.slane %v2537, 4
      %v2540 = vrot.slane %v1795, 5
      %v2541 = vsel %vm1150, %v2539, %v2540
      %v2542 = vrot.slane %v2436, 5
      %v2543 = vrot.slane %v2542, 4
      %v2544 = vrot.slane %v1797, 5
      %v2545 = vsel %vm1150, %v2543, %v2544
      %v2546 = vrot.slane %v2544, 4
      %v2547 = vrot.slane %v1798, 5
      %v2548 = vsel %vm1150, %v2546, %v2547
      %v2549 = vrot.slane %v2437, 5
      %v2550 = vrot.slane %v2549, 4
      %v2551 = vrot.slane %v1800, 5
      %v2552 = vsel %vm1150, %v2550, %v2551
      %v2553 = vrot.slane %v2551, 4
      %v2554 = vrot.slane %v1801, 5
      %v2555 = vsel %vm1150, %v2553, %v2554
      %v2556 = vrot.slane %v2438, 5
      %v2557 = vrot.slane %v2556, 4
      %v2558 = vrot.slane %v1803, 5
      %v2559 = vsel %vm1150, %v2557, %v2558
      %v2560 = vrot.slane %v2558, 4
      %v2561 = vrot.slane %v1804, 5
      %v2562 = vsel %vm1150, %v2560, %v2561
      %v2563 = vrot.slane %v2439, 5
      %v2564 = vrot.slane %v2563, 4
      %v2565 = vrot.slane %v1806, 5
      %v2566 = vsel %vm1150, %v2564, %v2565
      %v2567 = vrot.slane %v2565, 4
      %v2568 = vrot.slane %v1807, 5
      %v2569 = vsel %vm1150, %v2567, %v2568
      %v2570 = vrot.slane %v2440, 5
      %v2571 = vrot.slane %v2570, 4
      %v2572 = vrot.slane %v1809, 5
      %v2573 = vsel %vm1150, %v2571, %v2572
      %v2574 = vrot.slane %v2572, 4
      %v2575 = vrot.slane %v1810, 5
      %v2576 = vsel %vm1150, %v2574, %v2575
      %v2577 = vrot.slane %v2441, 5
      %v2578 = vrot.slane %v2577, 4
      %v2579 = vrot.slane %v1812, 5
      %v2580 = vsel %vm1150, %v2578, %v2579
      %v2581 = vrot.slane %v2579, 4
      %v2582 = vrot.slane %v1813, 5
      %v2583 = vsel %vm1150, %v2581, %v2582
      %v2584 = vrot.slane %v2442, 5
      %v2585 = vrot.slane %v2584, 4
      %v2586 = vrot.slane %v1815, 5
      %v2587 = vsel %vm1150, %v2585, %v2586
      %v2588 = vrot.slane %v2586, 4
      %v2589 = vrot.slane %v1816, 5
      %v2590 = vsel %vm1150, %v2588, %v2589
      %v2591 = vrot.slane %v2443, 5
      %v2592 = vrot.slane %v2591, 4
      %v2593 = vrot.slane %v1818, 5
      %v2594 = vsel %vm1150, %v2592, %v2593
      %v2595 = vrot.slane %v2593, 4
      %v2596 = vrot.slane %v1819, 5
      %v2597 = vsel %vm1150, %v2595, %v2596
      %v2598 = vrot.slane %v2444, 5
      %v2599 = vrot.slane %v2598, 4
      %v2600 = vrot.slane %v1821, 5
      %v2601 = vsel %vm1150, %v2599, %v2600
      %v2602 = vrot.slane %v2600, 4
      %v2603 = vrot.slane %v1822, 5
      %v2604 = vsel %vm1150, %v2602, %v2603
      %s2605 = scalar_lea.vmem %s1, 20
      %v2606 = vld [vmem:[%s2605] sm:$0xf]
      %v2607 = vunpack.c.l.b16 %v2496
      %v2608 = vunpack.c.l.b16 %v2499
      %v2609 = vunpack.c.l.b16 %v2503
      %v2610 = vunpack.c.l.b16 %v2506
      %v2611 = vunpack.c.l.b16 %v2510
      %v2612 = vunpack.c.l.b16 %v2513
      %v2613 = vunpack.c.l.b16 %v2517
      %v2614 = vunpack.c.l.b16 %v2520
      %v2615 = vunpack.c.l.b16 %v2524
      %v2616 = vunpack.c.l.b16 %v2527
      %v2617 = vunpack.c.l.b16 %v2531
      %v2618 = vunpack.c.l.b16 %v2534
      %v2619 = vunpack.c.l.b16 %v2538
      %v2620 = vunpack.c.l.b16 %v2541
      %v2621 = vunpack.c.l.b16 %v2545
      %v2622 = vunpack.c.l.b16 %v2548
      %v2623 = vunpack.c.l.b16 %v2552
      %v2624 = vunpack.c.l.b16 %v2555
      %v2625 = vunpack.c.l.b16 %v2559
      %v2626 = vunpack.c.l.b16 %v2562
      %v2627 = vunpack.c.l.b16 %v2566
      %v2628 = vunpack.c.l.b16 %v2569
      %v2629 = vunpack.c.l.b16 %v2573
      %v2630 = vunpack.c.l.b16 %v2576
      %v2631 = vunpack.c.l.b16 %v2580
      %v2632 = vunpack.c.l.b16 %v2583
      %v2633 = vunpack.c.l.b16 %v2587
      %v2634 = vunpack.c.l.b16 %v2590
      %v2635 = vunpack.c.l.b16 %v2594
      %v2636 = vunpack.c.l.b16 %v2597
      %v2637 = vunpack.c.l.b16 %v2601
      %v2638 = vunpack.c.l.b16 %v2604
      %v2639 = vpack.c.b16 %v2608, %v2607
      %v2640 = vpack.c.b16 %v2610, %v2609
      %v2641 = vpack.c.b16 %v2612, %v2611
      %v2642 = vpack.c.b16 %v2614, %v2613
      %v2643 = vpack.c.b16 %v2616, %v2615
      %v2644 = vpack.c.b16 %v2618, %v2617
      %v2645 = vpack.c.b16 %v2620, %v2619
      %v2646 = vpack.c.b16 %v2622, %v2621
      %v2647 = vpack.c.b16 %v2624, %v2623
      %v2648 = vpack.c.b16 %v2626, %v2625
      %v2649 = vpack.c.b16 %v2628, %v2627
      %v2650 = vpack.c.b16 %v2630, %v2629
      %v2651 = vpack.c.b16 %v2632, %v2631
      %v2652 = vpack.c.b16 %v2634, %v2633
      %v2653 = vpack.c.b16 %v2636, %v2635
      %v2654 = vpack.c.b16 %v2638, %v2637
      %v2656 = vsel %vm738, %v2639, 0
      %v2659 = vsel %vm738, %v2640, 0
      %v2662 = vsel %vm738, %v2641, 0
      %v2665 = vsel %vm738, %v2642, 0
      %v2668 = vsel %vm738, %v2643, 0
      %v2671 = vsel %vm738, %v2644, 0
      %v2674 = vsel %vm738, %v2645, 0
      %v2677 = vsel %vm738, %v2646, 0
      %v2680 = vsel %vm738, %v2647, 0
      %v2683 = vsel %vm738, %v2648, 0
      %v2686 = vsel %vm738, %v2649, 0
      %v2689 = vsel %vm738, %v2650, 0
      %v2692 = vsel %vm738, %v2651, 0
      %v2695 = vsel %vm738, %v2652, 0
      %v2698 = vsel %vm738, %v2653, 0
      %v2701 = vsel %vm738, %v2654, 0
      %v2704 = vsel %vm787, %v2606, 0
      %2706 = vmatpush.bf16.msra.mxu0 0
      %2707 = vmatpush.bf16.msra.mxu0 0
      %2708 = vmatpush.bf16.msra.mxu0 0
      %2709 = vmatpush.bf16.msra.mxu0 0
      %2710 = vmatpush.bf16.msra.mxu0 0
      %2711 = vmatpush.bf16.msra.mxu0 0
      %2712 = vmatpush.bf16.msra.mxu0 0
      %2713 = vmatpush.bf16.msra.mxu0 %v2704
      %2714 = vmatmul.bf16.gmra.mxu0 %v2656
      %v2715 = vpop.f32.mrf.mxu0
      %v2716 = vadd.f32 0.0, %v2715
      %v2717 = vpop.f32.mrf.mxu0
      %v2718 = vadd.f32 0.0, %v2717
      %2719 = vmatmul.bf16.gmra.mxu0 %v2659
      %v2720 = vpop.f32.mrf.mxu0
      %v2721 = vadd.f32 0.0, %v2720
      %v2722 = vpop.f32.mrf.mxu0
      %v2723 = vadd.f32 0.0, %v2722
      %2724 = vmatmul.bf16.gmra.mxu0 %v2662
      %v2725 = vpop.f32.mrf.mxu0
      %v2726 = vadd.f32 0.0, %v2725
      %v2727 = vpop.f32.mrf.mxu0
      %v2728 = vadd.f32 0.0, %v2727
      %2729 = vmatmul.bf16.gmra.mxu0 %v2665
      %v2730 = vpop.f32.mrf.mxu0
      %v2731 = vadd.f32 0.0, %v2730
      %v2732 = vpop.f32.mrf.mxu0
      %v2733 = vadd.f32 0.0, %v2732
      %2734 = vmatmul.bf16.gmra.mxu0 %v2668
      %v2735 = vpop.f32.mrf.mxu0
      %v2736 = vadd.f32 0.0, %v2735
      %v2737 = vpop.f32.mrf.mxu0
      %v2738 = vadd.f32 0.0, %v2737
      %2739 = vmatmul.bf16.gmra.mxu0 %v2671
      %v2740 = vpop.f32.mrf.mxu0
      %v2741 = vadd.f32 0.0, %v2740
      %v2742 = vpop.f32.mrf.mxu0
      %v2743 = vadd.f32 0.0, %v2742
      %2744 = vmatmul.bf16.gmra.mxu0 %v2674
      %v2745 = vpop.f32.mrf.mxu0
      %v2746 = vadd.f32 0.0, %v2745
      %v2747 = vpop.f32.mrf.mxu0
      %v2748 = vadd.f32 0.0, %v2747
      %2749 = vmatmul.bf16.gmra.mxu0 %v2677
      %v2750 = vpop.f32.mrf.mxu0
      %v2751 = vadd.f32 0.0, %v2750
      %v2752 = vpop.f32.mrf.mxu0
      %v2753 = vadd.f32 0.0, %v2752
      %2754 = vmatmul.bf16.gmra.mxu0 %v2680
      %v2755 = vpop.f32.mrf.mxu0
      %v2756 = vadd.f32 0.0, %v2755
      %v2757 = vpop.f32.mrf.mxu0
      %v2758 = vadd.f32 0.0, %v2757
      %2759 = vmatmul.bf16.gmra.mxu0 %v2683
      %v2760 = vpop.f32.mrf.mxu0
      %v2761 = vadd.f32 0.0, %v2760
      %v2762 = vpop.f32.mrf.mxu0
      %v2763 = vadd.f32 0.0, %v2762
      %2764 = vmatmul.bf16.gmra.mxu0 %v2686
      %v2765 = vpop.f32.mrf.mxu0
      %v2766 = vadd.f32 0.0, %v2765
      %v2767 = vpop.f32.mrf.mxu0
      %v2768 = vadd.f32 0.0, %v2767
      %2769 = vmatmul.bf16.gmra.mxu0 %v2689
      %v2770 = vpop.f32.mrf.mxu0
      %v2771 = vadd.f32 0.0, %v2770
      %v2772 = vpop.f32.mrf.mxu0
      %v2773 = vadd.f32 0.0, %v2772
      %2774 = vmatmul.bf16.gmra.mxu0 %v2692
      %v2775 = vpop.f32.mrf.mxu0
      %v2776 = vadd.f32 0.0, %v2775
      %v2777 = vpop.f32.mrf.mxu0
      %v2778 = vadd.f32 0.0, %v2777
      %2779 = vmatmul.bf16.gmra.mxu0 %v2695
      %v2780 = vpop.f32.mrf.mxu0
      %v2781 = vadd.f32 0.0, %v2780
      %v2782 = vpop.f32.mrf.mxu0
      %v2783 = vadd.f32 0.0, %v2782
      %2784 = vmatmul.bf16.gmra.mxu0 %v2698
      %v2785 = vpop.f32.mrf.mxu0
      %v2786 = vadd.f32 0.0, %v2785
      %v2787 = vpop.f32.mrf.mxu0
      %v2788 = vadd.f32 0.0, %v2787
      %2789 = vmatmul.bf16.gmra.mxu0 %v2701
      %v2790 = vpop.f32.mrf.mxu0
      %v2791 = vadd.f32 0.0, %v2790
      %v2792 = vpop.f32.mrf.mxu0
      %v2793 = vadd.f32 0.0, %v2792
      %2794 = vdwg.mxu0
      %v2795 = vadd.f32 %v2397, %v2716
      %v2796 = vadd.f32 %v2398, %v2718
      %v2797 = vadd.f32 %v2399, %v2721
      %v2798 = vadd.f32 %v2400, %v2723
      %v2799 = vadd.f32 %v2401, %v2726
      %v2800 = vadd.f32 %v2402, %v2728
      %v2801 = vadd.f32 %v2403, %v2731
      %v2802 = vadd.f32 %v2404, %v2733
      %v2803 = vadd.f32 %v2405, %v2736
      %v2804 = vadd.f32 %v2406, %v2738
      %v2805 = vadd.f32 %v2407, %v2741
      %v2806 = vadd.f32 %v2408, %v2743
      %v2807 = vadd.f32 %v2409, %v2746
      %v2808 = vadd.f32 %v2410, %v2748
      %v2809 = vadd.f32 %v2411, %v2751
      %v2810 = vadd.f32 %v2412, %v2753
      %v2811 = vadd.f32 %v2413, %v2756
      %v2812 = vadd.f32 %v2414, %v2758
      %v2813 = vadd.f32 %v2415, %v2761
      %v2814 = vadd.f32 %v2416, %v2763
      %v2815 = vadd.f32 %v2417, %v2766
      %v2816 = vadd.f32 %v2418, %v2768
      %v2817 = vadd.f32 %v2419, %v2771
      %v2818 = vadd.f32 %v2420, %v2773
      %v2819 = vadd.f32 %v2421, %v2776
      %v2820 = vadd.f32 %v2422, %v2778
      %v2821 = vadd.f32 %v2423, %v2781
      %v2822 = vadd.f32 %v2424, %v2783
      %v2823 = vadd.f32 %v2425, %v2786
      %v2824 = vadd.f32 %v2426, %v2788
      %v2825 = vadd.f32 %v2427, %v2791
      %v2826 = vadd.f32 %v2428, %v2793
      %s2827 = sadd.s32 %s248, 2
      %s2828 = smul.u32 %s2827, 3
      %s2829 = smul.addr %s2828, 4
      %s2830 = scalar_lea.vmem %s226, %s2829
      %v2831 = vld [vmem:[%s2830] sm:$0xf]
      %v2832 = vld [vmem:[%s2830 + $0x4] sm:$0xf]
      %v2833 = vld [vmem:[%s2830 + $0xc] sm:$0xf]
      %v2834 = vld [vmem:[%s2830 + $0x10] sm:$0xf]
      %v2835 = vld [vmem:[%s2830 + $0x18] sm:$0xf]
      %v2836 = vld [vmem:[%s2830 + $0x1c] sm:$0xf]
      %v2837 = vld [vmem:[%s2830 + $0x24] sm:$0xf]
      %v2838 = vld [vmem:[%s2830 + $0x28] sm:$0xf]
      %v2839 = vld [vmem:[%s2830 + $0x30] sm:$0xf]
      %v2840 = vld [vmem:[%s2830 + $0x34] sm:$0xf]
      %v2841 = vld [vmem:[%s2830 + $0x3c] sm:$0xf]
      %v2842 = vld [vmem:[%s2830 + $0x40] sm:$0xf]
      %v2843 = vld [vmem:[%s2830 + $0x48] sm:$0xf]
      %v2844 = vld [vmem:[%s2830 + $0x4c] sm:$0xf]
      %v2845 = vld [vmem:[%s2830 + $0x54] sm:$0xf]
      %v2846 = vld [vmem:[%s2830 + $0x58] sm:$0xf]
      %v2847 = vld [vmem:[%s2830 + $0x60] sm:$0xf]
      %v2848 = vld [vmem:[%s2830 + $0x64] sm:$0xf]
      %v2849 = vld [vmem:[%s2830 + $0x6c] sm:$0xf]
      %v2850 = vld [vmem:[%s2830 + $0x70] sm:$0xf]
      %v2851 = vld [vmem:[%s2830 + $0x78] sm:$0xf]
      %v2852 = vld [vmem:[%s2830 + $0x7c] sm:$0xf]
      %v2853 = vld [vmem:[%s2830 + $0x84] sm:$0xf]
      %v2854 = vld [vmem:[%s2830 + $0x88] sm:$0xf]
      %v2855 = vld [vmem:[%s2830 + $0x90] sm:$0xf]
      %v2856 = vld [vmem:[%s2830 + $0x94] sm:$0xf]
      %v2857 = vld [vmem:[%s2830 + $0x9c] sm:$0xf]
      %v2858 = vld [vmem:[%s2830 + $0xa0] sm:$0xf]
      %v2859 = vld [vmem:[%s2830 + $0xa8] sm:$0xf]
      %v2860 = vld [vmem:[%s2830 + $0xac] sm:$0xf]
      %v2861 = vld [vmem:[%s2830 + $0xb4] sm:$0xf]
      %v2862 = vld [vmem:[%s2830 + $0xb8] sm:$0xf]
      %s2863 = scalar_lea.vmem %s1, 24
      %v2864 = vld [vmem:[%s2863] sm:$0xf]
      %v2897 = vunpack.c.l.b16 %v2831
      %v2898 = vunpack.c.l.b16 %v2832
      %v2899 = vunpack.c.l.b16 %v2833
      %v2900 = vunpack.c.l.b16 %v2834
      %v2901 = vunpack.c.l.b16 %v2835
      %v2902 = vunpack.c.l.b16 %v2836
      %v2903 = vunpack.c.l.b16 %v2837
      %v2904 = vunpack.c.l.b16 %v2838
      %v2905 = vunpack.c.l.b16 %v2839
      %v2906 = vunpack.c.l.b16 %v2840
      %v2907 = vunpack.c.l.b16 %v2841
      %v2908 = vunpack.c.l.b16 %v2842
      %v2909 = vunpack.c.l.b16 %v2843
      %v2910 = vunpack.c.l.b16 %v2844
      %v2911 = vunpack.c.l.b16 %v2845
      %v2912 = vunpack.c.l.b16 %v2846
      %v2913 = vunpack.c.l.b16 %v2847
      %v2914 = vunpack.c.l.b16 %v2848
      %v2915 = vunpack.c.l.b16 %v2849
      %v2916 = vunpack.c.l.b16 %v2850
      %v2917 = vunpack.c.l.b16 %v2851
      %v2918 = vunpack.c.l.b16 %v2852
      %v2919 = vunpack.c.l.b16 %v2853
      %v2920 = vunpack.c.l.b16 %v2854
      %v2921 = vunpack.c.l.b16 %v2855
      %v2922 = vunpack.c.l.b16 %v2856
      %v2923 = vunpack.c.l.b16 %v2857
      %v2924 = vunpack.c.l.b16 %v2858
      %v2925 = vunpack.c.l.b16 %v2859
      %v2926 = vunpack.c.l.b16 %v2860
      %v2927 = vunpack.c.l.b16 %v2861
      %v2928 = vunpack.c.l.b16 %v2862
      %v2929 = vpack.c.b16 %v2898, %v2897
      %v2930 = vpack.c.b16 %v2900, %v2899
      %v2931 = vpack.c.b16 %v2902, %v2901
      %v2932 = vpack.c.b16 %v2904, %v2903
      %v2933 = vpack.c.b16 %v2906, %v2905
      %v2934 = vpack.c.b16 %v2908, %v2907
      %v2935 = vpack.c.b16 %v2910, %v2909
      %v2936 = vpack.c.b16 %v2912, %v2911
      %v2937 = vpack.c.b16 %v2914, %v2913
      %v2938 = vpack.c.b16 %v2916, %v2915
      %v2939 = vpack.c.b16 %v2918, %v2917
      %v2940 = vpack.c.b16 %v2920, %v2919
      %v2941 = vpack.c.b16 %v2922, %v2921
      %v2942 = vpack.c.b16 %v2924, %v2923
      %v2943 = vpack.c.b16 %v2926, %v2925
      %v2944 = vpack.c.b16 %v2928, %v2927
      %v2946 = vsel %vm738, %v2929, 0
      %v2949 = vsel %vm738, %v2930, 0
      %v2952 = vsel %vm738, %v2931, 0
      %v2955 = vsel %vm738, %v2932, 0
      %v2958 = vsel %vm738, %v2933, 0
      %v2961 = vsel %vm738, %v2934, 0
      %v2964 = vsel %vm738, %v2935, 0
      %v2967 = vsel %vm738, %v2936, 0
      %v2970 = vsel %vm738, %v2937, 0
      %v2973 = vsel %vm738, %v2938, 0
      %v2976 = vsel %vm738, %v2939, 0
      %v2979 = vsel %vm738, %v2940, 0
      %v2982 = vsel %vm738, %v2941, 0
      %v2985 = vsel %vm738, %v2942, 0
      %v2988 = vsel %vm738, %v2943, 0
      %v2991 = vsel %vm738, %v2944, 0
      %v2994 = vsel %vm787, %v2864, 0
      %2996 = vmatpush.bf16.msra.mxu0 0
      %2997 = vmatpush.bf16.msra.mxu0 0
      %2998 = vmatpush.bf16.msra.mxu0 0
      %2999 = vmatpush.bf16.msra.mxu0 0
      %3000 = vmatpush.bf16.msra.mxu0 0
      %3001 = vmatpush.bf16.msra.mxu0 0
      %3002 = vmatpush.bf16.msra.mxu0 0
      %3003 = vmatpush.bf16.msra.mxu0 %v2994
      %3004 = vmatmul.bf16.gmra.mxu0 %v2946
      %v3005 = vpop.f32.mrf.mxu0
      %v3006 = vadd.f32 0.0, %v3005
      %v3007 = vpop.f32.mrf.mxu0
      %v3008 = vadd.f32 0.0, %v3007
      %3009 = vmatmul.bf16.gmra.mxu0 %v2949
      %v3010 = vpop.f32.mrf.mxu0
      %v3011 = vadd.f32 0.0, %v3010
      %v3012 = vpop.f32.mrf.mxu0
      %v3013 = vadd.f32 0.0, %v3012
      %3014 = vmatmul.bf16.gmra.mxu0 %v2952
      %v3015 = vpop.f32.mrf.mxu0
      %v3016 = vadd.f32 0.0, %v3015
      %v3017 = vpop.f32.mrf.mxu0
      %v3018 = vadd.f32 0.0, %v3017
      %3019 = vmatmul.bf16.gmra.mxu0 %v2955
      %v3020 = vpop.f32.mrf.mxu0
      %v3021 = vadd.f32 0.0, %v3020
      %v3022 = vpop.f32.mrf.mxu0
      %v3023 = vadd.f32 0.0, %v3022
      %3024 = vmatmul.bf16.gmra.mxu0 %v2958
      %v3025 = vpop.f32.mrf.mxu0
      %v3026 = vadd.f32 0.0, %v3025
      %v3027 = vpop.f32.mrf.mxu0
      %v3028 = vadd.f32 0.0, %v3027
      %3029 = vmatmul.bf16.gmra.mxu0 %v2961
      %v3030 = vpop.f32.mrf.mxu0
      %v3031 = vadd.f32 0.0, %v3030
      %v3032 = vpop.f32.mrf.mxu0
      %v3033 = vadd.f32 0.0, %v3032
      %3034 = vmatmul.bf16.gmra.mxu0 %v2964
      %v3035 = vpop.f32.mrf.mxu0
      %v3036 = vadd.f32 0.0, %v3035
      %v3037 = vpop.f32.mrf.mxu0
      %v3038 = vadd.f32 0.0, %v3037
      %3039 = vmatmul.bf16.gmra.mxu0 %v2967
      %v3040 = vpop.f32.mrf.mxu0
      %v3041 = vadd.f32 0.0, %v3040
      %v3042 = vpop.f32.mrf.mxu0
      %v3043 = vadd.f32 0.0, %v3042
      %3044 = vmatmul.bf16.gmra.mxu0 %v2970
      %v3045 = vpop.f32.mrf.mxu0
      %v3046 = vadd.f32 0.0, %v3045
      %v3047 = vpop.f32.mrf.mxu0
      %v3048 = vadd.f32 0.0, %v3047
      %3049 = vmatmul.bf16.gmra.mxu0 %v2973
      %v3050 = vpop.f32.mrf.mxu0
      %v3051 = vadd.f32 0.0, %v3050
      %v3052 = vpop.f32.mrf.mxu0
      %v3053 = vadd.f32 0.0, %v3052
      %3054 = vmatmul.bf16.gmra.mxu0 %v2976
      %v3055 = vpop.f32.mrf.mxu0
      %v3056 = vadd.f32 0.0, %v3055
      %v3057 = vpop.f32.mrf.mxu0
      %v3058 = vadd.f32 0.0, %v3057
      %3059 = vmatmul.bf16.gmra.mxu0 %v2979
      %v3060 = vpop.f32.mrf.mxu0
      %v3061 = vadd.f32 0.0, %v3060
      %v3062 = vpop.f32.mrf.mxu0
      %v3063 = vadd.f32 0.0, %v3062
      %3064 = vmatmul.bf16.gmra.mxu0 %v2982
      %v3065 = vpop.f32.mrf.mxu0
      %v3066 = vadd.f32 0.0, %v3065
      %v3067 = vpop.f32.mrf.mxu0
      %v3068 = vadd.f32 0.0, %v3067
      %3069 = vmatmul.bf16.gmra.mxu0 %v2985
      %v3070 = vpop.f32.mrf.mxu0
      %v3071 = vadd.f32 0.0, %v3070
      %v3072 = vpop.f32.mrf.mxu0
      %v3073 = vadd.f32 0.0, %v3072
      %3074 = vmatmul.bf16.gmra.mxu0 %v2988
      %v3075 = vpop.f32.mrf.mxu0
      %v3076 = vadd.f32 0.0, %v3075
      %v3077 = vpop.f32.mrf.mxu0
      %v3078 = vadd.f32 0.0, %v3077
      %3079 = vmatmul.bf16.gmra.mxu0 %v2991
      %v3080 = vpop.f32.mrf.mxu0
      %v3081 = vadd.f32 0.0, %v3080
      %v3082 = vpop.f32.mrf.mxu0
      %v3083 = vadd.f32 0.0, %v3082
      %3084 = vdwg.mxu0
      %v3085 = vadd.f32 %v2795, %v3006
      %v3086 = vadd.f32 %v2796, %v3008
      %v3087 = vadd.f32 %v2797, %v3011
      %v3088 = vadd.f32 %v2798, %v3013
      %v3089 = vadd.f32 %v2799, %v3016
      %v3090 = vadd.f32 %v2800, %v3018
      %v3091 = vadd.f32 %v2801, %v3021
      %v3092 = vadd.f32 %v2802, %v3023
      %v3093 = vadd.f32 %v2803, %v3026
      %v3094 = vadd.f32 %v2804, %v3028
      %v3095 = vadd.f32 %v2805, %v3031
      %v3096 = vadd.f32 %v2806, %v3033
      %v3097 = vadd.f32 %v2807, %v3036
      %v3098 = vadd.f32 %v2808, %v3038
      %v3099 = vadd.f32 %v2809, %v3041
      %v3100 = vadd.f32 %v2810, %v3043
      %v3101 = vadd.f32 %v2811, %v3046
      %v3102 = vadd.f32 %v2812, %v3048
      %v3103 = vadd.f32 %v2813, %v3051
      %v3104 = vadd.f32 %v2814, %v3053
      %v3105 = vadd.f32 %v2815, %v3056
      %v3106 = vadd.f32 %v2816, %v3058
      %v3107 = vadd.f32 %v2817, %v3061
      %v3108 = vadd.f32 %v2818, %v3063
      %v3109 = vadd.f32 %v2819, %v3066
      %v3110 = vadd.f32 %v2820, %v3068
      %v3111 = vadd.f32 %v2821, %v3071
      %v3112 = vadd.f32 %v2822, %v3073
      %v3113 = vadd.f32 %v2823, %v3076
      %v3114 = vadd.f32 %v2824, %v3078
      %v3115 = vadd.f32 %v2825, %v3081
      %v3116 = vadd.f32 %v2826, %v3083
      %v3117 = vld [vmem:[%s2830] sm:$0xf]
      %v3118 = vld [vmem:[%s2830 + $0x4] sm:$0xf]
      %v3119 = vld [vmem:[%s2830 + $0x8] sm:$0x1]
      %v3120 = vld [vmem:[%s2830 + $0xc] sm:$0xf]
      %v3121 = vld [vmem:[%s2830 + $0x10] sm:$0xf]
      %v3122 = vld [vmem:[%s2830 + $0x14] sm:$0x1]
      %v3123 = vld [vmem:[%s2830 + $0x18] sm:$0xf]
      %v3124 = vld [vmem:[%s2830 + $0x1c] sm:$0xf]
      %v3125 = vld [vmem:[%s2830 + $0x20] sm:$0x1]
      %v3126 = vld [vmem:[%s2830 + $0x24] sm:$0xf]
      %v3127 = vld [vmem:[%s2830 + $0x28] sm:$0xf]
      %v3128 = vld [vmem:[%s2830 + $0x2c] sm:$0x1]
      %v3129 = vld [vmem:[%s2830 + $0x30] sm:$0xf]
      %v3130 = vld [vmem:[%s2830 + $0x34] sm:$0xf]
      %v3131 = vld [vmem:[%s2830 + $0x38] sm:$0x1]
      %v3132 = vld [vmem:[%s2830 + $0x3c] sm:$0xf]
      %v3133 = vld [vmem:[%s2830 + $0x40] sm:$0xf]
      %v3134 = vld [vmem:[%s2830 + $0x44] sm:$0x1]
      %v3135 = vld [vmem:[%s2830 + $0x48] sm:$0xf]
      %v3136 = vld [vmem:[%s2830 + $0x4c] sm:$0xf]
      %v3137 = vld [vmem:[%s2830 + $0x50] sm:$0x1]
      %v3138 = vld [vmem:[%s2830 + $0x54] sm:$0xf]
      %v3139 = vld [vmem:[%s2830 + $0x58] sm:$0xf]
      %v3140 = vld [vmem:[%s2830 + $0x5c] sm:$0x1]
      %v3141 = vld [vmem:[%s2830 + $0x60] sm:$0xf]
      %v3142 = vld [vmem:[%s2830 + $0x64] sm:$0xf]
      %v3143 = vld [vmem:[%s2830 + $0x68] sm:$0x1]
      %v3144 = vld [vmem:[%s2830 + $0x6c] sm:$0xf]
      %v3145 = vld [vmem:[%s2830 + $0x70] sm:$0xf]
      %v3146 = vld [vmem:[%s2830 + $0x74] sm:$0x1]
      %v3147 = vld [vmem:[%s2830 + $0x78] sm:$0xf]
      %v3148 = vld [vmem:[%s2830 + $0x7c] sm:$0xf]
      %v3149 = vld [vmem:[%s2830 + $0x80] sm:$0x1]
      %v3150 = vld [vmem:[%s2830 + $0x84] sm:$0xf]
      %v3151 = vld [vmem:[%s2830 + $0x88] sm:$0xf]
      %v3152 = vld [vmem:[%s2830 + $0x8c] sm:$0x1]
      %v3153 = vld [vmem:[%s2830 + $0x90] sm:$0xf]
      %v3154 = vld [vmem:[%s2830 + $0x94] sm:$0xf]
      %v3155 = vld [vmem:[%s2830 + $0x98] sm:$0x1]
      %v3156 = vld [vmem:[%s2830 + $0x9c] sm:$0xf]
      %v3157 = vld [vmem:[%s2830 + $0xa0] sm:$0xf]
      %v3158 = vld [vmem:[%s2830 + $0xa4] sm:$0x1]
      %v3159 = vld [vmem:[%s2830 + $0xa8] sm:$0xf]
      %v3160 = vld [vmem:[%s2830 + $0xac] sm:$0xf]
      %v3161 = vld [vmem:[%s2830 + $0xb0] sm:$0x1]
      %v3162 = vld [vmem:[%s2830 + $0xb4] sm:$0xf]
      %v3163 = vld [vmem:[%s2830 + $0xb8] sm:$0xf]
      %v3164 = vld [vmem:[%s2830 + $0xbc] sm:$0x1]
      %v3166 = vshrl.u32 %v3117, 16
      %v3168 = vrot.slane %v3166, 4
      %v3169 = vshll.u32 %v3117, 16
      %v3171 = vrot.slane %v3169, 5
      %v3172 = vor.u32 %v3168, %v3171
      %v3173 = vrot.slane %v3172, 4
      %v3175 = vshll.u32 %v3118, 16
      %v3177 = vrot.slane %v3175, 5
      %v3178 = vsel %vm303, %v3173, %v3177
      %v3179 = vshrl.u32 %v3118, 16
      %v3181 = vrot.slane %v3179, 4
      %v3182 = vor.u32 %v3181, %v3177
      %v3183 = vrot.slane %v3182, 4
      %v3185 = vshll.u32 %v3119, 16
      %v3187 = vrot.slane %v3185, 5
      %v3188 = vsel %vm303, %v3183, %v3187
      %v3190 = vshrl.u32 %v3120, 16
      %v3192 = vrot.slane %v3190, 4
      %v3193 = vshll.u32 %v3120, 16
      %v3195 = vrot.slane %v3193, 5
      %v3196 = vor.u32 %v3192, %v3195
      %v3197 = vrot.slane %v3196, 4
      %v3199 = vshll.u32 %v3121, 16
      %v3201 = vrot.slane %v3199, 5
      %v3202 = vsel %vm303, %v3197, %v3201
      %v3203 = vshrl.u32 %v3121, 16
      %v3205 = vrot.slane %v3203, 4
      %v3206 = vor.u32 %v3205, %v3201
      %v3207 = vrot.slane %v3206, 4
      %v3209 = vshll.u32 %v3122, 16
      %v3211 = vrot.slane %v3209, 5
      %v3212 = vsel %vm303, %v3207, %v3211
      %v3214 = vshrl.u32 %v3123, 16
      %v3216 = vrot.slane %v3214, 4
      %v3217 = vshll.u32 %v3123, 16
      %v3219 = vrot.slane %v3217, 5
      %v3220 = vor.u32 %v3216, %v3219
      %v3221 = vrot.slane %v3220, 4
      %v3223 = vshll.u32 %v3124, 16
      %v3225 = vrot.slane %v3223, 5
      %v3226 = vsel %vm303, %v3221, %v3225
      %v3227 = vshrl.u32 %v3124, 16
      %v3229 = vrot.slane %v3227, 4
      %v3230 = vor.u32 %v3229, %v3225
      %v3231 = vrot.slane %v3230, 4
      %v3233 = vshll.u32 %v3125, 16
      %v3235 = vrot.slane %v3233, 5
      %v3236 = vsel %vm303, %v3231, %v3235
      %v3238 = vshrl.u32 %v3126, 16
      %v3240 = vrot.slane %v3238, 4
      %v3241 = vshll.u32 %v3126, 16
      %v3243 = vrot.slane %v3241, 5
      %v3244 = vor.u32 %v3240, %v3243
      %v3245 = vrot.slane %v3244, 4
      %v3247 = vshll.u32 %v3127, 16
      %v3249 = vrot.slane %v3247, 5
      %v3250 = vsel %vm303, %v3245, %v3249
      %v3251 = vshrl.u32 %v3127, 16
      %v3253 = vrot.slane %v3251, 4
      %v3254 = vor.u32 %v3253, %v3249
      %v3255 = vrot.slane %v3254, 4
      %v3257 = vshll.u32 %v3128, 16
      %v3259 = vrot.slane %v3257, 5
      %v3260 = vsel %vm303, %v3255, %v3259
      %v3262 = vshrl.u32 %v3129, 16
      %v3264 = vrot.slane %v3262, 4
      %v3265 = vshll.u32 %v3129, 16
      %v3267 = vrot.slane %v3265, 5
      %v3268 = vor.u32 %v3264, %v3267
      %v3269 = vrot.slane %v3268, 4
      %v3271 = vshll.u32 %v3130, 16
      %v3273 = vrot.slane %v3271, 5
      %v3274 = vsel %vm303, %v3269, %v3273
      %v3275 = vshrl.u32 %v3130, 16
      %v3277 = vrot.slane %v3275, 4
      %v3278 = vor.u32 %v3277, %v3273
      %v3279 = vrot.slane %v3278, 4
      %v3281 = vshll.u32 %v3131, 16
      %v3283 = vrot.slane %v3281, 5
      %v3284 = vsel %vm303, %v3279, %v3283
      %v3286 = vshrl.u32 %v3132, 16
      %v3288 = vrot.slane %v3286, 4
      %v3289 = vshll.u32 %v3132, 16
      %v3291 = vrot.slane %v3289, 5
      %v3292 = vor.u32 %v3288, %v3291
      %v3293 = vrot.slane %v3292, 4
      %v3295 = vshll.u32 %v3133, 16
      %v3297 = vrot.slane %v3295, 5
      %v3298 = vsel %vm303, %v3293, %v3297
      %v3299 = vshrl.u32 %v3133, 16
      %v3301 = vrot.slane %v3299, 4
      %v3302 = vor.u32 %v3301, %v3297
      %v3303 = vrot.slane %v3302, 4
      %v3305 = vshll.u32 %v3134, 16
      %v3307 = vrot.slane %v3305, 5
      %v3308 = vsel %vm303, %v3303, %v3307
      %v3310 = vshrl.u32 %v3135, 16
      %v3312 = vrot.slane %v3310, 4
      %v3313 = vshll.u32 %v3135, 16
      %v3315 = vrot.slane %v3313, 5
      %v3316 = vor.u32 %v3312, %v3315
      %v3317 = vrot.slane %v3316, 4
      %v3319 = vshll.u32 %v3136, 16
      %v3321 = vrot.slane %v3319, 5
      %v3322 = vsel %vm303, %v3317, %v3321
      %v3323 = vshrl.u32 %v3136, 16
      %v3325 = vrot.slane %v3323, 4
      %v3326 = vor.u32 %v3325, %v3321
      %v3327 = vrot.slane %v3326, 4
      %v3329 = vshll.u32 %v3137, 16
      %v3331 = vrot.slane %v3329, 5
      %v3332 = vsel %vm303, %v3327, %v3331
      %v3334 = vshrl.u32 %v3138, 16
      %v3336 = vrot.slane %v3334, 4
      %v3337 = vshll.u32 %v3138, 16
      %v3339 = vrot.slane %v3337, 5
      %v3340 = vor.u32 %v3336, %v3339
      %v3341 = vrot.slane %v3340, 4
      %v3343 = vshll.u32 %v3139, 16
      %v3345 = vrot.slane %v3343, 5
      %v3346 = vsel %vm303, %v3341, %v3345
      %v3347 = vshrl.u32 %v3139, 16
      %v3349 = vrot.slane %v3347, 4
      %v3350 = vor.u32 %v3349, %v3345
      %v3351 = vrot.slane %v3350, 4
      %v3353 = vshll.u32 %v3140, 16
      %v3355 = vrot.slane %v3353, 5
      %v3356 = vsel %vm303, %v3351, %v3355
      %v3358 = vshrl.u32 %v3141, 16
      %v3360 = vrot.slane %v3358, 4
      %v3361 = vshll.u32 %v3141, 16
      %v3363 = vrot.slane %v3361, 5
      %v3364 = vor.u32 %v3360, %v3363
      %v3365 = vrot.slane %v3364, 4
      %v3367 = vshll.u32 %v3142, 16
      %v3369 = vrot.slane %v3367, 5
      %v3370 = vsel %vm303, %v3365, %v3369
      %v3371 = vshrl.u32 %v3142, 16
      %v3373 = vrot.slane %v3371, 4
      %v3374 = vor.u32 %v3373, %v3369
      %v3375 = vrot.slane %v3374, 4
      %v3377 = vshll.u32 %v3143, 16
      %v3379 = vrot.slane %v3377, 5
      %v3380 = vsel %vm303, %v3375, %v3379
      %v3382 = vshrl.u32 %v3144, 16
      %v3384 = vrot.slane %v3382, 4
      %v3385 = vshll.u32 %v3144, 16
      %v3387 = vrot.slane %v3385, 5
      %v3388 = vor.u32 %v3384, %v3387
      %v3389 = vrot.slane %v3388, 4
      %v3391 = vshll.u32 %v3145, 16
      %v3393 = vrot.slane %v3391, 5
      %v3394 = vsel %vm303, %v3389, %v3393
      %v3395 = vshrl.u32 %v3145, 16
      %v3397 = vrot.slane %v3395, 4
      %v3398 = vor.u32 %v3397, %v3393
      %v3399 = vrot.slane %v3398, 4
      %v3401 = vshll.u32 %v3146, 16
      %v3403 = vrot.slane %v3401, 5
      %v3404 = vsel %vm303, %v3399, %v3403
      %v3406 = vshrl.u32 %v3147, 16
      %v3408 = vrot.slane %v3406, 4
      %v3409 = vshll.u32 %v3147, 16
      %v3411 = vrot.slane %v3409, 5
      %v3412 = vor.u32 %v3408, %v3411
      %v3413 = vrot.slane %v3412, 4
      %v3415 = vshll.u32 %v3148, 16
      %v3417 = vrot.slane %v3415, 5
      %v3418 = vsel %vm303, %v3413, %v3417
      %v3419 = vshrl.u32 %v3148, 16
      %v3421 = vrot.slane %v3419, 4
      %v3422 = vor.u32 %v3421, %v3417
      %v3423 = vrot.slane %v3422, 4
      %v3425 = vshll.u32 %v3149, 16
      %v3427 = vrot.slane %v3425, 5
      %v3428 = vsel %vm303, %v3423, %v3427
      %v3430 = vshrl.u32 %v3150, 16
      %v3432 = vrot.slane %v3430, 4
      %v3433 = vshll.u32 %v3150, 16
      %v3435 = vrot.slane %v3433, 5
      %v3436 = vor.u32 %v3432, %v3435
      %v3437 = vrot.slane %v3436, 4
      %v3439 = vshll.u32 %v3151, 16
      %v3441 = vrot.slane %v3439, 5
      %v3442 = vsel %vm303, %v3437, %v3441
      %v3443 = vshrl.u32 %v3151, 16
      %v3445 = vrot.slane %v3443, 4
      %v3446 = vor.u32 %v3445, %v3441
      %v3447 = vrot.slane %v3446, 4
      %v3449 = vshll.u32 %v3152, 16
      %v3451 = vrot.slane %v3449, 5
      %v3452 = vsel %vm303, %v3447, %v3451
      %v3454 = vshrl.u32 %v3153, 16
      %v3456 = vrot.slane %v3454, 4
      %v3457 = vshll.u32 %v3153, 16
      %v3459 = vrot.slane %v3457, 5
      %v3460 = vor.u32 %v3456, %v3459
      %v3461 = vrot.slane %v3460, 4
      %v3463 = vshll.u32 %v3154, 16
      %v3465 = vrot.slane %v3463, 5
      %v3466 = vsel %vm303, %v3461, %v3465
      %v3467 = vshrl.u32 %v3154, 16
      %v3469 = vrot.slane %v3467, 4
      %v3470 = vor.u32 %v3469, %v3465
      %v3471 = vrot.slane %v3470, 4
      %v3473 = vshll.u32 %v3155, 16
      %v3475 = vrot.slane %v3473, 5
      %v3476 = vsel %vm303, %v3471, %v3475
      %v3478 = vshrl.u32 %v3156, 16
      %v3480 = vrot.slane %v3478, 4
      %v3481 = vshll.u32 %v3156, 16
      %v3483 = vrot.slane %v3481, 5
      %v3484 = vor.u32 %v3480, %v3483
      %v3485 = vrot.slane %v3484, 4
      %v3487 = vshll.u32 %v3157, 16
      %v3489 = vrot.slane %v3487, 5
      %v3490 = vsel %vm303, %v3485, %v3489
      %v3491 = vshrl.u32 %v3157, 16
      %v3493 = vrot.slane %v3491, 4
      %v3494 = vor.u32 %v3493, %v3489
      %v3495 = vrot.slane %v3494, 4
      %v3497 = vshll.u32 %v3158, 16
      %v3499 = vrot.slane %v3497, 5
      %v3500 = vsel %vm303, %v3495, %v3499
      %v3502 = vshrl.u32 %v3159, 16
      %v3504 = vrot.slane %v3502, 4
      %v3505 = vshll.u32 %v3159, 16
      %v3507 = vrot.slane %v3505, 5
      %v3508 = vor.u32 %v3504, %v3507
      %v3509 = vrot.slane %v3508, 4
      %v3511 = vshll.u32 %v3160, 16
      %v3513 = vrot.slane %v3511, 5
      %v3514 = vsel %vm303, %v3509, %v3513
      %v3515 = vshrl.u32 %v3160, 16
      %v3517 = vrot.slane %v3515, 4
      %v3518 = vor.u32 %v3517, %v3513
      %v3519 = vrot.slane %v3518, 4
      %v3521 = vshll.u32 %v3161, 16
      %v3523 = vrot.slane %v3521, 5
      %v3524 = vsel %vm303, %v3519, %v3523
      %v3526 = vshrl.u32 %v3162, 16
      %v3528 = vrot.slane %v3526, 4
      %v3529 = vshll.u32 %v3162, 16
      %v3531 = vrot.slane %v3529, 5
      %v3532 = vor.u32 %v3528, %v3531
      %v3533 = vrot.slane %v3532, 4
      %v3535 = vshll.u32 %v3163, 16
      %v3537 = vrot.slane %v3535, 5
      %v3538 = vsel %vm303, %v3533, %v3537
      %v3539 = vshrl.u32 %v3163, 16
      %v3541 = vrot.slane %v3539, 4
      %v3542 = vor.u32 %v3541, %v3537
      %v3543 = vrot.slane %v3542, 4
      %v3545 = vshll.u32 %v3164, 16
      %v3547 = vrot.slane %v3545, 5
      %v3548 = vsel %vm303, %v3543, %v3547
      %s3549 = scalar_lea.vmem %s1, 28
      %v3550 = vld [vmem:[%s3549] sm:$0xf]
      %v3551 = vunpack.c.l.b16 %v3178
      %v3552 = vunpack.c.l.b16 %v3188
      %v3553 = vunpack.c.l.b16 %v3202
      %v3554 = vunpack.c.l.b16 %v3212
      %v3555 = vunpack.c.l.b16 %v3226
      %v3556 = vunpack.c.l.b16 %v3236
      %v3557 = vunpack.c.l.b16 %v3250
      %v3558 = vunpack.c.l.b16 %v3260
      %v3559 = vunpack.c.l.b16 %v3274
      %v3560 = vunpack.c.l.b16 %v3284
      %v3561 = vunpack.c.l.b16 %v3298
      %v3562 = vunpack.c.l.b16 %v3308
      %v3563 = vunpack.c.l.b16 %v3322
      %v3564 = vunpack.c.l.b16 %v3332
      %v3565 = vunpack.c.l.b16 %v3346
      %v3566 = vunpack.c.l.b16 %v3356
      %v3567 = vunpack.c.l.b16 %v3370
      %v3568 = vunpack.c.l.b16 %v3380
      %v3569 = vunpack.c.l.b16 %v3394
      %v3570 = vunpack.c.l.b16 %v3404
      %v3571 = vunpack.c.l.b16 %v3418
      %v3572 = vunpack.c.l.b16 %v3428
      %v3573 = vunpack.c.l.b16 %v3442
      %v3574 = vunpack.c.l.b16 %v3452
      %v3575 = vunpack.c.l.b16 %v3466
      %v3576 = vunpack.c.l.b16 %v3476
      %v3577 = vunpack.c.l.b16 %v3490
      %v3578 = vunpack.c.l.b16 %v3500
      %v3579 = vunpack.c.l.b16 %v3514
      %v3580 = vunpack.c.l.b16 %v3524
      %v3581 = vunpack.c.l.b16 %v3538
      %v3582 = vunpack.c.l.b16 %v3548
      %v3583 = vpack.c.b16 %v3552, %v3551
      %v3584 = vpack.c.b16 %v3554, %v3553
      %v3585 = vpack.c.b16 %v3556, %v3555
      %v3586 = vpack.c.b16 %v3558, %v3557
      %v3587 = vpack.c.b16 %v3560, %v3559
      %v3588 = vpack.c.b16 %v3562, %v3561
      %v3589 = vpack.c.b16 %v3564, %v3563
      %v3590 = vpack.c.b16 %v3566, %v3565
      %v3591 = vpack.c.b16 %v3568, %v3567
      %v3592 = vpack.c.b16 %v3570, %v3569
      %v3593 = vpack.c.b16 %v3572, %v3571
      %v3594 = vpack.c.b16 %v3574, %v3573
      %v3595 = vpack.c.b16 %v3576, %v3575
      %v3596 = vpack.c.b16 %v3578, %v3577
      %v3597 = vpack.c.b16 %v3580, %v3579
      %v3598 = vpack.c.b16 %v3582, %v3581
      %v3600 = vsel %vm738, %v3583, 0
      %v3603 = vsel %vm738, %v3584, 0
      %v3606 = vsel %vm738, %v3585, 0
      %v3609 = vsel %vm738, %v3586, 0
      %v3612 = vsel %vm738, %v3587, 0
      %v3615 = vsel %vm738, %v3588, 0
      %v3618 = vsel %vm738, %v3589, 0
      %v3621 = vsel %vm738, %v3590, 0
      %v3624 = vsel %vm738, %v3591, 0
      %v3627 = vsel %vm738, %v3592, 0
      %v3630 = vsel %vm738, %v3593, 0
      %v3633 = vsel %vm738, %v3594, 0
      %v3636 = vsel %vm738, %v3595, 0
      %v3639 = vsel %vm738, %v3596, 0
      %v3642 = vsel %vm738, %v3597, 0
      %v3645 = vsel %vm738, %v3598, 0
      %v3648 = vsel %vm787, %v3550, 0
      %3650 = vmatpush.bf16.msra.mxu0 0
      %3651 = vmatpush.bf16.msra.mxu0 0
      %3652 = vmatpush.bf16.msra.mxu0 0
      %3653 = vmatpush.bf16.msra.mxu0 0
      %3654 = vmatpush.bf16.msra.mxu0 0
      %3655 = vmatpush.bf16.msra.mxu0 0
      %3656 = vmatpush.bf16.msra.mxu0 0
      %3657 = vmatpush.bf16.msra.mxu0 %v3648
      %3658 = vmatmul.bf16.gmra.mxu0 %v3600
      %v3659 = vpop.f32.mrf.mxu0
      %v3660 = vadd.f32 0.0, %v3659
      %v3661 = vpop.f32.mrf.mxu0
      %v3662 = vadd.f32 0.0, %v3661
      %3663 = vmatmul.bf16.gmra.mxu0 %v3603
      %v3664 = vpop.f32.mrf.mxu0
      %v3665 = vadd.f32 0.0, %v3664
      %v3666 = vpop.f32.mrf.mxu0
      %v3667 = vadd.f32 0.0, %v3666
      %3668 = vmatmul.bf16.gmra.mxu0 %v3606
      %v3669 = vpop.f32.mrf.mxu0
      %v3670 = vadd.f32 0.0, %v3669
      %v3671 = vpop.f32.mrf.mxu0
      %v3672 = vadd.f32 0.0, %v3671
      %3673 = vmatmul.bf16.gmra.mxu0 %v3609
      %v3674 = vpop.f32.mrf.mxu0
      %v3675 = vadd.f32 0.0, %v3674
      %v3676 = vpop.f32.mrf.mxu0
      %v3677 = vadd.f32 0.0, %v3676
      %3678 = vmatmul.bf16.gmra.mxu0 %v3612
      %v3679 = vpop.f32.mrf.mxu0
      %v3680 = vadd.f32 0.0, %v3679
      %v3681 = vpop.f32.mrf.mxu0
      %v3682 = vadd.f32 0.0, %v3681
      %3683 = vmatmul.bf16.gmra.mxu0 %v3615
      %v3684 = vpop.f32.mrf.mxu0
      %v3685 = vadd.f32 0.0, %v3684
      %v3686 = vpop.f32.mrf.mxu0
      %v3687 = vadd.f32 0.0, %v3686
      %3688 = vmatmul.bf16.gmra.mxu0 %v3618
      %v3689 = vpop.f32.mrf.mxu0
      %v3690 = vadd.f32 0.0, %v3689
      %v3691 = vpop.f32.mrf.mxu0
      %v3692 = vadd.f32 0.0, %v3691
      %3693 = vmatmul.bf16.gmra.mxu0 %v3621
      %v3694 = vpop.f32.mrf.mxu0
      %v3695 = vadd.f32 0.0, %v3694
      %v3696 = vpop.f32.mrf.mxu0
      %v3697 = vadd.f32 0.0, %v3696
      %3698 = vmatmul.bf16.gmra.mxu0 %v3624
      %v3699 = vpop.f32.mrf.mxu0
      %v3700 = vadd.f32 0.0, %v3699
      %v3701 = vpop.f32.mrf.mxu0
      %v3702 = vadd.f32 0.0, %v3701
      %3703 = vmatmul.bf16.gmra.mxu0 %v3627
      %v3704 = vpop.f32.mrf.mxu0
      %v3705 = vadd.f32 0.0, %v3704
      %v3706 = vpop.f32.mrf.mxu0
      %v3707 = vadd.f32 0.0, %v3706
      %3708 = vmatmul.bf16.gmra.mxu0 %v3630
      %v3709 = vpop.f32.mrf.mxu0
      %v3710 = vadd.f32 0.0, %v3709
      %v3711 = vpop.f32.mrf.mxu0
      %v3712 = vadd.f32 0.0, %v3711
      %3713 = vmatmul.bf16.gmra.mxu0 %v3633
      %v3714 = vpop.f32.mrf.mxu0
      %v3715 = vadd.f32 0.0, %v3714
      %v3716 = vpop.f32.mrf.mxu0
      %v3717 = vadd.f32 0.0, %v3716
      %3718 = vmatmul.bf16.gmra.mxu0 %v3636
      %v3719 = vpop.f32.mrf.mxu0
      %v3720 = vadd.f32 0.0, %v3719
      %v3721 = vpop.f32.mrf.mxu0
      %v3722 = vadd.f32 0.0, %v3721
      %3723 = vmatmul.bf16.gmra.mxu0 %v3639
      %v3724 = vpop.f32.mrf.mxu0
      %v3725 = vadd.f32 0.0, %v3724
      %v3726 = vpop.f32.mrf.mxu0
      %v3727 = vadd.f32 0.0, %v3726
      %3728 = vmatmul.bf16.gmra.mxu0 %v3642
      %v3729 = vpop.f32.mrf.mxu0
      %v3730 = vadd.f32 0.0, %v3729
      %v3731 = vpop.f32.mrf.mxu0
      %v3732 = vadd.f32 0.0, %v3731
      %3733 = vmatmul.bf16.gmra.mxu0 %v3645
      %v3734 = vpop.f32.mrf.mxu0
      %v3735 = vadd.f32 0.0, %v3734
      %v3736 = vpop.f32.mrf.mxu0
      %v3737 = vadd.f32 0.0, %v3736
      %3738 = vdwg.mxu0
      %v3739 = vadd.f32 %v3085, %v3660
      %v3740 = vadd.f32 %v3086, %v3662
      %v3741 = vadd.f32 %v3087, %v3665
      %v3742 = vadd.f32 %v3088, %v3667
      %v3743 = vadd.f32 %v3089, %v3670
      %v3744 = vadd.f32 %v3090, %v3672
      %v3745 = vadd.f32 %v3091, %v3675
      %v3746 = vadd.f32 %v3092, %v3677
      %v3747 = vadd.f32 %v3093, %v3680
      %v3748 = vadd.f32 %v3094, %v3682
      %v3749 = vadd.f32 %v3095, %v3685
      %v3750 = vadd.f32 %v3096, %v3687
      %v3751 = vadd.f32 %v3097, %v3690
      %v3752 = vadd.f32 %v3098, %v3692
      %v3753 = vadd.f32 %v3099, %v3695
      %v3754 = vadd.f32 %v3100, %v3697
      %v3755 = vadd.f32 %v3101, %v3700
      %v3756 = vadd.f32 %v3102, %v3702
      %v3757 = vadd.f32 %v3103, %v3705
      %v3758 = vadd.f32 %v3104, %v3707
      %v3759 = vadd.f32 %v3105, %v3710
      %v3760 = vadd.f32 %v3106, %v3712
      %v3761 = vadd.f32 %v3107, %v3715
      %v3762 = vadd.f32 %v3108, %v3717
      %v3763 = vadd.f32 %v3109, %v3720
      %v3764 = vadd.f32 %v3110, %v3722
      %v3765 = vadd.f32 %v3111, %v3725
      %v3766 = vadd.f32 %v3112, %v3727
      %v3767 = vadd.f32 %v3113, %v3730
      %v3768 = vadd.f32 %v3114, %v3732
      %v3769 = vadd.f32 %v3115, %v3735
      %v3770 = vadd.f32 %v3116, %v3737
      %v3771 = vld [vmem:[%s2830] sm:$0xe]
      %v3772 = vld [vmem:[%s2830 + $0xc] sm:$0xe]
      %v3773 = vld [vmem:[%s2830 + $0x18] sm:$0xe]
      %v3774 = vld [vmem:[%s2830 + $0x24] sm:$0xe]
      %v3775 = vld [vmem:[%s2830 + $0x30] sm:$0xe]
      %v3776 = vld [vmem:[%s2830 + $0x3c] sm:$0xe]
      %v3777 = vld [vmem:[%s2830 + $0x48] sm:$0xe]
      %v3778 = vld [vmem:[%s2830 + $0x54] sm:$0xe]
      %v3779 = vld [vmem:[%s2830 + $0x60] sm:$0xe]
      %v3780 = vld [vmem:[%s2830 + $0x6c] sm:$0xe]
      %v3781 = vld [vmem:[%s2830 + $0x78] sm:$0xe]
      %v3782 = vld [vmem:[%s2830 + $0x84] sm:$0xe]
      %v3783 = vld [vmem:[%s2830 + $0x90] sm:$0xe]
      %v3784 = vld [vmem:[%s2830 + $0x9c] sm:$0xe]
      %v3785 = vld [vmem:[%s2830 + $0xa8] sm:$0xe]
      %v3786 = vld [vmem:[%s2830 + $0xb4] sm:$0xe]
      %v3835 = vrot.slane %v3771, 5
      %v3836 = vrot.slane %v3835, 4
      %v3837 = vrot.slane %v3118, 5
      %v3838 = vsel %vm1150, %v3836, %v3837
      %v3839 = vrot.slane %v3837, 4
      %v3840 = vrot.slane %v3119, 5
      %v3841 = vsel %vm1150, %v3839, %v3840
      %v3842 = vrot.slane %v3772, 5
      %v3843 = vrot.slane %v3842, 4
      %v3844 = vrot.slane %v3121, 5
      %v3845 = vsel %vm1150, %v3843, %v3844
      %v3846 = vrot.slane %v3844, 4
      %v3847 = vrot.slane %v3122, 5
      %v3848 = vsel %vm1150, %v3846, %v3847
      %v3849 = vrot.slane %v3773, 5
      %v3850 = vrot.slane %v3849, 4
      %v3851 = vrot.slane %v3124, 5
      %v3852 = vsel %vm1150, %v3850, %v3851
      %v3853 = vrot.slane %v3851, 4
      %v3854 = vrot.slane %v3125, 5
      %v3855 = vsel %vm1150, %v3853, %v3854
      %v3856 = vrot.slane %v3774, 5
      %v3857 = vrot.slane %v3856, 4
      %v3858 = vrot.slane %v3127, 5
      %v3859 = vsel %vm1150, %v3857, %v3858
      %v3860 = vrot.slane %v3858, 4
      %v3861 = vrot.slane %v3128, 5
      %v3862 = vsel %vm1150, %v3860, %v3861
      %v3863 = vrot.slane %v3775, 5
      %v3864 = vrot.slane %v3863, 4
      %v3865 = vrot.slane %v3130, 5
      %v3866 = vsel %vm1150, %v3864, %v3865
      %v3867 = vrot.slane %v3865, 4
      %v3868 = vrot.slane %v3131, 5
      %v3869 = vsel %vm1150, %v3867, %v3868
      %v3870 = vrot.slane %v3776, 5
      %v3871 = vrot.slane %v3870, 4
      %v3872 = vrot.slane %v3133, 5
      %v3873 = vsel %vm1150, %v3871, %v3872
      %v3874 = vrot.slane %v3872, 4
      %v3875 = vrot.slane %v3134, 5
      %v3876 = vsel %vm1150, %v3874, %v3875
      %v3877 = vrot.slane %v3777, 5
      %v3878 = vrot.slane %v3877, 4
      %v3879 = vrot.slane %v3136, 5
      %v3880 = vsel %vm1150, %v3878, %v3879
      %v3881 = vrot.slane %v3879, 4
      %v3882 = vrot.slane %v3137, 5
      %v3883 = vsel %vm1150, %v3881, %v3882
      %v3884 = vrot.slane %v3778, 5
      %v3885 = vrot.slane %v3884, 4
      %v3886 = vrot.slane %v3139, 5
      %v3887 = vsel %vm1150, %v3885, %v3886
      %v3888 = vrot.slane %v3886, 4
      %v3889 = vrot.slane %v3140, 5
      %v3890 = vsel %vm1150, %v3888, %v3889
      %v3891 = vrot.slane %v3779, 5
      %v3892 = vrot.slane %v3891, 4
      %v3893 = vrot.slane %v3142, 5
      %v3894 = vsel %vm1150, %v3892, %v3893
      %v3895 = vrot.slane %v3893, 4
      %v3896 = vrot.slane %v3143, 5
      %v3897 = vsel %vm1150, %v3895, %v3896
      %v3898 = vrot.slane %v3780, 5
      %v3899 = vrot.slane %v3898, 4
      %v3900 = vrot.slane %v3145, 5
      %v3901 = vsel %vm1150, %v3899, %v3900
      %v3902 = vrot.slane %v3900, 4
      %v3903 = vrot.slane %v3146, 5
      %v3904 = vsel %vm1150, %v3902, %v3903
      %v3905 = vrot.slane %v3781, 5
      %v3906 = vrot.slane %v3905, 4
      %v3907 = vrot.slane %v3148, 5
      %v3908 = vsel %vm1150, %v3906, %v3907
      %v3909 = vrot.slane %v3907, 4
      %v3910 = vrot.slane %v3149, 5
      %v3911 = vsel %vm1150, %v3909, %v3910
      %v3912 = vrot.slane %v3782, 5
      %v3913 = vrot.slane %v3912, 4
      %v3914 = vrot.slane %v3151, 5
      %v3915 = vsel %vm1150, %v3913, %v3914
      %v3916 = vrot.slane %v3914, 4
      %v3917 = vrot.slane %v3152, 5
      %v3918 = vsel %vm1150, %v3916, %v3917
      %v3919 = vrot.slane %v3783, 5
      %v3920 = vrot.slane %v3919, 4
      %v3921 = vrot.slane %v3154, 5
      %v3922 = vsel %vm1150, %v3920, %v3921
      %v3923 = vrot.slane %v3921, 4
      %v3924 = vrot.slane %v3155, 5
      %v3925 = vsel %vm1150, %v3923, %v3924
      %v3926 = vrot.slane %v3784, 5
      %v3927 = vrot.slane %v3926, 4
      %v3928 = vrot.slane %v3157, 5
      %v3929 = vsel %vm1150, %v3927, %v3928
      %v3930 = vrot.slane %v3928, 4
      %v3931 = vrot.slane %v3158, 5
      %v3932 = vsel %vm1150, %v3930, %v3931
      %v3933 = vrot.slane %v3785, 5
      %v3934 = vrot.slane %v3933, 4
      %v3935 = vrot.slane %v3160, 5
      %v3936 = vsel %vm1150, %v3934, %v3935
      %v3937 = vrot.slane %v3935, 4
      %v3938 = vrot.slane %v3161, 5
      %v3939 = vsel %vm1150, %v3937, %v3938
      %v3940 = vrot.slane %v3786, 5
      %v3941 = vrot.slane %v3940, 4
      %v3942 = vrot.slane %v3163, 5
      %v3943 = vsel %vm1150, %v3941, %v3942
      %v3944 = vrot.slane %v3942, 4
      %v3945 = vrot.slane %v3164, 5
      %v3946 = vsel %vm1150, %v3944, %v3945
      %s3947 = scalar_lea.vmem %s1, 32
      %v3948 = vld [vmem:[%s3947] sm:$0xf]
      %v3949 = vunpack.c.l.b16 %v3838
      %v3950 = vunpack.c.l.b16 %v3841
      %v3951 = vunpack.c.l.b16 %v3845
      %v3952 = vunpack.c.l.b16 %v3848
      %v3953 = vunpack.c.l.b16 %v3852
      %v3954 = vunpack.c.l.b16 %v3855
      %v3955 = vunpack.c.l.b16 %v3859
      %v3956 = vunpack.c.l.b16 %v3862
      %v3957 = vunpack.c.l.b16 %v3866
      %v3958 = vunpack.c.l.b16 %v3869
      %v3959 = vunpack.c.l.b16 %v3873
      %v3960 = vunpack.c.l.b16 %v3876
      %v3961 = vunpack.c.l.b16 %v3880
      %v3962 = vunpack.c.l.b16 %v3883
      %v3963 = vunpack.c.l.b16 %v3887
      %v3964 = vunpack.c.l.b16 %v3890
      %v3965 = vunpack.c.l.b16 %v3894
      %v3966 = vunpack.c.l.b16 %v3897
      %v3967 = vunpack.c.l.b16 %v3901
      %v3968 = vunpack.c.l.b16 %v3904
      %v3969 = vunpack.c.l.b16 %v3908
      %v3970 = vunpack.c.l.b16 %v3911
      %v3971 = vunpack.c.l.b16 %v3915
      %v3972 = vunpack.c.l.b16 %v3918
      %v3973 = vunpack.c.l.b16 %v3922
      %v3974 = vunpack.c.l.b16 %v3925
      %v3975 = vunpack.c.l.b16 %v3929
      %v3976 = vunpack.c.l.b16 %v3932
      %v3977 = vunpack.c.l.b16 %v3936
      %v3978 = vunpack.c.l.b16 %v3939
      %v3979 = vunpack.c.l.b16 %v3943
      %v3980 = vunpack.c.l.b16 %v3946
      %v3981 = vpack.c.b16 %v3950, %v3949
      %v3982 = vpack.c.b16 %v3952, %v3951
      %v3983 = vpack.c.b16 %v3954, %v3953
      %v3984 = vpack.c.b16 %v3956, %v3955
      %v3985 = vpack.c.b16 %v3958, %v3957
      %v3986 = vpack.c.b16 %v3960, %v3959
      %v3987 = vpack.c.b16 %v3962, %v3961
      %v3988 = vpack.c.b16 %v3964, %v3963
      %v3989 = vpack.c.b16 %v3966, %v3965
      %v3990 = vpack.c.b16 %v3968, %v3967
      %v3991 = vpack.c.b16 %v3970, %v3969
      %v3992 = vpack.c.b16 %v3972, %v3971
      %v3993 = vpack.c.b16 %v3974, %v3973
      %v3994 = vpack.c.b16 %v3976, %v3975
      %v3995 = vpack.c.b16 %v3978, %v3977
      %v3996 = vpack.c.b16 %v3980, %v3979
      %v3998 = vsel %vm738, %v3981, 0
      %v4001 = vsel %vm738, %v3982, 0
      %v4004 = vsel %vm738, %v3983, 0
      %v4007 = vsel %vm738, %v3984, 0
      %v4010 = vsel %vm738, %v3985, 0
      %v4013 = vsel %vm738, %v3986, 0
      %v4016 = vsel %vm738, %v3987, 0
      %v4019 = vsel %vm738, %v3988, 0
      %v4022 = vsel %vm738, %v3989, 0
      %v4025 = vsel %vm738, %v3990, 0
      %v4028 = vsel %vm738, %v3991, 0
      %v4031 = vsel %vm738, %v3992, 0
      %v4034 = vsel %vm738, %v3993, 0
      %v4037 = vsel %vm738, %v3994, 0
      %v4040 = vsel %vm738, %v3995, 0
      %v4043 = vsel %vm738, %v3996, 0
      %v4046 = vsel %vm787, %v3948, 0
      %4048 = vmatpush.bf16.msra.mxu0 0
      %4049 = vmatpush.bf16.msra.mxu0 0
      %4050 = vmatpush.bf16.msra.mxu0 0
      %4051 = vmatpush.bf16.msra.mxu0 0
      %4052 = vmatpush.bf16.msra.mxu0 0
      %4053 = vmatpush.bf16.msra.mxu0 0
      %4054 = vmatpush.bf16.msra.mxu0 0
      %4055 = vmatpush.bf16.msra.mxu0 %v4046
      %4056 = vmatmul.bf16.gmra.mxu0 %v3998
      %v4057 = vpop.f32.mrf.mxu0
      %v4058 = vadd.f32 0.0, %v4057
      %v4059 = vpop.f32.mrf.mxu0
      %v4060 = vadd.f32 0.0, %v4059
      %4061 = vmatmul.bf16.gmra.mxu0 %v4001
      %v4062 = vpop.f32.mrf.mxu0
      %v4063 = vadd.f32 0.0, %v4062
      %v4064 = vpop.f32.mrf.mxu0
      %v4065 = vadd.f32 0.0, %v4064
      %4066 = vmatmul.bf16.gmra.mxu0 %v4004
      %v4067 = vpop.f32.mrf.mxu0
      %v4068 = vadd.f32 0.0, %v4067
      %v4069 = vpop.f32.mrf.mxu0
      %v4070 = vadd.f32 0.0, %v4069
      %4071 = vmatmul.bf16.gmra.mxu0 %v4007
      %v4072 = vpop.f32.mrf.mxu0
      %v4073 = vadd.f32 0.0, %v4072
      %v4074 = vpop.f32.mrf.mxu0
      %v4075 = vadd.f32 0.0, %v4074
      %4076 = vmatmul.bf16.gmra.mxu0 %v4010
      %v4077 = vpop.f32.mrf.mxu0
      %v4078 = vadd.f32 0.0, %v4077
      %v4079 = vpop.f32.mrf.mxu0
      %v4080 = vadd.f32 0.0, %v4079
      %4081 = vmatmul.bf16.gmra.mxu0 %v4013
      %v4082 = vpop.f32.mrf.mxu0
      %v4083 = vadd.f32 0.0, %v4082
      %v4084 = vpop.f32.mrf.mxu0
      %v4085 = vadd.f32 0.0, %v4084
      %4086 = vmatmul.bf16.gmra.mxu0 %v4016
      %v4087 = vpop.f32.mrf.mxu0
      %v4088 = vadd.f32 0.0, %v4087
      %v4089 = vpop.f32.mrf.mxu0
      %v4090 = vadd.f32 0.0, %v4089
      %4091 = vmatmul.bf16.gmra.mxu0 %v4019
      %v4092 = vpop.f32.mrf.mxu0
      %v4093 = vadd.f32 0.0, %v4092
      %v4094 = vpop.f32.mrf.mxu0
      %v4095 = vadd.f32 0.0, %v4094
      %4096 = vmatmul.bf16.gmra.mxu0 %v4022
      %v4097 = vpop.f32.mrf.mxu0
      %v4098 = vadd.f32 0.0, %v4097
      %v4099 = vpop.f32.mrf.mxu0
      %v4100 = vadd.f32 0.0, %v4099
      %4101 = vmatmul.bf16.gmra.mxu0 %v4025
      %v4102 = vpop.f32.mrf.mxu0
      %v4103 = vadd.f32 0.0, %v4102
      %v4104 = vpop.f32.mrf.mxu0
      %v4105 = vadd.f32 0.0, %v4104
      %4106 = vmatmul.bf16.gmra.mxu0 %v4028
      %v4107 = vpop.f32.mrf.mxu0
      %v4108 = vadd.f32 0.0, %v4107
      %v4109 = vpop.f32.mrf.mxu0
      %v4110 = vadd.f32 0.0, %v4109
      %4111 = vmatmul.bf16.gmra.mxu0 %v4031
      %v4112 = vpop.f32.mrf.mxu0
      %v4113 = vadd.f32 0.0, %v4112
      %v4114 = vpop.f32.mrf.mxu0
      %v4115 = vadd.f32 0.0, %v4114
      %4116 = vmatmul.bf16.gmra.mxu0 %v4034
      %v4117 = vpop.f32.mrf.mxu0
      %v4118 = vadd.f32 0.0, %v4117
      %v4119 = vpop.f32.mrf.mxu0
      %v4120 = vadd.f32 0.0, %v4119
      %4121 = vmatmul.bf16.gmra.mxu0 %v4037
      %v4122 = vpop.f32.mrf.mxu0
      %v4123 = vadd.f32 0.0, %v4122
      %v4124 = vpop.f32.mrf.mxu0
      %v4125 = vadd.f32 0.0, %v4124
      %4126 = vmatmul.bf16.gmra.mxu0 %v4040
      %v4127 = vpop.f32.mrf.mxu0
      %v4128 = vadd.f32 0.0, %v4127
      %v4129 = vpop.f32.mrf.mxu0
      %v4130 = vadd.f32 0.0, %v4129
      %4131 = vmatmul.bf16.gmra.mxu0 %v4043
      %v4132 = vpop.f32.mrf.mxu0
      %v4133 = vadd.f32 0.0, %v4132
      %v4134 = vpop.f32.mrf.mxu0
      %v4135 = vadd.f32 0.0, %v4134
      %4136 = vdwg.mxu0
      %v4137 = vadd.f32 %v3739, %v4058
      %v4138 = vadd.f32 %v3740, %v4060
      %v4139 = vadd.f32 %v3741, %v4063
      %v4140 = vadd.f32 %v3742, %v4065
      %v4141 = vadd.f32 %v3743, %v4068
      %v4142 = vadd.f32 %v3744, %v4070
      %v4143 = vadd.f32 %v3745, %v4073
      %v4144 = vadd.f32 %v3746, %v4075
      %v4145 = vadd.f32 %v3747, %v4078
      %v4146 = vadd.f32 %v3748, %v4080
      %v4147 = vadd.f32 %v3749, %v4083
      %v4148 = vadd.f32 %v3750, %v4085
      %v4149 = vadd.f32 %v3751, %v4088
      %v4150 = vadd.f32 %v3752, %v4090
      %v4151 = vadd.f32 %v3753, %v4093
      %v4152 = vadd.f32 %v3754, %v4095
      %v4153 = vadd.f32 %v3755, %v4098
      %v4154 = vadd.f32 %v3756, %v4100
      %v4155 = vadd.f32 %v3757, %v4103
      %v4156 = vadd.f32 %v3758, %v4105
      %v4157 = vadd.f32 %v3759, %v4108
      %v4158 = vadd.f32 %v3760, %v4110
      %v4159 = vadd.f32 %v3761, %v4113
      %v4160 = vadd.f32 %v3762, %v4115
      %v4161 = vadd.f32 %v3763, %v4118
      %v4162 = vadd.f32 %v3764, %v4120
      %v4163 = vadd.f32 %v3765, %v4123
      %v4164 = vadd.f32 %v3766, %v4125
      %v4165 = vadd.f32 %v3767, %v4128
      %v4166 = vadd.f32 %v3768, %v4130
      %v4167 = vadd.f32 %v3769, %v4133
      %v4168 = vadd.f32 %v3770, %v4135
      %v4169 = vpack.c.bf16 %v4137, %v4137
      %v4170 = vpack.c.bf16 %v4138, %v4138
      %v4171 = vpack.c.bf16 %v4139, %v4139
      %v4172 = vpack.c.bf16 %v4140, %v4140
      %v4173 = vpack.c.bf16 %v4141, %v4141
      %v4174 = vpack.c.bf16 %v4142, %v4142
      %v4175 = vpack.c.bf16 %v4143, %v4143
      %v4176 = vpack.c.bf16 %v4144, %v4144
      %v4177 = vpack.c.bf16 %v4145, %v4145
      %v4178 = vpack.c.bf16 %v4146, %v4146
      %v4179 = vpack.c.bf16 %v4147, %v4147
      %v4180 = vpack.c.bf16 %v4148, %v4148
      %v4181 = vpack.c.bf16 %v4149, %v4149
      %v4182 = vpack.c.bf16 %v4150, %v4150
      %v4183 = vpack.c.bf16 %v4151, %v4151
      %v4184 = vpack.c.bf16 %v4152, %v4152
      %v4185 = vpack.c.bf16 %v4153, %v4153
      %v4186 = vpack.c.bf16 %v4154, %v4154
      %v4187 = vpack.c.bf16 %v4155, %v4155
      %v4188 = vpack.c.bf16 %v4156, %v4156
      %v4189 = vpack.c.bf16 %v4157, %v4157
      %v4190 = vpack.c.bf16 %v4158, %v4158
      %v4191 = vpack.c.bf16 %v4159, %v4159
      %v4192 = vpack.c.bf16 %v4160, %v4160
      %v4193 = vpack.c.bf16 %v4161, %v4161
      %v4194 = vpack.c.bf16 %v4162, %v4162
      %v4195 = vpack.c.bf16 %v4163, %v4163
      %v4196 = vpack.c.bf16 %v4164, %v4164
      %v4197 = vpack.c.bf16 %v4165, %v4165
      %v4198 = vpack.c.bf16 %v4166, %v4166
      %v4199 = vpack.c.bf16 %v4167, %v4167
      %v4200 = vpack.c.bf16 %v4168, %v4168
      %4201 = vst [vmem:[%s232] sm:$0xf] %v4169
      %4202 = vst [vmem:[%s232 + $0x4] sm:$0xf] %v4170
      %4203 = vst [vmem:[%s232 + $0x8] sm:$0xf] %v4171
      %4204 = vst [vmem:[%s232 + $0xc] sm:$0xf] %v4172
      %4205 = vst [vmem:[%s232 + $0x10] sm:$0xf] %v4173
      %4206 = vst [vmem:[%s232 + $0x14] sm:$0xf] %v4174
      %4207 = vst [vmem:[%s232 + $0x18] sm:$0xf] %v4175
      %4208 = vst [vmem:[%s232 + $0x1c] sm:$0xf] %v4176
      %4209 = vst [vmem:[%s232 + $0x20] sm:$0xf] %v4177
      %4210 = vst [vmem:[%s232 + $0x24] sm:$0xf] %v4178
      %4211 = vst [vmem:[%s232 + $0x28] sm:$0xf] %v4179
      %4212 = vst [vmem:[%s232 + $0x2c] sm:$0xf] %v4180
      %4213 = vst [vmem:[%s232 + $0x30] sm:$0xf] %v4181
      %4214 = vst [vmem:[%s232 + $0x34] sm:$0xf] %v4182
      %4215 = vst [vmem:[%s232 + $0x38] sm:$0xf] %v4183
      %4216 = vst [vmem:[%s232 + $0x3c] sm:$0xf] %v4184
      %4217 = vst [vmem:[%s232 + $0x40] sm:$0xf] %v4185
      %4218 = vst [vmem:[%s232 + $0x44] sm:$0xf] %v4186
      %4219 = vst [vmem:[%s232 + $0x48] sm:$0xf] %v4187
      %4220 = vst [vmem:[%s232 + $0x4c] sm:$0xf] %v4188
      %4221 = vst [vmem:[%s232 + $0x50] sm:$0xf] %v4189
      %4222 = vst [vmem:[%s232 + $0x54] sm:$0xf] %v4190
      %4223 = vst [vmem:[%s232 + $0x58] sm:$0xf] %v4191
      %4224 = vst [vmem:[%s232 + $0x5c] sm:$0xf] %v4192
      %4225 = vst [vmem:[%s232 + $0x60] sm:$0xf] %v4193
      %4226 = vst [vmem:[%s232 + $0x64] sm:$0xf] %v4194
      %4227 = vst [vmem:[%s232 + $0x68] sm:$0xf] %v4195
      %4228 = vst [vmem:[%s232 + $0x6c] sm:$0xf] %v4196
      %4229 = vst [vmem:[%s232 + $0x70] sm:$0xf] %v4197
      %4230 = vst [vmem:[%s232 + $0x74] sm:$0xf] %v4198
      %4231 = vst [vmem:[%s232 + $0x78] sm:$0xf] %v4199
      %4232 = vst [vmem:[%s232 + $0x7c] sm:$0xf] %v4200
      %v4233 = vadd.f32 %v4137, %v4138
      %v4234 = vadd.f32 %v4233, %v4139
      %v4235 = vadd.f32 %v4234, %v4140
      %v4236 = vadd.f32 %v4235, %v4141
      %v4237 = vadd.f32 %v4236, %v4142
      %v4238 = vadd.f32 %v4237, %v4143
      %v4239 = vadd.f32 %v4238, %v4144
      %v4240 = vadd.f32 %v4239, %v4145
      %v4241 = vadd.f32 %v4240, %v4146
      %v4242 = vadd.f32 %v4241, %v4147
      %v4243 = vadd.f32 %v4242, %v4148
      %v4244 = vadd.f32 %v4243, %v4149
      %v4245 = vadd.f32 %v4244, %v4150
      %v4246 = vadd.f32 %v4245, %v4151
      %v4247 = vadd.f32 %v4246, %v4152
      %v4248 = vadd.f32 %v4247, %v4153
      %v4249 = vadd.f32 %v4248, %v4154
      %v4250 = vadd.f32 %v4249, %v4155
      %v4251 = vadd.f32 %v4250, %v4156
      %v4252 = vadd.f32 %v4251, %v4157
      %v4253 = vadd.f32 %v4252, %v4158
      %v4254 = vadd.f32 %v4253, %v4159
      %v4255 = vadd.f32 %v4254, %v4160
      %v4256 = vadd.f32 %v4255, %v4161
      %v4257 = vadd.f32 %v4256, %v4162
      %v4258 = vadd.f32 %v4257, %v4163
      %v4259 = vadd.f32 %v4258, %v4164
      %v4260 = vadd.f32 %v4259, %v4165
      %v4261 = vadd.f32 %v4260, %v4166
      %v4262 = vadd.f32 %v4261, %v4167
      %v4263 = vadd.f32 %v4262, %v4168
      %v4264 = vrot.slane %v4263, 4
      %v4265 = vadd.f32 %v4263, %v4264
      %v4266 = vrot.slane %v4265, 2
      %v4267 = vadd.f32 %v4265, %v4266
      %v4268 = vrot.slane %v4267, 1
      %v4269 = vadd.f32 %v4267, %v4268
      %v4270 = vmul.f32 %v4137, %v4137
      %v4271 = vmul.f32 %v4138, %v4138
      %v4272 = vmul.f32 %v4139, %v4139
      %v4273 = vmul.f32 %v4140, %v4140
      %v4274 = vmul.f32 %v4141, %v4141
      %v4275 = vmul.f32 %v4142, %v4142
      %v4276 = vmul.f32 %v4143, %v4143
      %v4277 = vmul.f32 %v4144, %v4144
      %v4278 = vmul.f32 %v4145, %v4145
      %v4279 = vmul.f32 %v4146, %v4146
      %v4280 = vmul.f32 %v4147, %v4147
      %v4281 = vmul.f32 %v4148, %v4148
      %v4282 = vmul.f32 %v4149, %v4149
      %v4283 = vmul.f32 %v4150, %v4150
      %v4284 = vmul.f32 %v4151, %v4151
      %v4285 = vmul.f32 %v4152, %v4152
      %v4286 = vmul.f32 %v4153, %v4153
      %v4287 = vmul.f32 %v4154, %v4154
      %v4288 = vmul.f32 %v4155, %v4155
      %v4289 = vmul.f32 %v4156, %v4156
      %v4290 = vmul.f32 %v4157, %v4157
      %v4291 = vmul.f32 %v4158, %v4158
      %v4292 = vmul.f32 %v4159, %v4159
      %v4293 = vmul.f32 %v4160, %v4160
      %v4294 = vmul.f32 %v4161, %v4161
      %v4295 = vmul.f32 %v4162, %v4162
      %v4296 = vmul.f32 %v4163, %v4163
      %v4297 = vmul.f32 %v4164, %v4164
      %v4298 = vmul.f32 %v4165, %v4165
      %v4299 = vmul.f32 %v4166, %v4166
      %v4300 = vmul.f32 %v4167, %v4167
      %v4301 = vmul.f32 %v4168, %v4168
      %v4302 = vadd.f32 %v4270, %v4271
      %v4303 = vadd.f32 %v4302, %v4272
      %v4304 = vadd.f32 %v4303, %v4273
      %v4305 = vadd.f32 %v4304, %v4274
      %v4306 = vadd.f32 %v4305, %v4275
      %v4307 = vadd.f32 %v4306, %v4276
      %v4308 = vadd.f32 %v4307, %v4277
      %v4309 = vadd.f32 %v4308, %v4278
      %v4310 = vadd.f32 %v4309, %v4279
      %v4311 = vadd.f32 %v4310, %v4280
      %v4312 = vadd.f32 %v4311, %v4281
      %v4313 = vadd.f32 %v4312, %v4282
      %v4314 = vadd.f32 %v4313, %v4283
      %v4315 = vadd.f32 %v4314, %v4284
      %v4316 = vadd.f32 %v4315, %v4285
      %v4317 = vadd.f32 %v4316, %v4286
      %v4318 = vadd.f32 %v4317, %v4287
      %v4319 = vadd.f32 %v4318, %v4288
      %v4320 = vadd.f32 %v4319, %v4289
      %v4321 = vadd.f32 %v4320, %v4290
      %v4322 = vadd.f32 %v4321, %v4291
      %v4323 = vadd.f32 %v4322, %v4292
      %v4324 = vadd.f32 %v4323, %v4293
      %v4325 = vadd.f32 %v4324, %v4294
      %v4326 = vadd.f32 %v4325, %v4295
      %v4327 = vadd.f32 %v4326, %v4296
      %v4328 = vadd.f32 %v4327, %v4297
      %v4329 = vadd.f32 %v4328, %v4298
      %v4330 = vadd.f32 %v4329, %v4299
      %v4331 = vadd.f32 %v4330, %v4300
      %v4332 = vadd.f32 %v4331, %v4301
      %v4333 = vrot.slane %v4332, 4
      %v4334 = vadd.f32 %v4332, %v4333
      %v4335 = vrot.slane %v4334, 2
      %v4336 = vadd.f32 %v4334, %v4335
      %v4337 = vrot.slane %v4336, 1
      %v4338 = vadd.f32 %v4336, %v4337
      %4339 = vst [vmem:[%s239] sm:$0xff] %v4269
      %4340 = vst [vmem:[%s245] sm:$0xff] %v4338
      %s4341 = sadd.s32 %s20, %s21
      %s4342 = smul.u32 32, %s4341
      %p4343 = scmp.lt.s32.totalorder %s4342, 63
      %s4344 = scalar_select %p4343, %s4342, 63
      %s4345 = smul.addr %s4344, 4
      %s4346 = scalar_lea.vmem %s2, %s4345
      %s4347 = sadd.s32 %s20, %s21
      %p4348 = scmp.lt.s32.totalorder %s4347, 1
      %s4349 = scalar_select %p4348, %s4347, 1
      %s4350 = smul.addr %s4349, 8
      %s4351 = scalar_lea.vmem %s3, %s4350
      %s4352 = sadd.s32 %s20, %s21
      %p4353 = scmp.lt.s32.totalorder %s4352, 1
      %s4354 = scalar_select %p4353, %s4352, 1
      %s4355 = smul.addr %s4354, 8
      %s4356 = scalar_lea.vmem %s4, %s4355
      // Predicated region
      $region29: #{conv2d_bn_relu.2} parent=27 // pred_check
        %p4357 = pneg %p95
      $region30: #{conv2d_bn_relu.2} parent=27 // pred_check_branch
        %4359 = sbr.rel (%p4357) target = $region32
      $region31: #{conv2d_bn_relu.2} parent=27 // pred_region
        %s4360 = sadd.s32 %s20, %s21
        %s4361 = smul.u32 32, %s4360
      $region32: #{conv2d_bn_relu.2} parent=27 // pred_fallthru
        _
      // Predicated region
      $region33: #{conv2d_bn_relu.2} parent=27 // pred_check
        %p4362 = pneg %p123
      $region34: #{conv2d_bn_relu.2} parent=27 // pred_check_branch
        %4364 = sbr.rel (%p4362) target = $region36
      $region35: #{conv2d_bn_relu.2} parent=27 // pred_region
        %s4365 = sadd.s32 %s20, %s21
      $region36: #{conv2d_bn_relu.2} parent=27 // pred_fallthru
        _
      // Predicated region
      $region37: #{conv2d_bn_relu.2} parent=27 // pred_check
        %p4366 = pneg %p151
      $region38: #{conv2d_bn_relu.2} parent=27 // pred_check_branch
        %4368 = sbr.rel (%p4366) target = $region40
      $region39: #{conv2d_bn_relu.2} parent=27 // pred_region
        %s4369 = sadd.s32 %s20, %s21
      $region40: #{conv2d_bn_relu.2} parent=27 // pred_fallthru
        _
    $region28: #{conv2d_bn_relu.2} parent=5 // pred_fallthru
      _
    %p4370 = scmp.le.s32.totalorder 2, %s11
    // Predicated region
    $region41: #{conv2d_bn_relu.2} parent=5 // pred_check
      %p4371 = pneg %p4370
    $region42: #{conv2d_bn_relu.2} parent=5 // pred_check_branch
      %4373 = sbr.rel (%p4371) target = $region44
    $region43: #{conv2d_bn_relu.2} parent=5 // pred_region
      %s4374 = ssub.s32 %s11, 2
      // Predicated region
      $region45: #{conv2d_bn_relu.2} parent=43 // pred_check
        %p4375 = pneg %p101
      $region46: #{conv2d_bn_relu.2} parent=43 // pred_check_branch
        %4377 = sbr.rel (%p4375) target = $region48
      $region47: #{conv2d_bn_relu.2} parent=43 // pred_region
        %s4378 = sadd.s32 %s22, %s23
        %s4379 = smul.u32 32, %s4378
        %p4380 = scmp.lt.s32.totalorder %s4379, 63
        %s4381 = scalar_select %p4380, %s4379, 63
        %s4382 = smul.addr %s4381, 4
        %s4383 = scalar_lea.vmem %s2, %s4382
      $region48: #{conv2d_bn_relu.2} parent=43 // pred_fallthru
        _
      // Predicated region
      $region49: #{conv2d_bn_relu.2} parent=43 // pred_check
        %p4384 = pneg %p129
      $region50: #{conv2d_bn_relu.2} parent=43 // pred_check_branch
        %4386 = sbr.rel (%p4384) target = $region52
      $region51: #{conv2d_bn_relu.2} parent=43 // pred_region
        %s4387 = sadd.s32 %s22, %s23
        %p4388 = scmp.lt.s32.totalorder %s4387, 1
        %s4389 = scalar_select %p4388, %s4387, 1
        %s4390 = smul.addr %s4389, 8
        %s4391 = scalar_lea.vmem %s3, %s4390
      $region52: #{conv2d_bn_relu.2} parent=43 // pred_fallthru
        _
      // Predicated region
      $region53: #{conv2d_bn_relu.2} parent=43 // pred_check
        %p4392 = pneg %p157
      $region54: #{conv2d_bn_relu.2} parent=43 // pred_check_branch
        %4394 = sbr.rel (%p4392) target = $region56
      $region55: #{conv2d_bn_relu.2} parent=43 // pred_region
        %s4395 = sadd.s32 %s22, %s23
        %p4396 = scmp.lt.s32.totalorder %s4395, 1
        %s4397 = scalar_select %p4396, %s4395, 1
        %s4398 = smul.addr %s4397, 8
        %s4399 = scalar_lea.vmem %s4, %s4398
      $region56: #{conv2d_bn_relu.2} parent=43 // pred_fallthru
        _
    $region44: #{conv2d_bn_relu.2} parent=5 // pred_fallthru
      _
  $region6: #{conv2d_bn_relu.2} parent=0 // loop_footer
    %s15 = sadd.s32 1, %s11
  $region7: #{conv2d_bn_relu.2} parent=0 // loop_footer_branch
    %10 = sbr.rel target = $region3
  $region8: #{conv2d_bn_relu.2} parent=0 // loop_exit
    _

</llo_original>
